<compile_context>
chip_gen: v7x
topology: tpu7x:2x2x1
jax: 0.10.0
libtpu: 0.0.40
codegen_flags: <defaults>
</compile_context>

<pallas_src>
import functools
import math

import jax
import jax.numpy as jnp
from jax import lax
from jax.experimental import pallas as pl
from jax.experimental.pallas import tpu as pltpu


PAD = 2  # max padding over all layers (the 5x5 conv); shared halo width


def _espcn_fused_kernel(x_ref,
                        w1_ref, b1_ref, w2_ref, b2_ref, w3_ref, b3_ref,
                        o_ref,
                        f2_ref, f3_ref, col1_ref, col2_ref, col3_ref,
                        *, H, W, Wp, S):
    """Fused ESPCN trunk for one batch element.

    Layout: channel-major, lane-dense flat-spatial slabs.
      x_ref  : (Cin_p, S)   zero-padded input, S = (H + 2*PAD + 1) * Wp.
      w*_ref : (Cout, K*Cin) im2col weight matrices (row order = (kh, kw, cin)).
      b*_ref : (Cout, 1)
      o_ref  : (C3, HW)     layer-3 output slab (pad columns dropped by wrapper).
      f2/f3  : VMEM scratch: PAD-haloed layer-1 / layer-2 activations, (C, S).
      col*   : VMEM scratch im2col slabs, (K*Cin, HW).
    """
    HW = H * Wp                      # multiple of 128 by construction (lane-dense)
    in_off = PAD * Wp + PAD          # flat index of interior pixel (0, 0)
    tail_off = in_off + HW
    tail_len = S - tail_off

    # Valid-column mask generated in-kernel: 1.0 at real pixels, 0.0 at the
    # per-row pad columns whose conv outputs are garbage (become the halo).
    col_idx = lax.broadcasted_iota(jnp.int32, (1, HW), 1)
    mask = ((col_idx % Wp) < W).astype(jnp.float32)

    # Zero only the halo strips of the inter-layer slabs; the interior
    # [in_off, in_off + HW) is fully overwritten by the contiguous store below
    # and its pad columns are already mask-zeroed.  Re-done every grid step so
    # correctness is independent of how the "parallel" batch axis is sharded
    # across TensorCores.
    for f_ref in (f2_ref, f3_ref):
        c = f_ref.shape[0]
        f_ref[:, pl.ds(0, in_off)] = jnp.zeros((c, in_off), jnp.float32)
        f_ref[:, pl.ds(tail_off, tail_len)] = jnp.zeros((c, tail_len), jnp.float32)

    def conv(src_ref, col_ref, w_ref, b_ref, ksize, base):
        """im2col build (one contiguous copy per tap) + ONE MXU matmul."""
        cin = src_ref.shape[0]
        for kh in range(ksize):
            for kw in range(ksize):
                t = kh * ksize + kw
                col_ref[pl.ds(t * cin, cin), :] = \
                    src_ref[:, pl.ds(base + kh * Wp + kw, HW)]
        # (Cout, K*Cin) @ (K*Cin, HW) -> (Cout, HW), f32 accumulation on the MXU
        return jnp.dot(w_ref[...], col_ref[...],
                       preferred_element_type=jnp.float32) + b_ref[...]

    # ---- layer 1: 5x5 conv (pad 2) + tanh; input already carries the PAD halo ----
    a1 = jnp.tanh(conv(x_ref, col1_ref, w1_ref, b1_ref, 5, 0)) * mask
    f2_ref[:, pl.ds(in_off, HW)] = a1          # one contiguous lane-dense store

    # ---- layer 2: 3x3 conv (pad 1) + tanh; halo is 2 wide -> taps start 1 ring in ----
    base3 = (PAD - 1) * (Wp + 1)
    a2 = jnp.tanh(conv(f2_ref, col2_ref, w2_ref, b2_ref, 3, base3)) * mask
    f3_ref[:, pl.ds(in_off, HW)] = a2

    # ---- layer 3: 3x3 conv (pad 1), linear ----
    o_ref[...] = conv(f3_ref, col3_ref, w3_ref, b3_ref, 3, base3).astype(o_ref.dtype)


def espcn_forward(params, x_nchw, upscale_factor, out_channels):
    B, Cin, H, W = x_nchw.shape
    w1, b1 = params["w1"], params["b1"]     # (5,5,Cin,C1), (C1,)
    w2, b2 = params["w2"], params["b2"]     # (3,3,C1,C2),  (C2,)
    w3, b3 = params["w3"], params["b3"]     # (3,3,C2,C3),  (C3,)
    C1, C2, C3 = w1.shape[-1], w2.shape[-1], w3.shape[-1]

    # Lane-dense padded row width: smallest Wp >= W + 2*PAD with H*Wp % 128 == 0.
    Wp = W + 2 * PAD
    for cand in range(Wp, Wp + 129):
        if (H * cand) % 128 == 0:
            Wp = cand
            break
    S = (H + 2 * PAD + 1) * Wp           # +1 extra zero row so all tap slices fit
    HW = H * Wp

    # Pad input channels to a multiple of 8 -> every im2col sublane store aligned.
    Cin_p = -(-Cin // 8) * 8

    # --- tiny trace-time layout prep (heavy work all stays inside the kernel) ---
    xflat = jnp.pad(x_nchw, ((0, 0), (0, Cin_p - Cin),
                             (PAD, PAD + 1), (PAD, Wp - W - PAD)))
    xflat = xflat.reshape(B, Cin_p, S)

    def w2d(w, cin_pad):
        # (KH, KW, Cin, Cout) -> (Cout, KH*KW*Cin_pad); row order matches im2col.
        kh, kw, ci, co = w.shape
        if cin_pad > ci:
            w = jnp.pad(w, ((0, 0), (0, 0), (0, cin_pad - ci), (0, 0)))
            ci = cin_pad
        return jnp.transpose(w.reshape(kh * kw * ci, co))

    w1m, w2m, w3m = w2d(w1, Cin_p), w2d(w2, C1), w2d(w3, C2)
    b1c, b2c, b3c = b1.reshape(C1, 1), b2.reshape(C2, 1), b3.reshape(C3, 1)
    K1, K2, K3 = 25 * Cin_p, 9 * C1, 9 * C2

    kernel = functools.partial(_espcn_fused_kernel, H=H, W=W, Wp=Wp, S=S)

    out = pl.pallas_call(
        kernel,
        out_shape=jax.ShapeDtypeStruct((B, C3, HW), jnp.float32),
        grid=(B,),
        in_specs=[
            pl.BlockSpec((None, Cin_p, S), lambda b: (b, 0, 0)),   # padded input
            pl.BlockSpec((C1, K1), lambda b: (0, 0)),              # VMEM-resident weights
            pl.BlockSpec((C1, 1), lambda b: (0, 0)),
            pl.BlockSpec((C2, K2), lambda b: (0, 0)),
            pl.BlockSpec((C2, 1), lambda b: (0, 0)),
            pl.BlockSpec((C3, K3), lambda b: (0, 0)),
            pl.BlockSpec((C3, 1), lambda b: (0, 0)),
        ],
        out_specs=pl.BlockSpec((None, C3, HW), lambda b: (b, 0, 0)),
        scratch_shapes=[
            pltpu.VMEM((C1, S), jnp.float32),    # layer-1 activation (with halo)
            pltpu.VMEM((C2, S), jnp.float32),    # layer-2 activation (with halo)
            pltpu.VMEM((K1, HW), jnp.float32),   # im2col slab, layer 1
            pltpu.VMEM((K2, HW), jnp.float32),   # im2col slab, layer 2
            pltpu.VMEM((K3, HW), jnp.float32),   # im2col slab, layer 3
        ],
        compiler_params=pltpu.CompilerParams(
            dimension_semantics=("parallel",),
            vmem_limit_bytes=32 * 1024 * 1024,
        ),
    )(xflat, w1m, b1c, w2m, b2c, w3m, b3c)

    # drop pad columns, then pixel shuffle
    # TODO(synk): pixel shuffle + pad-column drop are pure layout; kept as
    # trace-time XLA reshapes since fusing them buys nothing at these sizes.
    y = out.reshape(B, C3, H, Wp)[:, :, :, :W]
    r = upscale_factor
    y = y.reshape(B, out_channels, r, r, H, W)
    y = jnp.transpose(y, (0, 1, 4, 2, 5, 3))          # (B, OC, H, r, W, r)
    return y.reshape(B, out_channels, H * r, W * r)


def init_espcn_params(key, in_channels, out_channels, channels, upscale_factor):
    """Matches the PyTorch _initialize_weights logic (HWIO weights, zero biases)."""
    hidden = channels // 2
    out_c = int(out_channels * upscale_factor ** 2)
    k1, k2, k3 = jax.random.split(key, 3)
    std1 = math.sqrt(2.0 / (channels * 5 * 5))   # in != hidden
    std2 = math.sqrt(2.0 / (hidden * 3 * 3))     # in != hidden
    std3 = 0.001                                 # in == hidden
    return {
        "w1": jax.random.normal(k1, (5, 5, in_channels, channels), jnp.float32) * std1,
        "b1": jnp.zeros((channels,), jnp.float32),
        "w2": jax.random.normal(k2, (3, 3, channels, hidden), jnp.float32) * std2,
        "b2": jnp.zeros((hidden,), jnp.float32),
        "w3": jax.random.normal(k3, (3, 3, hidden, out_c), jnp.float32) * std3,
        "b3": jnp.zeros((out_c,), jnp.float32),
    }


# ---------------- pure-JAX reference for correctness checking ----------------
def _conv_ref(x_nchw, w, b, apply_tanh):
    y = lax.conv_general_dilated(x_nchw, w, (1, 1), "SAME",
                                 dimension_numbers=("NCHW", "HWIO", "NCHW"))
    y = y + b.reshape(1, -1, 1, 1)
    return jnp.tanh(y) if apply_tanh else y


def espcn_reference(params, x_nchw, upscale_factor, out_channels):
    x = _conv_ref(x_nchw, params["w1"], params["b1"], True)
    x = _conv_ref(x, params["w2"], params["b2"], True)
    x = _conv_ref(x, params["w3"], params["b3"], False)
    B, _, H, W = x.shape
    r = upscale_factor
    x = x.reshape(B, out_channels, r, r, H, W)
    x = jnp.transpose(x, (0, 1, 4, 2, 5, 3))
    return x.reshape(B, out_channels, H * r, W * r)


if __name__ == "__main__":
    in_channels, out_channels, channels, upscale = 4, 1, 32, 2
    B, H, W = 2, 16, 16

    key = jax.random.PRNGKey(0)
    pkey, xkey = jax.random.split(key)
    params = init_espcn_params(pkey, in_channels, out_channels, channels, upscale)
    x = jax.random.normal(xkey, (B, in_channels, H, W), jnp.float32)

    fwd = jax.jit(functools.partial(espcn_forward, upscale_factor=upscale,
                                    out_channels=out_channels))
    y = jax.block_until_ready(fwd(params, x))
    assert y.shape == (B, out_channels, H * upscale, W * upscale), y.shape

    y_ref = jax.block_until_ready(espcn_reference(params, x, upscale, out_channels))
    assert jnp.allclose(y, y_ref, atol=1e-5, rtol=1e-5), \
        float(jnp.max(jnp.abs(y - y_ref)))

    print("KERNEL_OK")
</pallas_src>

<mosaic_0001>
module attributes {stable_mosaic.version = 11 : i64} {
  func.func @_espcn_fused_kernel(%arg0: i32, %arg1: memref<1x8x504xf32, #tpu.memory_space<vmem>>, %arg2: memref<32x200xf32, #tpu.memory_space<vmem>>, %arg3: memref<32x1xf32, #tpu.memory_space<vmem>>, %arg4: memref<16x288xf32, #tpu.memory_space<vmem>>, %arg5: memref<16x1xf32, #tpu.memory_space<vmem>>, %arg6: memref<4x144xf32, #tpu.memory_space<vmem>>, %arg7: memref<4x1xf32, #tpu.memory_space<vmem>>, %arg8: memref<1x4x384xf32, #tpu.memory_space<vmem>>, %arg9: memref<32x504xf32, #tpu.memory_space<vmem>>, %arg10: memref<16x504xf32, #tpu.memory_space<vmem>>, %arg11: memref<200x384xf32, #tpu.memory_space<vmem>>, %arg12: memref<288x384xf32, #tpu.memory_space<vmem>>, %arg13: memref<144x384xf32, #tpu.memory_space<vmem>>) attributes {dimension_semantics = [#tpu.dimension_semantics<parallel>], iteration_bounds = array<i64: 2>, scalar_prefetch = 0 : i64, scratch_operands = 5 : i64, tpu.core_type = #tpu.core_type<tc>, window_params = [{transform_indices = @transform_0, window_bounds = array<i64: 1, 8, 504>}, {pipeline_mode = #tpu.pipeline_mode<synchronous>, transform_indices = @transform_1, window_bounds = array<i64: 32, 200>}, {pipeline_mode = #tpu.pipeline_mode<synchronous>, transform_indices = @transform_2, window_bounds = array<i64: 32, 1>}, {pipeline_mode = #tpu.pipeline_mode<synchronous>, transform_indices = @transform_3, window_bounds = array<i64: 16, 288>}, {pipeline_mode = #tpu.pipeline_mode<synchronous>, transform_indices = @transform_4, window_bounds = array<i64: 16, 1>}, {pipeline_mode = #tpu.pipeline_mode<synchronous>, transform_indices = @transform_5, window_bounds = array<i64: 4, 144>}, {pipeline_mode = #tpu.pipeline_mode<synchronous>, transform_indices = @transform_6, window_bounds = array<i64: 4, 1>}, {transform_indices = @transform_7, window_bounds = array<i64: 1, 4, 384>}]} {
    %0 = tpu.iota {dimensions = array<i32: 1>} : vector<1x384xi32>
    %c24_i32 = arith.constant 24 : i32
    %c0_i32 = arith.constant 0 : i32
    %1 = arith.cmpi eq, %c24_i32, %c0_i32 : i32
    %c1_i32 = arith.constant 1 : i32
    %2 = arith.select %1, %c1_i32, %c24_i32 : i32
    %3 = vector.broadcast %2 : i32 to vector<1x384xi32>
    %4 = arith.remsi %0, %3 : vector<1x384xi32>
    %c0_i32_0 = arith.constant 0 : i32
    %5 = vector.broadcast %c0_i32_0 : i32 to vector<1x384xi32>
    %6 = arith.cmpi ne, %4, %5 : vector<1x384xi32>
    %c0_i32_1 = arith.constant 0 : i32
    %7 = vector.broadcast %c0_i32_1 : i32 to vector<1x384xi32>
    %8 = arith.cmpi slt, %4, %7 : vector<1x384xi32>
    %c0_i32_2 = arith.constant 0 : i32
    %9 = arith.cmpi slt, %2, %c0_i32_2 : i32
    %10 = vector.broadcast %9 : i1 to vector<1x384xi1>
    %11 = vector.broadcast %10 : vector<1x384xi1> to vector<1x384xi1>
    %12 = arith.xori %8, %11 : vector<1x384xi1>
    %13 = arith.andi %12, %6 : vector<1x384xi1>
    %14 = vector.broadcast %2 : i32 to vector<1x384xi32>
    %15 = arith.addi %4, %14 : vector<1x384xi32>
    %16 = arith.select %13, %15, %4 : vector<1x384xi1>, vector<1x384xi32>
    %c16_i32 = arith.constant 16 : i32
    %17 = vector.broadcast %c16_i32 : i32 to vector<1x384xi32>
    %18 = arith.cmpi slt, %16, %17 : vector<1x384xi32>
    %19 = arith.extui %18 : vector<1x384xi1> to vector<1x384xi32>
    %20 = arith.sitofp %19 : vector<1x384xi32> to vector<1x384xf32>
    %cst = arith.constant 0.000000e+00 : f32
    %21 = vector.broadcast %cst : f32 to vector<32x50xf32>
    %c0 = arith.constant 0 : index
    %c0_3 = arith.constant 0 : index
    %22 = vector.load %arg9[%c0, %c0_3] : memref<32x504xf32, #tpu.memory_space<vmem>>, vector<32x50xf32>
    tpu.vector_store %arg9[%c0, %c0_3], %21 {strides = array<i32>} : memref<32x504xf32, #tpu.memory_space<vmem>>, vector<32x50xf32>,
    %cst_4 = arith.constant 0.000000e+00 : f32
    %23 = vector.broadcast %cst_4 : f32 to vector<32x70xf32>
    %c0_5 = arith.constant 0 : index
    %c434 = arith.constant 434 : index
    %24 = vector.load %arg9[%c0_5, %c434] : memref<32x504xf32, #tpu.memory_space<vmem>>, vector<32x70xf32>
    tpu.vector_store %arg9[%c0_5, %c434], %23 {strides = array<i32>} : memref<32x504xf32, #tpu.memory_space<vmem>>, vector<32x70xf32>,
    %cst_6 = arith.constant 0.000000e+00 : f32
    %25 = vector.broadcast %cst_6 : f32 to vector<16x50xf32>
    %c0_7 = arith.constant 0 : index
    %c0_8 = arith.constant 0 : index
    %26 = vector.load %arg10[%c0_7, %c0_8] : memref<16x504xf32, #tpu.memory_space<vmem>>, vector<16x50xf32>
    tpu.vector_store %arg10[%c0_7, %c0_8], %25 {strides = array<i32>} : memref<16x504xf32, #tpu.memory_space<vmem>>, vector<16x50xf32>,
    %cst_9 = arith.constant 0.000000e+00 : f32
    %27 = vector.broadcast %cst_9 : f32 to vector<16x70xf32>
    %c0_10 = arith.constant 0 : index
    %c434_11 = arith.constant 434 : index
    %28 = vector.load %arg10[%c0_10, %c434_11] : memref<16x504xf32, #tpu.memory_space<vmem>>, vector<16x70xf32>
    tpu.vector_store %arg10[%c0_10, %c434_11], %27 {strides = array<i32>} : memref<16x504xf32, #tpu.memory_space<vmem>>, vector<16x70xf32>,
    %c0_12 = arith.constant 0 : index
    %c0_13 = arith.constant 0 : index
    %c0_14 = arith.constant 0 : index
    %29 = vector.load %arg1[%c0_12, %c0_13, %c0_14] : memref<1x8x504xf32, #tpu.memory_space<vmem>>, vector<1x8x384xf32>
    %30 = vector.shape_cast %29 : vector<1x8x384xf32> to vector<8x384xf32>
    %c0_15 = arith.constant 0 : index
    %c0_16 = arith.constant 0 : index
    %31 = vector.load %arg11[%c0_15, %c0_16] : memref<200x384xf32, #tpu.memory_space<vmem>>, vector<8x384xf32>
    tpu.vector_store %arg11[%c0_15, %c0_16], %30 {strides = array<i32>} : memref<200x384xf32, #tpu.memory_space<vmem>>, vector<8x384xf32>,
    %c0_17 = arith.constant 0 : index
    %c0_18 = arith.constant 0 : index
    %c1 = arith.constant 1 : index
    %32 = vector.load %arg1[%c0_17, %c0_18, %c1] : memref<1x8x504xf32, #tpu.memory_space<vmem>>, vector<1x8x384xf32>
    %33 = vector.shape_cast %32 : vector<1x8x384xf32> to vector<8x384xf32>
    %c8 = arith.constant 8 : index
    %c0_19 = arith.constant 0 : index
    %34 = vector.load %arg11[%c8, %c0_19] : memref<200x384xf32, #tpu.memory_space<vmem>>, vector<8x384xf32>
    tpu.vector_store %arg11[%c8, %c0_19], %33 {strides = array<i32>} : memref<200x384xf32, #tpu.memory_space<vmem>>, vector<8x384xf32>,
    %c0_20 = arith.constant 0 : index
    %c0_21 = arith.constant 0 : index
    %c2 = arith.constant 2 : index
    %35 = vector.load %arg1[%c0_20, %c0_21, %c2] : memref<1x8x504xf32, #tpu.memory_space<vmem>>, vector<1x8x384xf32>
    %36 = vector.shape_cast %35 : vector<1x8x384xf32> to vector<8x384xf32>
    %c16 = arith.constant 16 : index
    %c0_22 = arith.constant 0 : index
    %37 = vector.load %arg11[%c16, %c0_22] : memref<200x384xf32, #tpu.memory_space<vmem>>, vector<8x384xf32>
    tpu.vector_store %arg11[%c16, %c0_22], %36 {strides = array<i32>} : memref<200x384xf32, #tpu.memory_space<vmem>>, vector<8x384xf32>,
    %c0_23 = arith.constant 0 : index
    %c0_24 = arith.constant 0 : index
    %c3 = arith.constant 3 : index
    %38 = vector.load %arg1[%c0_23, %c0_24, %c3] : memref<1x8x504xf32, #tpu.memory_space<vmem>>, vector<1x8x384xf32>
    %39 = vector.shape_cast %38 : vector<1x8x384xf32> to vector<8x384xf32>
    %c24 = arith.constant 24 : index
    %c0_25 = arith.constant 0 : index
    %40 = vector.load %arg11[%c24, %c0_25] : memref<200x384xf32, #tpu.memory_space<vmem>>, vector<8x384xf32>
    tpu.vector_store %arg11[%c24, %c0_25], %39 {strides = array<i32>} : memref<200x384xf32, #tpu.memory_space<vmem>>, vector<8x384xf32>,
    %c0_26 = arith.constant 0 : index
    %c0_27 = arith.constant 0 : index
    %c4 = arith.constant 4 : index
    %41 = vector.load %arg1[%c0_26, %c0_27, %c4] : memref<1x8x504xf32, #tpu.memory_space<vmem>>, vector<1x8x384xf32>
    %42 = vector.shape_cast %41 : vector<1x8x384xf32> to vector<8x384xf32>
    %c32 = arith.constant 32 : index
    %c0_28 = arith.constant 0 : index
    %43 = vector.load %arg11[%c32, %c0_28] : memref<200x384xf32, #tpu.memory_space<vmem>>, vector<8x384xf32>
    tpu.vector_store %arg11[%c32, %c0_28], %42 {strides = array<i32>} : memref<200x384xf32, #tpu.memory_space<vmem>>, vector<8x384xf32>,
    %c0_29 = arith.constant 0 : index
    %c0_30 = arith.constant 0 : index
    %c24_31 = arith.constant 24 : index
    %44 = vector.load %arg1[%c0_29, %c0_30, %c24_31] : memref<1x8x504xf32, #tpu.memory_space<vmem>>, vector<1x8x384xf32>
    %45 = vector.shape_cast %44 : vector<1x8x384xf32> to vector<8x384xf32>
    %c40 = arith.constant 40 : index
    %c0_32 = arith.constant 0 : index
    %46 = vector.load %arg11[%c40, %c0_32] : memref<200x384xf32, #tpu.memory_space<vmem>>, vector<8x384xf32>
    tpu.vector_store %arg11[%c40, %c0_32], %45 {strides = array<i32>} : memref<200x384xf32, #tpu.memory_space<vmem>>, vector<8x384xf32>,
    %c0_33 = arith.constant 0 : index
    %c0_34 = arith.constant 0 : index
    %c25 = arith.constant 25 : index
    %47 = vector.load %arg1[%c0_33, %c0_34, %c25] : memref<1x8x504xf32, #tpu.memory_space<vmem>>, vector<1x8x384xf32>
    %48 = vector.shape_cast %47 : vector<1x8x384xf32> to vector<8x384xf32>
    %c48 = arith.constant 48 : index
    %c0_35 = arith.constant 0 : index
    %49 = vector.load %arg11[%c48, %c0_35] : memref<200x384xf32, #tpu.memory_space<vmem>>, vector<8x384xf32>
    tpu.vector_store %arg11[%c48, %c0_35], %48 {strides = array<i32>} : memref<200x384xf32, #tpu.memory_space<vmem>>, vector<8x384xf32>,
    %c0_36 = arith.constant 0 : index
    %c0_37 = arith.constant 0 : index
    %c26 = arith.constant 26 : index
    %50 = vector.load %arg1[%c0_36, %c0_37, %c26] : memref<1x8x504xf32, #tpu.memory_space<vmem>>, vector<1x8x384xf32>
    %51 = vector.shape_cast %50 : vector<1x8x384xf32> to vector<8x384xf32>
    %c56 = arith.constant 56 : index
    %c0_38 = arith.constant 0 : index
    %52 = vector.load %arg11[%c56, %c0_38] : memref<200x384xf32, #tpu.memory_space<vmem>>, vector<8x384xf32>
    tpu.vector_store %arg11[%c56, %c0_38], %51 {strides = array<i32>} : memref<200x384xf32, #tpu.memory_space<vmem>>, vector<8x384xf32>,
    %c0_39 = arith.constant 0 : index
    %c0_40 = arith.constant 0 : index
    %c27 = arith.constant 27 : index
    %53 = vector.load %arg1[%c0_39, %c0_40, %c27] : memref<1x8x504xf32, #tpu.memory_space<vmem>>, vector<1x8x384xf32>
    %54 = vector.shape_cast %53 : vector<1x8x384xf32> to vector<8x384xf32>
    %c64 = arith.constant 64 : index
    %c0_41 = arith.constant 0 : index
    %55 = vector.load %arg11[%c64, %c0_41] : memref<200x384xf32, #tpu.memory_space<vmem>>, vector<8x384xf32>
    tpu.vector_store %arg11[%c64, %c0_41], %54 {strides = array<i32>} : memref<200x384xf32, #tpu.memory_space<vmem>>, vector<8x384xf32>,
    %c0_42 = arith.constant 0 : index
    %c0_43 = arith.constant 0 : index
    %c28 = arith.constant 28 : index
    %56 = vector.load %arg1[%c0_42, %c0_43, %c28] : memref<1x8x504xf32, #tpu.memory_space<vmem>>, vector<1x8x384xf32>
    %57 = vector.shape_cast %56 : vector<1x8x384xf32> to vector<8x384xf32>
    %c72 = arith.constant 72 : index
    %c0_44 = arith.constant 0 : index
    %58 = vector.load %arg11[%c72, %c0_44] : memref<200x384xf32, #tpu.memory_space<vmem>>, vector<8x384xf32>
    tpu.vector_store %arg11[%c72, %c0_44], %57 {strides = array<i32>} : memref<200x384xf32, #tpu.memory_space<vmem>>, vector<8x384xf32>,
    %c0_45 = arith.constant 0 : index
    %c0_46 = arith.constant 0 : index
    %c48_47 = arith.constant 48 : index
    %59 = vector.load %arg1[%c0_45, %c0_46, %c48_47] : memref<1x8x504xf32, #tpu.memory_space<vmem>>, vector<1x8x384xf32>
    %60 = vector.shape_cast %59 : vector<1x8x384xf32> to vector<8x384xf32>
    %c80 = arith.constant 80 : index
    %c0_48 = arith.constant 0 : index
    %61 = vector.load %arg11[%c80, %c0_48] : memref<200x384xf32, #tpu.memory_space<vmem>>, vector<8x384xf32>
    tpu.vector_store %arg11[%c80, %c0_48], %60 {strides = array<i32>} : memref<200x384xf32, #tpu.memory_space<vmem>>, vector<8x384xf32>,
    %c0_49 = arith.constant 0 : index
    %c0_50 = arith.constant 0 : index
    %c49 = arith.constant 49 : index
    %62 = vector.load %arg1[%c0_49, %c0_50, %c49] : memref<1x8x504xf32, #tpu.memory_space<vmem>>, vector<1x8x384xf32>
    %63 = vector.shape_cast %62 : vector<1x8x384xf32> to vector<8x384xf32>
    %c88 = arith.constant 88 : index
    %c0_51 = arith.constant 0 : index
    %64 = vector.load %arg11[%c88, %c0_51] : memref<200x384xf32, #tpu.memory_space<vmem>>, vector<8x384xf32>
    tpu.vector_store %arg11[%c88, %c0_51], %63 {strides = array<i32>} : memref<200x384xf32, #tpu.memory_space<vmem>>, vector<8x384xf32>,
    %c0_52 = arith.constant 0 : index
    %c0_53 = arith.constant 0 : index
    %c50 = arith.constant 50 : index
    %65 = vector.load %arg1[%c0_52, %c0_53, %c50] : memref<1x8x504xf32, #tpu.memory_space<vmem>>, vector<1x8x384xf32>
    %66 = vector.shape_cast %65 : vector<1x8x384xf32> to vector<8x384xf32>
    %c96 = arith.constant 96 : index
    %c0_54 = arith.constant 0 : index
    %67 = vector.load %arg11[%c96, %c0_54] : memref<200x384xf32, #tpu.memory_space<vmem>>, vector<8x384xf32>
    tpu.vector_store %arg11[%c96, %c0_54], %66 {strides = array<i32>} : memref<200x384xf32, #tpu.memory_space<vmem>>, vector<8x384xf32>,
    %c0_55 = arith.constant 0 : index
    %c0_56 = arith.constant 0 : index
    %c51 = arith.constant 51 : index
    %68 = vector.load %arg1[%c0_55, %c0_56, %c51] : memref<1x8x504xf32, #tpu.memory_space<vmem>>, vector<1x8x384xf32>
    %69 = vector.shape_cast %68 : vector<1x8x384xf32> to vector<8x384xf32>
    %c104 = arith.constant 104 : index
    %c0_57 = arith.constant 0 : index
    %70 = vector.load %arg11[%c104, %c0_57] : memref<200x384xf32, #tpu.memory_space<vmem>>, vector<8x384xf32>
    tpu.vector_store %arg11[%c104, %c0_57], %69 {strides = array<i32>} : memref<200x384xf32, #tpu.memory_space<vmem>>, vector<8x384xf32>,
    %c0_58 = arith.constant 0 : index
    %c0_59 = arith.constant 0 : index
    %c52 = arith.constant 52 : index
    %71 = vector.load %arg1[%c0_58, %c0_59, %c52] : memref<1x8x504xf32, #tpu.memory_space<vmem>>, vector<1x8x384xf32>
    %72 = vector.shape_cast %71 : vector<1x8x384xf32> to vector<8x384xf32>
    %c112 = arith.constant 112 : index
    %c0_60 = arith.constant 0 : index
    %73 = vector.load %arg11[%c112, %c0_60] : memref<200x384xf32, #tpu.memory_space<vmem>>, vector<8x384xf32>
    tpu.vector_store %arg11[%c112, %c0_60], %72 {strides = array<i32>} : memref<200x384xf32, #tpu.memory_space<vmem>>, vector<8x384xf32>,
    %c0_61 = arith.constant 0 : index
    %c0_62 = arith.constant 0 : index
    %c72_63 = arith.constant 72 : index
    %74 = vector.load %arg1[%c0_61, %c0_62, %c72_63] : memref<1x8x504xf32, #tpu.memory_space<vmem>>, vector<1x8x384xf32>
    %75 = vector.shape_cast %74 : vector<1x8x384xf32> to vector<8x384xf32>
    %c120 = arith.constant 120 : index
    %c0_64 = arith.constant 0 : index
    %76 = vector.load %arg11[%c120, %c0_64] : memref<200x384xf32, #tpu.memory_space<vmem>>, vector<8x384xf32>
    tpu.vector_store %arg11[%c120, %c0_64], %75 {strides = array<i32>} : memref<200x384xf32, #tpu.memory_space<vmem>>, vector<8x384xf32>,
    %c0_65 = arith.constant 0 : index
    %c0_66 = arith.constant 0 : index
    %c73 = arith.constant 73 : index
    %77 = vector.load %arg1[%c0_65, %c0_66, %c73] : memref<1x8x504xf32, #tpu.memory_space<vmem>>, vector<1x8x384xf32>
    %78 = vector.shape_cast %77 : vector<1x8x384xf32> to vector<8x384xf32>
    %c128 = arith.constant 128 : index
    %c0_67 = arith.constant 0 : index
    %79 = vector.load %arg11[%c128, %c0_67] : memref<200x384xf32, #tpu.memory_space<vmem>>, vector<8x384xf32>
    tpu.vector_store %arg11[%c128, %c0_67], %78 {strides = array<i32>} : memref<200x384xf32, #tpu.memory_space<vmem>>, vector<8x384xf32>,
    %c0_68 = arith.constant 0 : index
    %c0_69 = arith.constant 0 : index
    %c74 = arith.constant 74 : index
    %80 = vector.load %arg1[%c0_68, %c0_69, %c74] : memref<1x8x504xf32, #tpu.memory_space<vmem>>, vector<1x8x384xf32>
    %81 = vector.shape_cast %80 : vector<1x8x384xf32> to vector<8x384xf32>
    %c136 = arith.constant 136 : index
    %c0_70 = arith.constant 0 : index
    %82 = vector.load %arg11[%c136, %c0_70] : memref<200x384xf32, #tpu.memory_space<vmem>>, vector<8x384xf32>
    tpu.vector_store %arg11[%c136, %c0_70], %81 {strides = array<i32>} : memref<200x384xf32, #tpu.memory_space<vmem>>, vector<8x384xf32>,
    %c0_71 = arith.constant 0 : index
    %c0_72 = arith.constant 0 : index
    %c75 = arith.constant 75 : index
    %83 = vector.load %arg1[%c0_71, %c0_72, %c75] : memref<1x8x504xf32, #tpu.memory_space<vmem>>, vector<1x8x384xf32>
    %84 = vector.shape_cast %83 : vector<1x8x384xf32> to vector<8x384xf32>
    %c144 = arith.constant 144 : index
    %c0_73 = arith.constant 0 : index
    %85 = vector.load %arg11[%c144, %c0_73] : memref<200x384xf32, #tpu.memory_space<vmem>>, vector<8x384xf32>
    tpu.vector_store %arg11[%c144, %c0_73], %84 {strides = array<i32>} : memref<200x384xf32, #tpu.memory_space<vmem>>, vector<8x384xf32>,
    %c0_74 = arith.constant 0 : index
    %c0_75 = arith.constant 0 : index
    %c76 = arith.constant 76 : index
    %86 = vector.load %arg1[%c0_74, %c0_75, %c76] : memref<1x8x504xf32, #tpu.memory_space<vmem>>, vector<1x8x384xf32>
    %87 = vector.shape_cast %86 : vector<1x8x384xf32> to vector<8x384xf32>
    %c152 = arith.constant 152 : index
    %c0_76 = arith.constant 0 : index
    %88 = vector.load %arg11[%c152, %c0_76] : memref<200x384xf32, #tpu.memory_space<vmem>>, vector<8x384xf32>
    tpu.vector_store %arg11[%c152, %c0_76], %87 {strides = array<i32>} : memref<200x384xf32, #tpu.memory_space<vmem>>, vector<8x384xf32>,
    %c0_77 = arith.constant 0 : index
    %c0_78 = arith.constant 0 : index
    %c96_79 = arith.constant 96 : index
    %89 = vector.load %arg1[%c0_77, %c0_78, %c96_79] : memref<1x8x504xf32, #tpu.memory_space<vmem>>, vector<1x8x384xf32>
    %90 = vector.shape_cast %89 : vector<1x8x384xf32> to vector<8x384xf32>
    %c160 = arith.constant 160 : index
    %c0_80 = arith.constant 0 : index
    %91 = vector.load %arg11[%c160, %c0_80] : memref<200x384xf32, #tpu.memory_space<vmem>>, vector<8x384xf32>
    tpu.vector_store %arg11[%c160, %c0_80], %90 {strides = array<i32>} : memref<200x384xf32, #tpu.memory_space<vmem>>, vector<8x384xf32>,
    %c0_81 = arith.constant 0 : index
    %c0_82 = arith.constant 0 : index
    %c97 = arith.constant 97 : index
    %92 = vector.load %arg1[%c0_81, %c0_82, %c97] : memref<1x8x504xf32, #tpu.memory_space<vmem>>, vector<1x8x384xf32>
    %93 = vector.shape_cast %92 : vector<1x8x384xf32> to vector<8x384xf32>
    %c168 = arith.constant 168 : index
    %c0_83 = arith.constant 0 : index
    %94 = vector.load %arg11[%c168, %c0_83] : memref<200x384xf32, #tpu.memory_space<vmem>>, vector<8x384xf32>
    tpu.vector_store %arg11[%c168, %c0_83], %93 {strides = array<i32>} : memref<200x384xf32, #tpu.memory_space<vmem>>, vector<8x384xf32>,
    %c0_84 = arith.constant 0 : index
    %c0_85 = arith.constant 0 : index
    %c98 = arith.constant 98 : index
    %95 = vector.load %arg1[%c0_84, %c0_85, %c98] : memref<1x8x504xf32, #tpu.memory_space<vmem>>, vector<1x8x384xf32>
    %96 = vector.shape_cast %95 : vector<1x8x384xf32> to vector<8x384xf32>
    %c176 = arith.constant 176 : index
    %c0_86 = arith.constant 0 : index
    %97 = vector.load %arg11[%c176, %c0_86] : memref<200x384xf32, #tpu.memory_space<vmem>>, vector<8x384xf32>
    tpu.vector_store %arg11[%c176, %c0_86], %96 {strides = array<i32>} : memref<200x384xf32, #tpu.memory_space<vmem>>, vector<8x384xf32>,
    %c0_87 = arith.constant 0 : index
    %c0_88 = arith.constant 0 : index
    %c99 = arith.constant 99 : index
    %98 = vector.load %arg1[%c0_87, %c0_88, %c99] : memref<1x8x504xf32, #tpu.memory_space<vmem>>, vector<1x8x384xf32>
    %99 = vector.shape_cast %98 : vector<1x8x384xf32> to vector<8x384xf32>
    %c184 = arith.constant 184 : index
    %c0_89 = arith.constant 0 : index
    %100 = vector.load %arg11[%c184, %c0_89] : memref<200x384xf32, #tpu.memory_space<vmem>>, vector<8x384xf32>
    tpu.vector_store %arg11[%c184, %c0_89], %99 {strides = array<i32>} : memref<200x384xf32, #tpu.memory_space<vmem>>, vector<8x384xf32>,
    %c0_90 = arith.constant 0 : index
    %c0_91 = arith.constant 0 : index
    %c100 = arith.constant 100 : index
    %101 = vector.load %arg1[%c0_90, %c0_91, %c100] : memref<1x8x504xf32, #tpu.memory_space<vmem>>, vector<1x8x384xf32>
    %102 = vector.shape_cast %101 : vector<1x8x384xf32> to vector<8x384xf32>
    %c192 = arith.constant 192 : index
    %c0_92 = arith.constant 0 : index
    %103 = vector.load %arg11[%c192, %c0_92] : memref<200x384xf32, #tpu.memory_space<vmem>>, vector<8x384xf32>
    tpu.vector_store %arg11[%c192, %c0_92], %102 {strides = array<i32>} : memref<200x384xf32, #tpu.memory_space<vmem>>, vector<8x384xf32>,
    %c0_93 = arith.constant 0 : index
    %c0_94 = arith.constant 0 : index
    %104 = vector.load %arg2[%c0_93, %c0_94] : memref<32x200xf32, #tpu.memory_space<vmem>>, vector<32x200xf32>
    %c0_95 = arith.constant 0 : index
    %c0_96 = arith.constant 0 : index
    %105 = vector.load %arg11[%c0_95, %c0_96] : memref<200x384xf32, #tpu.memory_space<vmem>>, vector<200x384xf32>
    %cst_97 = arith.constant dense<0.000000e+00> : vector<32x384xf32>
    %106 = tpu.matmul %104, %105, %cst_97 {dimension_numbers = #tpu.dot_dimension_numbers<[1], [0], [0], [1], [0, 0, 1, 1], [], []>} : vector<32x200xf32>, vector<200x384xf32>, vector<32x384xf32> -> vector<32x384xf32>
    %c0_98 = arith.constant 0 : index
    %c0_99 = arith.constant 0 : index
    %107 = vector.load %arg3[%c0_98, %c0_99] : memref<32x1xf32, #tpu.memory_space<vmem>>, vector<32x1xf32>
    %108 = vector.broadcast %107 : vector<32x1xf32> to vector<32x384xf32>
    %109 = arith.addf %106, %108 : vector<32x384xf32>
    %110 = math.tanh %109 : vector<32x384xf32>
    %111 = vector.broadcast %20 : vector<1x384xf32> to vector<32x384xf32>
    %112 = arith.mulf %110, %111 : vector<32x384xf32>
    %c0_100 = arith.constant 0 : index
    %c50_101 = arith.constant 50 : index
    %113 = vector.load %arg9[%c0_100, %c50_101] : memref<32x504xf32, #tpu.memory_space<vmem>>, vector<32x384xf32>
    tpu.vector_store %arg9[%c0_100, %c50_101], %112 {strides = array<i32>} : memref<32x504xf32, #tpu.memory_space<vmem>>, vector<32x384xf32>,
    %c0_102 = arith.constant 0 : index
    %c25_103 = arith.constant 25 : index
    %114 = vector.load %arg9[%c0_102, %c25_103] : memref<32x504xf32, #tpu.memory_space<vmem>>, vector<32x384xf32>
    %c0_104 = arith.constant 0 : index
    %c0_105 = arith.constant 0 : index
    %115 = vector.load %arg12[%c0_104, %c0_105] : memref<288x384xf32, #tpu.memory_space<vmem>>, vector<32x384xf32>
    tpu.vector_store %arg12[%c0_104, %c0_105], %114 {strides = array<i32>} : memref<288x384xf32, #tpu.memory_space<vmem>>, vector<32x384xf32>,
    %c0_106 = arith.constant 0 : index
    %c26_107 = arith.constant 26 : index
    %116 = vector.load %arg9[%c0_106, %c26_107] : memref<32x504xf32, #tpu.memory_space<vmem>>, vector<32x384xf32>
    %c32_108 = arith.constant 32 : index
    %c0_109 = arith.constant 0 : index
    %117 = vector.load %arg12[%c32_108, %c0_109] : memref<288x384xf32, #tpu.memory_space<vmem>>, vector<32x384xf32>
    tpu.vector_store %arg12[%c32_108, %c0_109], %116 {strides = array<i32>} : memref<288x384xf32, #tpu.memory_space<vmem>>, vector<32x384xf32>,
    %c0_110 = arith.constant 0 : index
    %c27_111 = arith.constant 27 : index
    %118 = vector.load %arg9[%c0_110, %c27_111] : memref<32x504xf32, #tpu.memory_space<vmem>>, vector<32x384xf32>
    %c64_112 = arith.constant 64 : index
    %c0_113 = arith.constant 0 : index
    %119 = vector.load %arg12[%c64_112, %c0_113] : memref<288x384xf32, #tpu.memory_space<vmem>>, vector<32x384xf32>
    tpu.vector_store %arg12[%c64_112, %c0_113], %118 {strides = array<i32>} : memref<288x384xf32, #tpu.memory_space<vmem>>, vector<32x384xf32>,
    %c0_114 = arith.constant 0 : index
    %c49_115 = arith.constant 49 : index
    %120 = vector.load %arg9[%c0_114, %c49_115] : memref<32x504xf32, #tpu.memory_space<vmem>>, vector<32x384xf32>
    %c96_116 = arith.constant 96 : index
    %c0_117 = arith.constant 0 : index
    %121 = vector.load %arg12[%c96_116, %c0_117] : memref<288x384xf32, #tpu.memory_space<vmem>>, vector<32x384xf32>
    tpu.vector_store %arg12[%c96_116, %c0_117], %120 {strides = array<i32>} : memref<288x384xf32, #tpu.memory_space<vmem>>, vector<32x384xf32>,
    %c0_118 = arith.constant 0 : index
    %c50_119 = arith.constant 50 : index
    %122 = vector.load %arg9[%c0_118, %c50_119] : memref<32x504xf32, #tpu.memory_space<vmem>>, vector<32x384xf32>
    %c128_120 = arith.constant 128 : index
    %c0_121 = arith.constant 0 : index
    %123 = vector.load %arg12[%c128_120, %c0_121] : memref<288x384xf32, #tpu.memory_space<vmem>>, vector<32x384xf32>
    tpu.vector_store %arg12[%c128_120, %c0_121], %122 {strides = array<i32>} : memref<288x384xf32, #tpu.memory_space<vmem>>, vector<32x384xf32>,
    %c0_122 = arith.constant 0 : index
    %c51_123 = arith.constant 51 : index
    %124 = vector.load %arg9[%c0_122, %c51_123] : memref<32x504xf32, #tpu.memory_space<vmem>>, vector<32x384xf32>
    %c160_124 = arith.constant 160 : index
    %c0_125 = arith.constant 0 : index
    %125 = vector.load %arg12[%c160_124, %c0_125] : memref<288x384xf32, #tpu.memory_space<vmem>>, vector<32x384xf32>
    tpu.vector_store %arg12[%c160_124, %c0_125], %124 {strides = array<i32>} : memref<288x384xf32, #tpu.memory_space<vmem>>, vector<32x384xf32>,
    %c0_126 = arith.constant 0 : index
    %c73_127 = arith.constant 73 : index
    %126 = vector.load %arg9[%c0_126, %c73_127] : memref<32x504xf32, #tpu.memory_space<vmem>>, vector<32x384xf32>
    %c192_128 = arith.constant 192 : index
    %c0_129 = arith.constant 0 : index
    %127 = vector.load %arg12[%c192_128, %c0_129] : memref<288x384xf32, #tpu.memory_space<vmem>>, vector<32x384xf32>
    tpu.vector_store %arg12[%c192_128, %c0_129], %126 {strides = array<i32>} : memref<288x384xf32, #tpu.memory_space<vmem>>, vector<32x384xf32>,
    %c0_130 = arith.constant 0 : index
    %c74_131 = arith.constant 74 : index
    %128 = vector.load %arg9[%c0_130, %c74_131] : memref<32x504xf32, #tpu.memory_space<vmem>>, vector<32x384xf32>
    %c224 = arith.constant 224 : index
    %c0_132 = arith.constant 0 : index
    %129 = vector.load %arg12[%c224, %c0_132] : memref<288x384xf32, #tpu.memory_space<vmem>>, vector<32x384xf32>
    tpu.vector_store %arg12[%c224, %c0_132], %128 {strides = array<i32>} : memref<288x384xf32, #tpu.memory_space<vmem>>, vector<32x384xf32>,
    %c0_133 = arith.constant 0 : index
    %c75_134 = arith.constant 75 : index
    %130 = vector.load %arg9[%c0_133, %c75_134] : memref<32x504xf32, #tpu.memory_space<vmem>>, vector<32x384xf32>
    %c256 = arith.constant 256 : index
    %c0_135 = arith.constant 0 : index
    %131 = vector.load %arg12[%c256, %c0_135] : memref<288x384xf32, #tpu.memory_space<vmem>>, vector<32x384xf32>
    tpu.vector_store %arg12[%c256, %c0_135], %130 {strides = array<i32>} : memref<288x384xf32, #tpu.memory_space<vmem>>, vector<32x384xf32>,
    %c0_136 = arith.constant 0 : index
    %c0_137 = arith.constant 0 : index
    %132 = vector.load %arg4[%c0_136, %c0_137] : memref<16x288xf32, #tpu.memory_space<vmem>>, vector<16x288xf32>
    %c0_138 = arith.constant 0 : index
    %c0_139 = arith.constant 0 : index
    %133 = vector.load %arg12[%c0_138, %c0_139] : memref<288x384xf32, #tpu.memory_space<vmem>>, vector<288x384xf32>
    %cst_140 = arith.constant dense<0.000000e+00> : vector<16x384xf32>
    %134 = tpu.matmul %132, %133, %cst_140 {dimension_numbers = #tpu.dot_dimension_numbers<[1], [0], [0], [1], [0, 0, 1, 1], [], []>} : vector<16x288xf32>, vector<288x384xf32>, vector<16x384xf32> -> vector<16x384xf32>
    %c0_141 = arith.constant 0 : index
    %c0_142 = arith.constant 0 : index
    %135 = vector.load %arg5[%c0_141, %c0_142] : memref<16x1xf32, #tpu.memory_space<vmem>>, vector<16x1xf32>
    %136 = vector.broadcast %135 : vector<16x1xf32> to vector<16x384xf32>
    %137 = arith.addf %134, %136 : vector<16x384xf32>
    %138 = math.tanh %137 : vector<16x384xf32>
    %139 = vector.broadcast %20 : vector<1x384xf32> to vector<16x384xf32>
    %140 = arith.mulf %138, %139 : vector<16x384xf32>
    %c0_143 = arith.constant 0 : index
    %c50_144 = arith.constant 50 : index
    %141 = vector.load %arg10[%c0_143, %c50_144] : memref<16x504xf32, #tpu.memory_space<vmem>>, vector<16x384xf32>
    tpu.vector_store %arg10[%c0_143, %c50_144], %140 {strides = array<i32>} : memref<16x504xf32, #tpu.memory_space<vmem>>, vector<16x384xf32>,
    %c0_145 = arith.constant 0 : index
    %c25_146 = arith.constant 25 : index
    %142 = vector.load %arg10[%c0_145, %c25_146] : memref<16x504xf32, #tpu.memory_space<vmem>>, vector<16x384xf32>
    %c0_147 = arith.constant 0 : index
    %c0_148 = arith.constant 0 : index
    %143 = vector.load %arg13[%c0_147, %c0_148] : memref<144x384xf32, #tpu.memory_space<vmem>>, vector<16x384xf32>
    tpu.vector_store %arg13[%c0_147, %c0_148], %142 {strides = array<i32>} : memref<144x384xf32, #tpu.memory_space<vmem>>, vector<16x384xf32>,
    %c0_149 = arith.constant 0 : index
    %c26_150 = arith.constant 26 : index
    %144 = vector.load %arg10[%c0_149, %c26_150] : memref<16x504xf32, #tpu.memory_space<vmem>>, vector<16x384xf32>
    %c16_151 = arith.constant 16 : index
    %c0_152 = arith.constant 0 : index
    %145 = vector.load %arg13[%c16_151, %c0_152] : memref<144x384xf32, #tpu.memory_space<vmem>>, vector<16x384xf32>
    tpu.vector_store %arg13[%c16_151, %c0_152], %144 {strides = array<i32>} : memref<144x384xf32, #tpu.memory_space<vmem>>, vector<16x384xf32>,
    %c0_153 = arith.constant 0 : index
    %c27_154 = arith.constant 27 : index
    %146 = vector.load %arg10[%c0_153, %c27_154] : memref<16x504xf32, #tpu.memory_space<vmem>>, vector<16x384xf32>
    %c32_155 = arith.constant 32 : index
    %c0_156 = arith.constant 0 : index
    %147 = vector.load %arg13[%c32_155, %c0_156] : memref<144x384xf32, #tpu.memory_space<vmem>>, vector<16x384xf32>
    tpu.vector_store %arg13[%c32_155, %c0_156], %146 {strides = array<i32>} : memref<144x384xf32, #tpu.memory_space<vmem>>, vector<16x384xf32>,
    %c0_157 = arith.constant 0 : index
    %c49_158 = arith.constant 49 : index
    %148 = vector.load %arg10[%c0_157, %c49_158] : memref<16x504xf32, #tpu.memory_space<vmem>>, vector<16x384xf32>
    %c48_159 = arith.constant 48 : index
    %c0_160 = arith.constant 0 : index
    %149 = vector.load %arg13[%c48_159, %c0_160] : memref<144x384xf32, #tpu.memory_space<vmem>>, vector<16x384xf32>
    tpu.vector_store %arg13[%c48_159, %c0_160], %148 {strides = array<i32>} : memref<144x384xf32, #tpu.memory_space<vmem>>, vector<16x384xf32>,
    %c0_161 = arith.constant 0 : index
    %c50_162 = arith.constant 50 : index
    %150 = vector.load %arg10[%c0_161, %c50_162] : memref<16x504xf32, #tpu.memory_space<vmem>>, vector<16x384xf32>
    %c64_163 = arith.constant 64 : index
    %c0_164 = arith.constant 0 : index
    %151 = vector.load %arg13[%c64_163, %c0_164] : memref<144x384xf32, #tpu.memory_space<vmem>>, vector<16x384xf32>
    tpu.vector_store %arg13[%c64_163, %c0_164], %150 {strides = array<i32>} : memref<144x384xf32, #tpu.memory_space<vmem>>, vector<16x384xf32>,
    %c0_165 = arith.constant 0 : index
    %c51_166 = arith.constant 51 : index
    %152 = vector.load %arg10[%c0_165, %c51_166] : memref<16x504xf32, #tpu.memory_space<vmem>>, vector<16x384xf32>
    %c80_167 = arith.constant 80 : index
    %c0_168 = arith.constant 0 : index
    %153 = vector.load %arg13[%c80_167, %c0_168] : memref<144x384xf32, #tpu.memory_space<vmem>>, vector<16x384xf32>
    tpu.vector_store %arg13[%c80_167, %c0_168], %152 {strides = array<i32>} : memref<144x384xf32, #tpu.memory_space<vmem>>, vector<16x384xf32>,
    %c0_169 = arith.constant 0 : index
    %c73_170 = arith.constant 73 : index
    %154 = vector.load %arg10[%c0_169, %c73_170] : memref<16x504xf32, #tpu.memory_space<vmem>>, vector<16x384xf32>
    %c96_171 = arith.constant 96 : index
    %c0_172 = arith.constant 0 : index
    %155 = vector.load %arg13[%c96_171, %c0_172] : memref<144x384xf32, #tpu.memory_space<vmem>>, vector<16x384xf32>
    tpu.vector_store %arg13[%c96_171, %c0_172], %154 {strides = array<i32>} : memref<144x384xf32, #tpu.memory_space<vmem>>, vector<16x384xf32>,
    %c0_173 = arith.constant 0 : index
    %c74_174 = arith.constant 74 : index
    %156 = vector.load %arg10[%c0_173, %c74_174] : memref<16x504xf32, #tpu.memory_space<vmem>>, vector<16x384xf32>
    %c112_175 = arith.constant 112 : index
    %c0_176 = arith.constant 0 : index
    %157 = vector.load %arg13[%c112_175, %c0_176] : memref<144x384xf32, #tpu.memory_space<vmem>>, vector<16x384xf32>
    tpu.vector_store %arg13[%c112_175, %c0_176], %156 {strides = array<i32>} : memref<144x384xf32, #tpu.memory_space<vmem>>, vector<16x384xf32>,
    %c0_177 = arith.constant 0 : index
    %c75_178 = arith.constant 75 : index
    %158 = vector.load %arg10[%c0_177, %c75_178] : memref<16x504xf32, #tpu.memory_space<vmem>>, vector<16x384xf32>
    %c128_179 = arith.constant 128 : index
    %c0_180 = arith.constant 0 : index
    %159 = vector.load %arg13[%c128_179, %c0_180] : memref<144x384xf32, #tpu.memory_space<vmem>>, vector<16x384xf32>
    tpu.vector_store %arg13[%c128_179, %c0_180], %158 {strides = array<i32>} : memref<144x384xf32, #tpu.memory_space<vmem>>, vector<16x384xf32>,
    %c0_181 = arith.constant 0 : index
    %c0_182 = arith.constant 0 : index
    %160 = vector.load %arg6[%c0_181, %c0_182] : memref<4x144xf32, #tpu.memory_space<vmem>>, vector<4x144xf32>
    %c0_183 = arith.constant 0 : index
    %c0_184 = arith.constant 0 : index
    %161 = vector.load %arg13[%c0_183, %c0_184] : memref<144x384xf32, #tpu.memory_space<vmem>>, vector<144x384xf32>
    %cst_185 = arith.constant dense<0.000000e+00> : vector<4x384xf32>
    %162 = tpu.matmul %160, %161, %cst_185 {dimension_numbers = #tpu.dot_dimension_numbers<[1], [0], [0], [1], [0, 0, 1, 1], [], []>} : vector<4x144xf32>, vector<144x384xf32>, vector<4x384xf32> -> vector<4x384xf32>
    %c0_186 = arith.constant 0 : index
    %c0_187 = arith.constant 0 : index
    %163 = vector.load %arg7[%c0_186, %c0_187] : memref<4x1xf32, #tpu.memory_space<vmem>>, vector<4x1xf32>
    %164 = vector.broadcast %163 : vector<4x1xf32> to vector<4x384xf32>
    %165 = arith.addf %162, %164 : vector<4x384xf32>
    %c0_188 = arith.constant 0 : index
    %c0_189 = arith.constant 0 : index
    %c0_190 = arith.constant 0 : index
    %166 = vector.load %arg8[%c0_188, %c0_189, %c0_190] : memref<1x4x384xf32, #tpu.memory_space<vmem>>, vector<1x4x384xf32>
    %167 = vector.shape_cast %166 : vector<1x4x384xf32> to vector<4x384xf32>
    %168 = vector.shape_cast %165 : vector<4x384xf32> to vector<1x4x384xf32>
    tpu.vector_store %arg8[%c0_188, %c0_189, %c0_190], %168 {strides = array<i32>} : memref<1x4x384xf32, #tpu.memory_space<vmem>>, vector<1x4x384xf32>,
    return
  }
  func.func @transform_0(%arg0: i32) -> (i32, i32, i32) {
    %c0_i32 = arith.constant 0 : i32
    %c0_i32_0 = arith.constant 0 : i32
    %c0_i32_1 = arith.constant 0 : i32
    return %arg0, %c0_i32, %c0_i32_0 : i32, i32, i32
  }
  func.func @transform_1(%arg0: i32) -> (i32, i32) {
    %c0_i32 = arith.constant 0 : i32
    %c0_i32_0 = arith.constant 0 : i32
    %c0_i32_1 = arith.constant 0 : i32
    return %c0_i32, %c0_i32_0 : i32, i32
  }
  func.func @transform_2(%arg0: i32) -> (i32, i32) {
    %c0_i32 = arith.constant 0 : i32
    %c0_i32_0 = arith.constant 0 : i32
    %c0_i32_1 = arith.constant 0 : i32
    return %c0_i32, %c0_i32_0 : i32, i32
  }
  func.func @transform_3(%arg0: i32) -> (i32, i32) {
    %c0_i32 = arith.constant 0 : i32
    %c0_i32_0 = arith.constant 0 : i32
    %c0_i32_1 = arith.constant 0 : i32
    return %c0_i32, %c0_i32_0 : i32, i32
  }
  func.func @transform_4(%arg0: i32) -> (i32, i32) {
    %c0_i32 = arith.constant 0 : i32
    %c0_i32_0 = arith.constant 0 : i32
    %c0_i32_1 = arith.constant 0 : i32
    return %c0_i32, %c0_i32_0 : i32, i32
  }
  func.func @transform_5(%arg0: i32) -> (i32, i32) {
    %c0_i32 = arith.constant 0 : i32
    %c0_i32_0 = arith.constant 0 : i32
    %c0_i32_1 = arith.constant 0 : i32
    return %c0_i32, %c0_i32_0 : i32, i32
  }
  func.func @transform_6(%arg0: i32) -> (i32, i32) {
    %c0_i32 = arith.constant 0 : i32
    %c0_i32_0 = arith.constant 0 : i32
    %c0_i32_1 = arith.constant 0 : i32
    return %c0_i32, %c0_i32_0 : i32, i32
  }
  func.func @transform_7(%arg0: i32) -> (i32, i32, i32) {
    %c0_i32 = arith.constant 0 : i32
    %c0_i32_0 = arith.constant 0 : i32
    %c0_i32_1 = arith.constant 0 : i32
    return %arg0, %c0_i32, %c0_i32_0 : i32, i32, i32
  }
}

</mosaic_0001>

<llo_original>
// kernel: espcn_forward.1
$region0: #{espcn_forward.1}
  #allocation0 [shape = 'u32[]', space=smem, size = 0x4, offset = 0x4, fixed_abs, tag = 'smem constant byte address 0x4 - core index']
  #allocation1 [shape = 'u32[144,128]{1,0:T(1,128)}', space=vmem, size = 0x12000, scoped, tag = 'internal scratch']
  #allocation2 [shape = 'f32[32,504]{1,0:T(8,128)}', space=vmem, size = 0x10000, scoped, tag = 'scratch operand']
  #allocation3 [shape = 'f32[16,504]{1,0:T(8,128)}', space=vmem, size = 0x8000, scoped, tag = 'scratch operand']
  #allocation4 [shape = 'f32[200,384]{1,0:T(8,128)}', space=vmem, size = 0x4b000, scoped, tag = 'scratch operand']
  #allocation5 [shape = 'f32[288,384]{1,0:T(8,128)}', space=vmem, size = 0x6c000, scoped, tag = 'scratch operand']
  #allocation6 [shape = 'f32[144,384]{1,0:T(8,128)}', space=vmem, size = 0x36000, scoped, tag = 'scratch operand']
  %s0 = inlined_call_operand.vmem [shape: f32[2,8,504], index: 0, kind: input, shape index: {}]
  %s1 = inlined_call_operand.vmem [shape: f32[32,200], index: 1, kind: input, shape index: {}]
  %s2 = inlined_call_operand.vmem [shape: f32[32,1], index: 2, kind: input, shape index: {}]
  %s3 = inlined_call_operand.vmem [shape: f32[16,288], index: 3, kind: input, shape index: {}]
  %s4 = inlined_call_operand.vmem [shape: f32[16,1], index: 4, kind: input, shape index: {}]
  %s5 = inlined_call_operand.vmem [shape: f32[4,144], index: 5, kind: input, shape index: {}]
  %s6 = inlined_call_operand.vmem [shape: f32[4,1], index: 6, kind: input, shape index: {}]
  %s7 = inlined_call_operand.vmem [shape: f32[2,4,384], index: 7, kind: output, shape index: {}]
  %s8 = sld [smem:[#allocation0]]
  $region61: #{espcn_forward.1} parent=0
    _
  %s10 = ssub.s32 1, %s8
  %s11 = scalar_select 0, %s10, %s8
  loop: start=0, step=1, limit=4
  $region2: #{espcn_forward.1} parent=0 // loop_pre_header
    _
  $region3: #{espcn_forward.1} parent=0 // loop_header
    %s13 = sphi 0, %s17
    %p14 = scmp.ge.s32.totalorder %s13, 4
    %s23 = sphi 0, %s25
    %s26 = sphi 0, %s23
    %s27 = sphi 0, %s26
    %s43 = sphi 0, %s27
    %s47 = sphi 0, %s47
    %s49 = sphi 0, %s47
    %s50 = sphi 0, %s49
    %s64 = sphi 0, %s50
    %s68 = sphi 0, %s68
    %s70 = sphi 0, %s68
    %s71 = sphi 0, %s70
    %s85 = sphi 0, %s71
    %s89 = sphi 0, %s89
    %s91 = sphi 0, %s89
    %s92 = sphi 0, %s91
    %s106 = sphi 0, %s92
    %s110 = sphi 0, %s110
    %s112 = sphi 0, %s110
    %s113 = sphi 0, %s112
    %s127 = sphi 0, %s113
    %s131 = sphi 0, %s131
    %s133 = sphi 0, %s131
    %s134 = sphi 0, %s133
    %s148 = sphi 0, %s134
    %s152 = sphi 0, %s152
    %s154 = sphi 0, %s152
    %s155 = sphi 0, %s154
    %s169 = sphi 0, %s155
    %s175 = sphi 0, %s177
    %s178 = sphi 0, %s175
    %s179 = sphi 0, %s178
    %s195 = sphi 0, %s179
  $region4: #{espcn_forward.1} parent=0 // loop_header_branch
    %16 = sbr.rel (%p14) target = $region8
  $region5: #{espcn_forward.1} parent=0 // loop_body
    %s18 = ssub.s32 %s13, 1
    %s19 = ssub.s32 %s13, 2
    %s20 = sadd.s32 %s13, 1
    %s21 = ssub.s32 %s13, %s20
    %p22 = scmp.eq.s32.totalorder %s21, 0
    %s24 = sadd.s32 %s23, 1
    %s25 = scalar_select %p22, %s23, %s24
    %p28 = pneg %p22
    %p29 = scmp.eq.s32.totalorder %s13, 1
    %p30 = por %p28, %p29
    %p31 = scmp.ne.s32.totalorder %s23, %s26
    %p32 = scmp.eq.s32.totalorder %s13, 0
    %p33 = por %p31, %p32
    %p34 = scmp.ne.s32.totalorder %s23, %s26
    %p35 = scmp.eq.s32.totalorder %s18, 1
    %p36 = por %p34, %p35
    %p37 = scmp.ne.s32.totalorder %s26, %s27
    %p38 = scmp.eq.s32.totalorder %s18, 0
    %p39 = por %p37, %p38
    %p40 = scmp.ne.s32.totalorder %s26, %s27
    %p41 = scmp.eq.s32.totalorder %s19, 1
    %p42 = por %p40, %p41
    %p44 = scmp.ne.s32.totalorder %s27, %s43
    %p45 = scmp.eq.s32.totalorder %s19, 0
    %p46 = por %p44, %p45
    %s48 = sadd.s32 %s47, 1
    %p51 = scmp.eq.s32.totalorder %s13, 1
    %p52 = scmp.ne.s32.totalorder %s47, %s49
    %p53 = scmp.eq.s32.totalorder %s13, 0
    %p54 = por %p52, %p53
    %p55 = scmp.ne.s32.totalorder %s47, %s49
    %p56 = scmp.eq.s32.totalorder %s18, 1
    %p57 = por %p55, %p56
    %p58 = scmp.ne.s32.totalorder %s49, %s50
    %p59 = scmp.eq.s32.totalorder %s18, 0
    %p60 = por %p58, %p59
    %p61 = scmp.ne.s32.totalorder %s49, %s50
    %p62 = scmp.eq.s32.totalorder %s19, 1
    %p63 = por %p61, %p62
    %p65 = scmp.ne.s32.totalorder %s50, %s64
    %p66 = scmp.eq.s32.totalorder %s19, 0
    %p67 = por %p65, %p66
    %s69 = sadd.s32 %s68, 1
    %p72 = scmp.eq.s32.totalorder %s13, 1
    %p73 = scmp.ne.s32.totalorder %s68, %s70
    %p74 = scmp.eq.s32.totalorder %s13, 0
    %p75 = por %p73, %p74
    %p76 = scmp.ne.s32.totalorder %s68, %s70
    %p77 = scmp.eq.s32.totalorder %s18, 1
    %p78 = por %p76, %p77
    %p79 = scmp.ne.s32.totalorder %s70, %s71
    %p80 = scmp.eq.s32.totalorder %s18, 0
    %p81 = por %p79, %p80
    %p82 = scmp.ne.s32.totalorder %s70, %s71
    %p83 = scmp.eq.s32.totalorder %s19, 1
    %p84 = por %p82, %p83
    %p86 = scmp.ne.s32.totalorder %s71, %s85
    %p87 = scmp.eq.s32.totalorder %s19, 0
    %p88 = por %p86, %p87
    %s90 = sadd.s32 %s89, 1
    %p93 = scmp.eq.s32.totalorder %s13, 1
    %p94 = scmp.ne.s32.totalorder %s89, %s91
    %p95 = scmp.eq.s32.totalorder %s13, 0
    %p96 = por %p94, %p95
    %p97 = scmp.ne.s32.totalorder %s89, %s91
    %p98 = scmp.eq.s32.totalorder %s18, 1
    %p99 = por %p97, %p98
    %p100 = scmp.ne.s32.totalorder %s91, %s92
    %p101 = scmp.eq.s32.totalorder %s18, 0
    %p102 = por %p100, %p101
    %p103 = scmp.ne.s32.totalorder %s91, %s92
    %p104 = scmp.eq.s32.totalorder %s19, 1
    %p105 = por %p103, %p104
    %p107 = scmp.ne.s32.totalorder %s92, %s106
    %p108 = scmp.eq.s32.totalorder %s19, 0
    %p109 = por %p107, %p108
    %s111 = sadd.s32 %s110, 1
    %p114 = scmp.eq.s32.totalorder %s13, 1
    %p115 = scmp.ne.s32.totalorder %s110, %s112
    %p116 = scmp.eq.s32.totalorder %s13, 0
    %p117 = por %p115, %p116
    %p118 = scmp.ne.s32.totalorder %s110, %s112
    %p119 = scmp.eq.s32.totalorder %s18, 1
    %p120 = por %p118, %p119
    %p121 = scmp.ne.s32.totalorder %s112, %s113
    %p122 = scmp.eq.s32.totalorder %s18, 0
    %p123 = por %p121, %p122
    %p124 = scmp.ne.s32.totalorder %s112, %s113
    %p125 = scmp.eq.s32.totalorder %s19, 1
    %p126 = por %p124, %p125
    %p128 = scmp.ne.s32.totalorder %s113, %s127
    %p129 = scmp.eq.s32.totalorder %s19, 0
    %p130 = por %p128, %p129
    %s132 = sadd.s32 %s131, 1
    %p135 = scmp.eq.s32.totalorder %s13, 1
    %p136 = scmp.ne.s32.totalorder %s131, %s133
    %p137 = scmp.eq.s32.totalorder %s13, 0
    %p138 = por %p136, %p137
    %p139 = scmp.ne.s32.totalorder %s131, %s133
    %p140 = scmp.eq.s32.totalorder %s18, 1
    %p141 = por %p139, %p140
    %p142 = scmp.ne.s32.totalorder %s133, %s134
    %p143 = scmp.eq.s32.totalorder %s18, 0
    %p144 = por %p142, %p143
    %p145 = scmp.ne.s32.totalorder %s133, %s134
    %p146 = scmp.eq.s32.totalorder %s19, 1
    %p147 = por %p145, %p146
    %p149 = scmp.ne.s32.totalorder %s134, %s148
    %p150 = scmp.eq.s32.totalorder %s19, 0
    %p151 = por %p149, %p150
    %s153 = sadd.s32 %s152, 1
    %p156 = scmp.eq.s32.totalorder %s13, 1
    %p157 = scmp.ne.s32.totalorder %s152, %s154
    %p158 = scmp.eq.s32.totalorder %s13, 0
    %p159 = por %p157, %p158
    %p160 = scmp.ne.s32.totalorder %s152, %s154
    %p161 = scmp.eq.s32.totalorder %s18, 1
    %p162 = por %p160, %p161
    %p163 = scmp.ne.s32.totalorder %s154, %s155
    %p164 = scmp.eq.s32.totalorder %s18, 0
    %p165 = por %p163, %p164
    %p166 = scmp.ne.s32.totalorder %s154, %s155
    %p167 = scmp.eq.s32.totalorder %s19, 1
    %p168 = por %p166, %p167
    %p170 = scmp.ne.s32.totalorder %s155, %s169
    %p171 = scmp.eq.s32.totalorder %s19, 0
    %p172 = por %p170, %p171
    %s173 = ssub.s32 %s13, %s20
    %p174 = scmp.eq.s32.totalorder %s173, 0
    %s176 = sadd.s32 %s175, 1
    %s177 = scalar_select %p174, %s175, %s176
    %p180 = pneg %p174
    %p181 = scmp.eq.s32.totalorder %s13, 1
    %p182 = por %p180, %p181
    %p183 = scmp.ne.s32.totalorder %s175, %s178
    %p184 = scmp.eq.s32.totalorder %s13, 0
    %p185 = por %p183, %p184
    %p186 = scmp.ne.s32.totalorder %s175, %s178
    %p187 = scmp.eq.s32.totalorder %s18, 1
    %p188 = por %p186, %p187
    %p189 = scmp.ne.s32.totalorder %s178, %s179
    %p190 = scmp.eq.s32.totalorder %s18, 0
    %p191 = por %p189, %p190
    %p192 = scmp.ne.s32.totalorder %s178, %s179
    %p193 = scmp.eq.s32.totalorder %s19, 1
    %p194 = por %p192, %p193
    %p196 = scmp.ne.s32.totalorder %s179, %s195
    %p197 = scmp.eq.s32.totalorder %s19, 0
    %p198 = por %p196, %p197
    %p199 = scmp.le.s32.totalorder 1, %s13
    %p200 = scmp.lt.s32.totalorder %s13, 3
    %p201 = pnand %p199, %p200
    %p202 = pneg %p201
    // Predicated region
    $region9: #{espcn_forward.1} parent=5 // pred_check
      _
    $region10: #{espcn_forward.1} parent=5 // pred_check_branch
      %204 = sbr.rel (%p201) target = $region12
    $region11: #{espcn_forward.1} parent=5 // pred_region
      %s205 = ssub.s32 %s13, 1
      // Predicated region
      $region13: #{espcn_forward.1} parent=11 // pred_check
        %p206 = pneg %p60
      $region14: #{espcn_forward.1} parent=11 // pred_check_branch
        %208 = sbr.rel (%p206) target = $region16
      $region15: #{espcn_forward.1} parent=11 // pred_region
        _
      $region16: #{espcn_forward.1} parent=11 // pred_fallthru
        _
      // Predicated region
      $region17: #{espcn_forward.1} parent=11 // pred_check
        %p209 = pneg %p81
      $region18: #{espcn_forward.1} parent=11 // pred_check_branch
        %211 = sbr.rel (%p209) target = $region20
      $region19: #{espcn_forward.1} parent=11 // pred_region
        _
      $region20: #{espcn_forward.1} parent=11 // pred_fallthru
        _
      // Predicated region
      $region21: #{espcn_forward.1} parent=11 // pred_check
        %p212 = pneg %p102
      $region22: #{espcn_forward.1} parent=11 // pred_check_branch
        %214 = sbr.rel (%p212) target = $region24
      $region23: #{espcn_forward.1} parent=11 // pred_region
        _
      $region24: #{espcn_forward.1} parent=11 // pred_fallthru
        _
      // Predicated region
      $region25: #{espcn_forward.1} parent=11 // pred_check
        %p215 = pneg %p123
      $region26: #{espcn_forward.1} parent=11 // pred_check_branch
        %217 = sbr.rel (%p215) target = $region28
      $region27: #{espcn_forward.1} parent=11 // pred_region
        _
      $region28: #{espcn_forward.1} parent=11 // pred_fallthru
        _
      // Predicated region
      $region29: #{espcn_forward.1} parent=11 // pred_check
        %p218 = pneg %p144
      $region30: #{espcn_forward.1} parent=11 // pred_check_branch
        %220 = sbr.rel (%p218) target = $region32
      $region31: #{espcn_forward.1} parent=11 // pred_region
        _
      $region32: #{espcn_forward.1} parent=11 // pred_fallthru
        _
      // Predicated region
      $region33: #{espcn_forward.1} parent=11 // pred_check
        %p221 = pneg %p165
      $region34: #{espcn_forward.1} parent=11 // pred_check_branch
        %223 = sbr.rel (%p221) target = $region36
      $region35: #{espcn_forward.1} parent=11 // pred_region
        _
      $region36: #{espcn_forward.1} parent=11 // pred_fallthru
        _
    $region12: #{espcn_forward.1} parent=5 // pred_fallthru
      _
    %p224 = scmp.lt.s32.totalorder %s13, 2
    // Predicated region
    $region37: #{espcn_forward.1} parent=5 // pred_check
      %p225 = pneg %p224
    $region38: #{espcn_forward.1} parent=5 // pred_check_branch
      %227 = sbr.rel (%p225) target = $region40
    $region39: #{espcn_forward.1} parent=5 // pred_region
      // Predicated region
      $region41: #{espcn_forward.1} parent=39 // pred_check
        %p228 = pneg %p33
      $region42: #{espcn_forward.1} parent=39 // pred_check_branch
        %230 = sbr.rel (%p228) target = $region44
      $region43: #{espcn_forward.1} parent=39 // pred_region
        %p231 = scmp.lt.s32.totalorder %s13, 1
        %s232 = scalar_select %p231, %s13, 1
        %s233 = smul.addr %s232, 4
        %s234 = smul.addr %s233, 8
        %s235 = scalar_lea.vmem %s0, %s234
      $region44: #{espcn_forward.1} parent=39 // pred_fallthru
        _
    $region40: #{espcn_forward.1} parent=5 // pred_fallthru
      _
    %p236 = scmp.le.s32.totalorder 1, %s13
    %p237 = scmp.lt.s32.totalorder %s13, 3
    %p238 = pnand %p236, %p237
    %p239 = pneg %p238
    // Predicated region
    $region45: #{espcn_forward.1} parent=5 // pred_check
      _
    $region46: #{espcn_forward.1} parent=5 // pred_check_branch
      %241 = sbr.rel (%p238) target = $region48
    $region47: #{espcn_forward.1} parent=5 // pred_region
      %s242 = ssub.s32 %s13, 1
      %p243 = scmp.lt.s32.totalorder %s18, 1
      %s244 = scalar_select %p243, %s18, 1
      %s245 = smul.addr %s244, 4
      %s246 = smul.addr %s245, 8
      %s247 = scalar_lea.vmem %s0, %s246
      %p248 = pneg %p39
      %p249 = pneg %p36
      %p250 = pneg %p60
      %p251 = pneg %p57
      %p252 = pneg %p81
      %p253 = pneg %p78
      %p254 = pneg %p102
      %p255 = pneg %p99
      %p256 = pneg %p123
      %p257 = pneg %p120
      %p258 = pneg %p144
      %p259 = pneg %p141
      %p260 = pneg %p165
      %p261 = pneg %p162
      %p262 = pneg %p191
      %p263 = pneg %p188
      %p264 = scmp.lt.s32.totalorder %s18, 1
      %s265 = scalar_select %p264, %s18, 1
      %s266 = smul.addr %s265, 3
      %s267 = smul.addr %s266, 4
      %s268 = scalar_lea.vmem %s7, %s267
      %p269 = scmp.lt.s32.totalorder %s18, 1
      %s270 = scalar_select %p269, %s18, 1
      %s271 = smul.addr %s270, 4
      %s272 = smul.addr %s271, 8
      %s273 = scalar_lea.vmem %s0, %s272
      %p274 = scmp.lt.s32.totalorder %s18, 1
      %s275 = scalar_select %p274, %s18, 1
      %s276 = smul.addr %s275, 3
      %s277 = smul.addr %s276, 4
      %s278 = scalar_lea.vmem %s7, %s277
      %v279 = vlaneseq
      %v280 = vand.u32 %v279, 127
      %v281 = vadd.s32 %v280, 128
      %v282 = vadd.s32 %v280, 256
      %vm283 = vcmp.lt.s32.totalorder %v280, 0
      %v284 = vsub.s32 0, %v280
      %v285 = vsel %vm283, %v284, %v280
      %v286 = vmul.u32.u64.compose %v285, 2863311531
      %v287 = vextract.low.u32 %v286
      %v288 = vextract.high.u32 %v286
      %v289 = vshrl.u32 %v288, 4
      %v290 = vmul.u32 %v289, 24
      %v291 = vsub.s32 %v285, %v290
      %v292 = vsub.s32 0, %v291
      %v293 = vsel %vm283, %v292, %v291
      %vm294 = vcmp.lt.s32.totalorder %v281, 0
      %v295 = vsub.s32 0, %v281
      %v296 = vsel %vm294, %v295, %v281
      %v297 = vmul.u32.u64.compose %v296, 2863311531
      %v298 = vextract.low.u32 %v297
      %v299 = vextract.high.u32 %v297
      %v300 = vshrl.u32 %v299, 4
      %v301 = vmul.u32 %v300, 24
      %v302 = vsub.s32 %v296, %v301
      %v303 = vsub.s32 0, %v302
      %v304 = vsel %vm294, %v303, %v302
      %vm305 = vcmp.lt.s32.totalorder %v282, 0
      %v306 = vsub.s32 0, %v282
      %v307 = vsel %vm305, %v306, %v282
      %v308 = vmul.u32.u64.compose %v307, 2863311531
      %v309 = vextract.low.u32 %v308
      %v310 = vextract.high.u32 %v308
      %v311 = vshrl.u32 %v310, 4
      %v312 = vmul.u32 %v311, 24
      %v313 = vsub.s32 %v307, %v312
      %v314 = vsub.s32 0, %v313
      %v315 = vsel %vm305, %v314, %v313
      %vm316 = vcmp.ne.s32.totalorder %v293, 0
      %vm317 = vcmp.ne.s32.totalorder %v304, 0
      %vm318 = vcmp.ne.s32.totalorder %v315, 0
      %vm319 = vcmp.lt.s32.totalorder %v293, 0
      %vm320 = vcmp.lt.s32.totalorder %v304, 0
      %vm321 = vcmp.lt.s32.totalorder %v315, 0
      %vm322 = vmand %vm319, %vm316
      %vm323 = vmand %vm320, %vm317
      %vm324 = vmand %vm321, %vm318
      %v325 = vadd.s32 %v293, 24
      %v326 = vadd.s32 %v304, 24
      %v327 = vadd.s32 %v315, 24
      %v328 = vsel %vm322, %v325, %v293
      %v329 = vsel %vm323, %v326, %v304
      %v330 = vsel %vm324, %v327, %v315
      %vm331 = vcmp.lt.s32.totalorder %v328, 16
      %vm332 = vcmp.lt.s32.totalorder %v329, 16
      %vm333 = vcmp.lt.s32.totalorder %v330, 16
      %v334 = vsel %vm331, 1, 0
      %v335 = vsel %vm332, 1, 0
      %v336 = vsel %vm333, 1, 0
      %v337 = vcvt.s32.f32 %v334
      %v338 = vcvt.s32.f32 %v335
      %v339 = vcvt.s32.f32 %v336
      %vm340 = vcmask 408576
      %341 = vst.msk [vmem:[#allocation2] sm:$0xff] %vm340, 0.0
      %342 = vst.msk [vmem:[#allocation2 + $0x20] sm:$0xff] %vm340, 0.0
      %343 = vst.msk [vmem:[#allocation2 + $0x40] sm:$0xff] %vm340, 0.0
      %344 = vst.msk [vmem:[#allocation2 + $0x60] sm:$0xff] %vm340, 0.0
      %vm345 = vcmask 982416
      %346 = vst.msk [vmem:[#allocation2 + $0x18] sm:$0xff] %vm345, 0.0
      %347 = vst.msk [vmem:[#allocation2 + $0x38] sm:$0xff] %vm345, 0.0
      %348 = vst.msk [vmem:[#allocation2 + $0x58] sm:$0xff] %vm345, 0.0
      %349 = vst.msk [vmem:[#allocation2 + $0x78] sm:$0xff] %vm345, 0.0
      %350 = vst.msk [vmem:[#allocation3] sm:$0xff] %vm340, 0.0
      %351 = vst.msk [vmem:[#allocation3 + $0x20] sm:$0xff] %vm340, 0.0
      %352 = vst.msk [vmem:[#allocation3 + $0x18] sm:$0xff] %vm345, 0.0
      %353 = vst.msk [vmem:[#allocation3 + $0x38] sm:$0xff] %vm345, 0.0
      %v354 = vld [vmem:[%s273] sm:$0xff]
      %v355 = vld [vmem:[%s273 + $0x8] sm:$0xff]
      %v356 = vld [vmem:[%s273 + $0x10] sm:$0xff]
      %357 = vst [vmem:[#allocation4] sm:$0xff] %v354
      %358 = vst [vmem:[#allocation4 + $0x8] sm:$0xff] %v355
      %359 = vst [vmem:[#allocation4 + $0x10] sm:$0xff] %v356
      %v360 = vld [vmem:[%s273] sm:$0xff]
      %v361 = vld [vmem:[%s273 + $0x8] sm:$0xff]
      %v362 = vld [vmem:[%s273 + $0x10] sm:$0xff]
      %v363 = vld [vmem:[%s273 + $0x18] sm:$0xff]
      %368 = vrot.lane.b32.xlu0 %v360, 127
      %v369 = vpop.permute.xlu0 %368
      %370 = vrot.lane.b32.xlu0 %v361, 127
      %v371 = vpop.permute.xlu0 %370
      %372 = vrot.lane.b32.xlu0 %v362, 127
      %v373 = vpop.permute.xlu0 %372
      %374 = vrot.lane.b32.xlu0 %v363, 127
      %v375 = vpop.permute.xlu0 %374
      %vm376 = vcmask 1039360
      %v377 = vsel %vm376, %v369, %v371
      %v378 = vsel %vm376, %v371, %v373
      %v379 = vsel %vm376, %v373, %v375
      %383 = vst [vmem:[#allocation4 + $0x18] sm:$0xff] %v377
      %384 = vst [vmem:[#allocation4 + $0x20] sm:$0xff] %v378
      %385 = vst [vmem:[#allocation4 + $0x28] sm:$0xff] %v379
      %v386 = vld [vmem:[%s273] sm:$0xff]
      %v387 = vld [vmem:[%s273 + $0x8] sm:$0xff]
      %v388 = vld [vmem:[%s273 + $0x10] sm:$0xff]
      %v389 = vld [vmem:[%s273 + $0x18] sm:$0xff]
      %394 = vrot.lane.b32.xlu0 %v386, 126
      %v395 = vpop.permute.xlu0 %394
      %396 = vrot.lane.b32.xlu0 %v387, 126
      %v397 = vpop.permute.xlu0 %396
      %398 = vrot.lane.b32.xlu0 %v388, 126
      %v399 = vpop.permute.xlu0 %398
      %400 = vrot.lane.b32.xlu0 %v389, 126
      %v401 = vpop.permute.xlu0 %400
      %vm402 = vcmask 1031168
      %v403 = vsel %vm402, %v395, %v397
      %v404 = vsel %vm402, %v397, %v399
      %v405 = vsel %vm402, %v399, %v401
      %409 = vst [vmem:[#allocation4 + $0x30] sm:$0xff] %v403
      %410 = vst [vmem:[#allocation4 + $0x38] sm:$0xff] %v404
      %411 = vst [vmem:[#allocation4 + $0x40] sm:$0xff] %v405
      %v412 = vld [vmem:[%s273] sm:$0xff]
      %v413 = vld [vmem:[%s273 + $0x8] sm:$0xff]
      %v414 = vld [vmem:[%s273 + $0x10] sm:$0xff]
      %v415 = vld [vmem:[%s273 + $0x18] sm:$0xff]
      %420 = vrot.lane.b32.xlu0 %v412, 125
      %v421 = vpop.permute.xlu0 %420
      %422 = vrot.lane.b32.xlu0 %v413, 125
      %v423 = vpop.permute.xlu0 %422
      %424 = vrot.lane.b32.xlu0 %v414, 125
      %v425 = vpop.permute.xlu0 %424
      %426 = vrot.lane.b32.xlu0 %v415, 125
      %v427 = vpop.permute.xlu0 %426
      %vm428 = vcmask 1022976
      %v429 = vsel %vm428, %v421, %v423
      %v430 = vsel %vm428, %v423, %v425
      %v431 = vsel %vm428, %v425, %v427
      %435 = vst [vmem:[#allocation4 + $0x48] sm:$0xff] %v429
      %436 = vst [vmem:[#allocation4 + $0x50] sm:$0xff] %v430
      %437 = vst [vmem:[#allocation4 + $0x58] sm:$0xff] %v431
      %v438 = vld [vmem:[%s273] sm:$0xff]
      %v439 = vld [vmem:[%s273 + $0x8] sm:$0xff]
      %v440 = vld [vmem:[%s273 + $0x10] sm:$0xff]
      %v441 = vld [vmem:[%s273 + $0x18] sm:$0xff]
      %446 = vrot.lane.b32.xlu0 %v438, 124
      %v447 = vpop.permute.xlu0 %446
      %448 = vrot.lane.b32.xlu0 %v439, 124
      %v449 = vpop.permute.xlu0 %448
      %450 = vrot.lane.b32.xlu0 %v440, 124
      %v451 = vpop.permute.xlu0 %450
      %452 = vrot.lane.b32.xlu0 %v441, 124
      %v453 = vpop.permute.xlu0 %452
      %vm454 = vcmask 1014784
      %v455 = vsel %vm454, %v447, %v449
      %v456 = vsel %vm454, %v449, %v451
      %v457 = vsel %vm454, %v451, %v453
      %461 = vst [vmem:[#allocation4 + $0x60] sm:$0xff] %v455
      %462 = vst [vmem:[#allocation4 + $0x68] sm:$0xff] %v456
      %463 = vst [vmem:[#allocation4 + $0x70] sm:$0xff] %v457
      %v464 = vld [vmem:[%s273] sm:$0xff]
      %v465 = vld [vmem:[%s273 + $0x8] sm:$0xff]
      %v466 = vld [vmem:[%s273 + $0x10] sm:$0xff]
      %v467 = vld [vmem:[%s273 + $0x18] sm:$0xff]
      %472 = vrot.lane.b32.xlu0 %v464, 104
      %v473 = vpop.permute.xlu0 %472
      %474 = vrot.lane.b32.xlu0 %v465, 104
      %v475 = vpop.permute.xlu0 %474
      %476 = vrot.lane.b32.xlu0 %v466, 104
      %v477 = vpop.permute.xlu0 %476
      %478 = vrot.lane.b32.xlu0 %v467, 104
      %v479 = vpop.permute.xlu0 %478
      %vm480 = vcmask 850944
      %v481 = vsel %vm480, %v473, %v475
      %v482 = vsel %vm480, %v475, %v477
      %v483 = vsel %vm480, %v477, %v479
      %487 = vst [vmem:[#allocation4 + $0x78] sm:$0xff] %v481
      %488 = vst [vmem:[#allocation4 + $0x80] sm:$0xff] %v482
      %489 = vst [vmem:[#allocation4 + $0x88] sm:$0xff] %v483
      %v490 = vld [vmem:[%s273] sm:$0xff]
      %v491 = vld [vmem:[%s273 + $0x8] sm:$0xff]
      %v492 = vld [vmem:[%s273 + $0x10] sm:$0xff]
      %v493 = vld [vmem:[%s273 + $0x18] sm:$0xff]
      %498 = vrot.lane.b32.xlu0 %v490, 103
      %v499 = vpop.permute.xlu0 %498
      %500 = vrot.lane.b32.xlu0 %v491, 103
      %v501 = vpop.permute.xlu0 %500
      %502 = vrot.lane.b32.xlu0 %v492, 103
      %v503 = vpop.permute.xlu0 %502
      %504 = vrot.lane.b32.xlu0 %v493, 103
      %v505 = vpop.permute.xlu0 %504
      %vm506 = vcmask 842752
      %v507 = vsel %vm506, %v499, %v501
      %v508 = vsel %vm506, %v501, %v503
      %v509 = vsel %vm506, %v503, %v505
      %513 = vst [vmem:[#allocation4 + $0x90] sm:$0xff] %v507
      %514 = vst [vmem:[#allocation4 + $0x98] sm:$0xff] %v508
      %515 = vst [vmem:[#allocation4 + $0xa0] sm:$0xff] %v509
      %v516 = vld [vmem:[%s273] sm:$0xff]
      %v517 = vld [vmem:[%s273 + $0x8] sm:$0xff]
      %v518 = vld [vmem:[%s273 + $0x10] sm:$0xff]
      %v519 = vld [vmem:[%s273 + $0x18] sm:$0xff]
      %524 = vrot.lane.b32.xlu0 %v516, 102
      %v525 = vpop.permute.xlu0 %524
      %526 = vrot.lane.b32.xlu0 %v517, 102
      %v527 = vpop.permute.xlu0 %526
      %528 = vrot.lane.b32.xlu0 %v518, 102
      %v529 = vpop.permute.xlu0 %528
      %530 = vrot.lane.b32.xlu0 %v519, 102
      %v531 = vpop.permute.xlu0 %530
      %vm532 = vcmask 834560
      %v533 = vsel %vm532, %v525, %v527
      %v534 = vsel %vm532, %v527, %v529
      %v535 = vsel %vm532, %v529, %v531
      %539 = vst [vmem:[#allocation4 + $0xa8] sm:$0xff] %v533
      %540 = vst [vmem:[#allocation4 + $0xb0] sm:$0xff] %v534
      %541 = vst [vmem:[#allocation4 + $0xb8] sm:$0xff] %v535
      %v542 = vld [vmem:[%s273] sm:$0xff]
      %v543 = vld [vmem:[%s273 + $0x8] sm:$0xff]
      %v544 = vld [vmem:[%s273 + $0x10] sm:$0xff]
      %v545 = vld [vmem:[%s273 + $0x18] sm:$0xff]
      %550 = vrot.lane.b32.xlu0 %v542, 101
      %v551 = vpop.permute.xlu0 %550
      %552 = vrot.lane.b32.xlu0 %v543, 101
      %v553 = vpop.permute.xlu0 %552
      %554 = vrot.lane.b32.xlu0 %v544, 101
      %v555 = vpop.permute.xlu0 %554
      %556 = vrot.lane.b32.xlu0 %v545, 101
      %v557 = vpop.permute.xlu0 %556
      %vm558 = vcmask 826368
      %v559 = vsel %vm558, %v551, %v553
      %v560 = vsel %vm558, %v553, %v555
      %v561 = vsel %vm558, %v555, %v557
      %565 = vst [vmem:[#allocation4 + $0xc0] sm:$0xff] %v559
      %566 = vst [vmem:[#allocation4 + $0xc8] sm:$0xff] %v560
      %567 = vst [vmem:[#allocation4 + $0xd0] sm:$0xff] %v561
      %v568 = vld [vmem:[%s273] sm:$0xff]
      %v569 = vld [vmem:[%s273 + $0x8] sm:$0xff]
      %v570 = vld [vmem:[%s273 + $0x10] sm:$0xff]
      %v571 = vld [vmem:[%s273 + $0x18] sm:$0xff]
      %576 = vrot.lane.b32.xlu0 %v568, 100
      %v577 = vpop.permute.xlu0 %576
      %578 = vrot.lane.b32.xlu0 %v569, 100
      %v579 = vpop.permute.xlu0 %578
      %580 = vrot.lane.b32.xlu0 %v570, 100
      %v581 = vpop.permute.xlu0 %580
      %582 = vrot.lane.b32.xlu0 %v571, 100
      %v583 = vpop.permute.xlu0 %582
      %vm584 = vcmask 818176
      %v585 = vsel %vm584, %v577, %v579
      %v586 = vsel %vm584, %v579, %v581
      %v587 = vsel %vm584, %v581, %v583
      %591 = vst [vmem:[#allocation4 + $0xd8] sm:$0xff] %v585
      %592 = vst [vmem:[#allocation4 + $0xe0] sm:$0xff] %v586
      %593 = vst [vmem:[#allocation4 + $0xe8] sm:$0xff] %v587
      %v594 = vld [vmem:[%s273] sm:$0xff]
      %v595 = vld [vmem:[%s273 + $0x8] sm:$0xff]
      %v596 = vld [vmem:[%s273 + $0x10] sm:$0xff]
      %v597 = vld [vmem:[%s273 + $0x18] sm:$0xff]
      %602 = vrot.lane.b32.xlu0 %v594, 80
      %v603 = vpop.permute.xlu0 %602
      %604 = vrot.lane.b32.xlu0 %v595, 80
      %v605 = vpop.permute.xlu0 %604
      %606 = vrot.lane.b32.xlu0 %v596, 80
      %v607 = vpop.permute.xlu0 %606
      %608 = vrot.lane.b32.xlu0 %v597, 80
      %v609 = vpop.permute.xlu0 %608
      %vm610 = vcmask 654336
      %v611 = vsel %vm610, %v603, %v605
      %v612 = vsel %vm610, %v605, %v607
      %v613 = vsel %vm610, %v607, %v609
      %617 = vst [vmem:[#allocation4 + $0xf0] sm:$0xff] %v611
      %618 = vst [vmem:[#allocation4 + $0xf8] sm:$0xff] %v612
      %619 = vst [vmem:[#allocation4 + $0x100] sm:$0xff] %v613
      %v620 = vld [vmem:[%s273] sm:$0xff]
      %v621 = vld [vmem:[%s273 + $0x8] sm:$0xff]
      %v622 = vld [vmem:[%s273 + $0x10] sm:$0xff]
      %v623 = vld [vmem:[%s273 + $0x18] sm:$0xff]
      %628 = vrot.lane.b32.xlu0 %v620, 79
      %v629 = vpop.permute.xlu0 %628
      %630 = vrot.lane.b32.xlu0 %v621, 79
      %v631 = vpop.permute.xlu0 %630
      %632 = vrot.lane.b32.xlu0 %v622, 79
      %v633 = vpop.permute.xlu0 %632
      %634 = vrot.lane.b32.xlu0 %v623, 79
      %v635 = vpop.permute.xlu0 %634
      %vm636 = vcmask 646144
      %v637 = vsel %vm636, %v629, %v631
      %v638 = vsel %vm636, %v631, %v633
      %v639 = vsel %vm636, %v633, %v635
      %643 = vst [vmem:[#allocation4 + $0x108] sm:$0xff] %v637
      %644 = vst [vmem:[#allocation4 + $0x110] sm:$0xff] %v638
      %645 = vst [vmem:[#allocation4 + $0x118] sm:$0xff] %v639
      %v646 = vld [vmem:[%s273] sm:$0xff]
      %v647 = vld [vmem:[%s273 + $0x8] sm:$0xff]
      %v648 = vld [vmem:[%s273 + $0x10] sm:$0xff]
      %v649 = vld [vmem:[%s273 + $0x18] sm:$0xff]
      %654 = vrot.lane.b32.xlu0 %v646, 78
      %v655 = vpop.permute.xlu0 %654
      %656 = vrot.lane.b32.xlu0 %v647, 78
      %v657 = vpop.permute.xlu0 %656
      %658 = vrot.lane.b32.xlu0 %v648, 78
      %v659 = vpop.permute.xlu0 %658
      %660 = vrot.lane.b32.xlu0 %v649, 78
      %v661 = vpop.permute.xlu0 %660
      %vm662 = vcmask 637952
      %v663 = vsel %vm662, %v655, %v657
      %v664 = vsel %vm662, %v657, %v659
      %v665 = vsel %vm662, %v659, %v661
      %669 = vst [vmem:[#allocation4 + $0x120] sm:$0xff] %v663
      %670 = vst [vmem:[#allocation4 + $0x128] sm:$0xff] %v664
      %671 = vst [vmem:[#allocation4 + $0x130] sm:$0xff] %v665
      %v672 = vld [vmem:[%s273] sm:$0xff]
      %v673 = vld [vmem:[%s273 + $0x8] sm:$0xff]
      %v674 = vld [vmem:[%s273 + $0x10] sm:$0xff]
      %v675 = vld [vmem:[%s273 + $0x18] sm:$0xff]
      %680 = vrot.lane.b32.xlu0 %v672, 77
      %v681 = vpop.permute.xlu0 %680
      %682 = vrot.lane.b32.xlu0 %v673, 77
      %v683 = vpop.permute.xlu0 %682
      %684 = vrot.lane.b32.xlu0 %v674, 77
      %v685 = vpop.permute.xlu0 %684
      %686 = vrot.lane.b32.xlu0 %v675, 77
      %v687 = vpop.permute.xlu0 %686
      %vm688 = vcmask 629760
      %v689 = vsel %vm688, %v681, %v683
      %v690 = vsel %vm688, %v683, %v685
      %v691 = vsel %vm688, %v685, %v687
      %695 = vst [vmem:[#allocation4 + $0x138] sm:$0xff] %v689
      %696 = vst [vmem:[#allocation4 + $0x140] sm:$0xff] %v690
      %697 = vst [vmem:[#allocation4 + $0x148] sm:$0xff] %v691
      %v698 = vld [vmem:[%s273] sm:$0xff]
      %v699 = vld [vmem:[%s273 + $0x8] sm:$0xff]
      %v700 = vld [vmem:[%s273 + $0x10] sm:$0xff]
      %v701 = vld [vmem:[%s273 + $0x18] sm:$0xff]
      %706 = vrot.lane.b32.xlu0 %v698, 76
      %v707 = vpop.permute.xlu0 %706
      %708 = vrot.lane.b32.xlu0 %v699, 76
      %v709 = vpop.permute.xlu0 %708
      %710 = vrot.lane.b32.xlu0 %v700, 76
      %v711 = vpop.permute.xlu0 %710
      %712 = vrot.lane.b32.xlu0 %v701, 76
      %v713 = vpop.permute.xlu0 %712
      %vm714 = vcmask 621568
      %v715 = vsel %vm714, %v707, %v709
      %v716 = vsel %vm714, %v709, %v711
      %v717 = vsel %vm714, %v711, %v713
      %721 = vst [vmem:[#allocation4 + $0x150] sm:$0xff] %v715
      %722 = vst [vmem:[#allocation4 + $0x158] sm:$0xff] %v716
      %723 = vst [vmem:[#allocation4 + $0x160] sm:$0xff] %v717
      %v724 = vld [vmem:[%s273] sm:$0xff]
      %v725 = vld [vmem:[%s273 + $0x8] sm:$0xff]
      %v726 = vld [vmem:[%s273 + $0x10] sm:$0xff]
      %v727 = vld [vmem:[%s273 + $0x18] sm:$0xff]
      %732 = vrot.lane.b32.xlu0 %v724, 56
      %v733 = vpop.permute.xlu0 %732
      %734 = vrot.lane.b32.xlu0 %v725, 56
      %v735 = vpop.permute.xlu0 %734
      %736 = vrot.lane.b32.xlu0 %v726, 56
      %v737 = vpop.permute.xlu0 %736
      %738 = vrot.lane.b32.xlu0 %v727, 56
      %v739 = vpop.permute.xlu0 %738
      %vm740 = vcmask 457728
      %v741 = vsel %vm740, %v733, %v735
      %v742 = vsel %vm740, %v735, %v737
      %v743 = vsel %vm740, %v737, %v739
      %747 = vst [vmem:[#allocation4 + $0x168] sm:$0xff] %v741
      %748 = vst [vmem:[#allocation4 + $0x170] sm:$0xff] %v742
      %749 = vst [vmem:[#allocation4 + $0x178] sm:$0xff] %v743
      %v750 = vld [vmem:[%s273] sm:$0xff]
      %v751 = vld [vmem:[%s273 + $0x8] sm:$0xff]
      %v752 = vld [vmem:[%s273 + $0x10] sm:$0xff]
      %v753 = vld [vmem:[%s273 + $0x18] sm:$0xff]
      %758 = vrot.lane.b32.xlu0 %v750, 55
      %v759 = vpop.permute.xlu0 %758
      %760 = vrot.lane.b32.xlu0 %v751, 55
      %v761 = vpop.permute.xlu0 %760
      %762 = vrot.lane.b32.xlu0 %v752, 55
      %v763 = vpop.permute.xlu0 %762
      %764 = vrot.lane.b32.xlu0 %v753, 55
      %v765 = vpop.permute.xlu0 %764
      %vm766 = vcmask 449536
      %v767 = vsel %vm766, %v759, %v761
      %v768 = vsel %vm766, %v761, %v763
      %v769 = vsel %vm766, %v763, %v765
      %773 = vst [vmem:[#allocation4 + $0x180] sm:$0xff] %v767
      %774 = vst [vmem:[#allocation4 + $0x188] sm:$0xff] %v768
      %775 = vst [vmem:[#allocation4 + $0x190] sm:$0xff] %v769
      %v776 = vld [vmem:[%s273] sm:$0xff]
      %v777 = vld [vmem:[%s273 + $0x8] sm:$0xff]
      %v778 = vld [vmem:[%s273 + $0x10] sm:$0xff]
      %v779 = vld [vmem:[%s273 + $0x18] sm:$0xff]
      %784 = vrot.lane.b32.xlu0 %v776, 54
      %v785 = vpop.permute.xlu0 %784
      %786 = vrot.lane.b32.xlu0 %v777, 54
      %v787 = vpop.permute.xlu0 %786
      %788 = vrot.lane.b32.xlu0 %v778, 54
      %v789 = vpop.permute.xlu0 %788
      %790 = vrot.lane.b32.xlu0 %v779, 54
      %v791 = vpop.permute.xlu0 %790
      %vm792 = vcmask 441344
      %v793 = vsel %vm792, %v785, %v787
      %v794 = vsel %vm792, %v787, %v789
      %v795 = vsel %vm792, %v789, %v791
      %799 = vst [vmem:[#allocation4 + $0x198] sm:$0xff] %v793
      %800 = vst [vmem:[#allocation4 + $0x1a0] sm:$0xff] %v794
      %801 = vst [vmem:[#allocation4 + $0x1a8] sm:$0xff] %v795
      %v802 = vld [vmem:[%s273] sm:$0xff]
      %v803 = vld [vmem:[%s273 + $0x8] sm:$0xff]
      %v804 = vld [vmem:[%s273 + $0x10] sm:$0xff]
      %v805 = vld [vmem:[%s273 + $0x18] sm:$0xff]
      %810 = vrot.lane.b32.xlu0 %v802, 53
      %v811 = vpop.permute.xlu0 %810
      %812 = vrot.lane.b32.xlu0 %v803, 53
      %v813 = vpop.permute.xlu0 %812
      %814 = vrot.lane.b32.xlu0 %v804, 53
      %v815 = vpop.permute.xlu0 %814
      %816 = vrot.lane.b32.xlu0 %v805, 53
      %v817 = vpop.permute.xlu0 %816
      %vm818 = vcmask 433152
      %v819 = vsel %vm818, %v811, %v813
      %v820 = vsel %vm818, %v813, %v815
      %v821 = vsel %vm818, %v815, %v817
      %825 = vst [vmem:[#allocation4 + $0x1b0] sm:$0xff] %v819
      %826 = vst [vmem:[#allocation4 + $0x1b8] sm:$0xff] %v820
      %827 = vst [vmem:[#allocation4 + $0x1c0] sm:$0xff] %v821
      %v828 = vld [vmem:[%s273] sm:$0xff]
      %v829 = vld [vmem:[%s273 + $0x8] sm:$0xff]
      %v830 = vld [vmem:[%s273 + $0x10] sm:$0xff]
      %v831 = vld [vmem:[%s273 + $0x18] sm:$0xff]
      %836 = vrot.lane.b32.xlu0 %v828, 52
      %v837 = vpop.permute.xlu0 %836
      %838 = vrot.lane.b32.xlu0 %v829, 52
      %v839 = vpop.permute.xlu0 %838
      %840 = vrot.lane.b32.xlu0 %v830, 52
      %v841 = vpop.permute.xlu0 %840
      %842 = vrot.lane.b32.xlu0 %v831, 52
      %v843 = vpop.permute.xlu0 %842
      %vm844 = vcmask 424960
      %v845 = vsel %vm844, %v837, %v839
      %v846 = vsel %vm844, %v839, %v841
      %v847 = vsel %vm844, %v841, %v843
      %851 = vst [vmem:[#allocation4 + $0x1c8] sm:$0xff] %v845
      %852 = vst [vmem:[#allocation4 + $0x1d0] sm:$0xff] %v846
      %853 = vst [vmem:[#allocation4 + $0x1d8] sm:$0xff] %v847
      %v854 = vld [vmem:[%s273] sm:$0xff]
      %v855 = vld [vmem:[%s273 + $0x8] sm:$0xff]
      %v856 = vld [vmem:[%s273 + $0x10] sm:$0xff]
      %v857 = vld [vmem:[%s273 + $0x18] sm:$0xff]
      %862 = vrot.lane.b32.xlu0 %v854, 32
      %v863 = vpop.permute.xlu0 %862
      %864 = vrot.lane.b32.xlu0 %v855, 32
      %v865 = vpop.permute.xlu0 %864
      %866 = vrot.lane.b32.xlu0 %v856, 32
      %v867 = vpop.permute.xlu0 %866
      %868 = vrot.lane.b32.xlu0 %v857, 32
      %v869 = vpop.permute.xlu0 %868
      %vm870 = vcmask 261120
      %v871 = vsel %vm870, %v863, %v865
      %v872 = vsel %vm870, %v865, %v867
      %v873 = vsel %vm870, %v867, %v869
      %877 = vst [vmem:[#allocation4 + $0x1e0] sm:$0xff] %v871
      %878 = vst [vmem:[#allocation4 + $0x1e8] sm:$0xff] %v872
      %879 = vst [vmem:[#allocation4 + $0x1f0] sm:$0xff] %v873
      %v880 = vld [vmem:[%s273] sm:$0xff]
      %v881 = vld [vmem:[%s273 + $0x8] sm:$0xff]
      %v882 = vld [vmem:[%s273 + $0x10] sm:$0xff]
      %v883 = vld [vmem:[%s273 + $0x18] sm:$0xff]
      %888 = vrot.lane.b32.xlu0 %v880, 31
      %v889 = vpop.permute.xlu0 %888
      %890 = vrot.lane.b32.xlu0 %v881, 31
      %v891 = vpop.permute.xlu0 %890
      %892 = vrot.lane.b32.xlu0 %v882, 31
      %v893 = vpop.permute.xlu0 %892
      %894 = vrot.lane.b32.xlu0 %v883, 31
      %v895 = vpop.permute.xlu0 %894
      %vm896 = vcmask 252928
      %v897 = vsel %vm896, %v889, %v891
      %v898 = vsel %vm896, %v891, %v893
      %v899 = vsel %vm896, %v893, %v895
      %903 = vst [vmem:[#allocation4 + $0x1f8] sm:$0xff] %v897
      %904 = vst [vmem:[#allocation4 + $0x200] sm:$0xff] %v898
      %905 = vst [vmem:[#allocation4 + $0x208] sm:$0xff] %v899
      %v906 = vld [vmem:[%s273] sm:$0xff]
      %v907 = vld [vmem:[%s273 + $0x8] sm:$0xff]
      %v908 = vld [vmem:[%s273 + $0x10] sm:$0xff]
      %v909 = vld [vmem:[%s273 + $0x18] sm:$0xff]
      %914 = vrot.lane.b32.xlu0 %v906, 30
      %v915 = vpop.permute.xlu0 %914
      %916 = vrot.lane.b32.xlu0 %v907, 30
      %v917 = vpop.permute.xlu0 %916
      %918 = vrot.lane.b32.xlu0 %v908, 30
      %v919 = vpop.permute.xlu0 %918
      %920 = vrot.lane.b32.xlu0 %v909, 30
      %v921 = vpop.permute.xlu0 %920
      %vm922 = vcmask 244736
      %v923 = vsel %vm922, %v915, %v917
      %v924 = vsel %vm922, %v917, %v919
      %v925 = vsel %vm922, %v919, %v921
      %929 = vst [vmem:[#allocation4 + $0x210] sm:$0xff] %v923
      %930 = vst [vmem:[#allocation4 + $0x218] sm:$0xff] %v924
      %931 = vst [vmem:[#allocation4 + $0x220] sm:$0xff] %v925
      %v932 = vld [vmem:[%s273] sm:$0xff]
      %v933 = vld [vmem:[%s273 + $0x8] sm:$0xff]
      %v934 = vld [vmem:[%s273 + $0x10] sm:$0xff]
      %v935 = vld [vmem:[%s273 + $0x18] sm:$0xff]
      %940 = vrot.lane.b32.xlu0 %v932, 29
      %v941 = vpop.permute.xlu0 %940
      %942 = vrot.lane.b32.xlu0 %v933, 29
      %v943 = vpop.permute.xlu0 %942
      %944 = vrot.lane.b32.xlu0 %v934, 29
      %v945 = vpop.permute.xlu0 %944
      %946 = vrot.lane.b32.xlu0 %v935, 29
      %v947 = vpop.permute.xlu0 %946
      %vm948 = vcmask 236544
      %v949 = vsel %vm948, %v941, %v943
      %v950 = vsel %vm948, %v943, %v945
      %v951 = vsel %vm948, %v945, %v947
      %955 = vst [vmem:[#allocation4 + $0x228] sm:$0xff] %v949
      %956 = vst [vmem:[#allocation4 + $0x230] sm:$0xff] %v950
      %957 = vst [vmem:[#allocation4 + $0x238] sm:$0xff] %v951
      %v958 = vld [vmem:[%s273] sm:$0xff]
      %v959 = vld [vmem:[%s273 + $0x8] sm:$0xff]
      %v960 = vld [vmem:[%s273 + $0x10] sm:$0xff]
      %v961 = vld [vmem:[%s273 + $0x18] sm:$0xff]
      %966 = vrot.lane.b32.xlu0 %v958, 28
      %v967 = vpop.permute.xlu0 %966
      %968 = vrot.lane.b32.xlu0 %v959, 28
      %v969 = vpop.permute.xlu0 %968
      %970 = vrot.lane.b32.xlu0 %v960, 28
      %v971 = vpop.permute.xlu0 %970
      %972 = vrot.lane.b32.xlu0 %v961, 28
      %v973 = vpop.permute.xlu0 %972
      %vm974 = vcmask 228352
      %v975 = vsel %vm974, %v967, %v969
      %v976 = vsel %vm974, %v969, %v971
      %v977 = vsel %vm974, %v971, %v973
      %981 = vst [vmem:[#allocation4 + $0x240] sm:$0xff] %v975
      %982 = vst [vmem:[#allocation4 + $0x248] sm:$0xff] %v976
      %983 = vst [vmem:[#allocation4 + $0x250] sm:$0xff] %v977
      %v984 = vld [vmem:[%s1] sm:$0xff]
      %v985 = vld [vmem:[%s1 + $0x8] sm:$0xff]
      %v986 = vld [vmem:[%s1 + $0x10] sm:$0xff]
      %v987 = vld [vmem:[%s1 + $0x18] sm:$0xff]
      %v988 = vld [vmem:[%s1 + $0x20] sm:$0xff]
      %v989 = vld [vmem:[%s1 + $0x28] sm:$0xff]
      %v990 = vld [vmem:[%s1 + $0x30] sm:$0xff]
      %v991 = vld [vmem:[%s1 + $0x38] sm:$0xff]
      %v992 = vld [vmem:[#allocation4] sm:$0xff]
      %v993 = vld [vmem:[#allocation4 + $0x8] sm:$0xff]
      %v994 = vld [vmem:[#allocation4 + $0x10] sm:$0xff]
      %v995 = vld [vmem:[#allocation4 + $0x18] sm:$0xff]
      %v996 = vld [vmem:[#allocation4 + $0x20] sm:$0xff]
      %v997 = vld [vmem:[#allocation4 + $0x28] sm:$0xff]
      %v998 = vld [vmem:[#allocation4 + $0x30] sm:$0xff]
      %v999 = vld [vmem:[#allocation4 + $0x38] sm:$0xff]
      %v1000 = vld [vmem:[#allocation4 + $0x40] sm:$0xff]
      %v1001 = vld [vmem:[#allocation4 + $0x48] sm:$0xff]
      %v1002 = vld [vmem:[#allocation4 + $0x50] sm:$0xff]
      %v1003 = vld [vmem:[#allocation4 + $0x58] sm:$0xff]
      %v1004 = vld [vmem:[#allocation4 + $0x60] sm:$0xff]
      %v1005 = vld [vmem:[#allocation4 + $0x68] sm:$0xff]
      %v1006 = vld [vmem:[#allocation4 + $0x70] sm:$0xff]
      %v1007 = vld [vmem:[#allocation4 + $0x78] sm:$0xff]
      %v1008 = vld [vmem:[#allocation4 + $0x80] sm:$0xff]
      %v1009 = vld [vmem:[#allocation4 + $0x88] sm:$0xff]
      %v1010 = vld [vmem:[#allocation4 + $0x90] sm:$0xff]
      %v1011 = vld [vmem:[#allocation4 + $0x98] sm:$0xff]
      %v1012 = vld [vmem:[#allocation4 + $0xa0] sm:$0xff]
      %v1013 = vld [vmem:[#allocation4 + $0xa8] sm:$0xff]
      %v1014 = vld [vmem:[#allocation4 + $0xb0] sm:$0xff]
      %v1015 = vld [vmem:[#allocation4 + $0xb8] sm:$0xff]
      %v1016 = vld [vmem:[#allocation4 + $0xc0] sm:$0xff]
      %v1017 = vld [vmem:[#allocation4 + $0xc8] sm:$0xff]
      %v1018 = vld [vmem:[#allocation4 + $0xd0] sm:$0xff]
      %v1019 = vld [vmem:[#allocation4 + $0xd8] sm:$0xff]
      %v1020 = vld [vmem:[#allocation4 + $0xe0] sm:$0xff]
      %v1021 = vld [vmem:[#allocation4 + $0xe8] sm:$0xff]
      %v1022 = vld [vmem:[#allocation4 + $0xf0] sm:$0xff]
      %v1023 = vld [vmem:[#allocation4 + $0xf8] sm:$0xff]
      %v1024 = vld [vmem:[#allocation4 + $0x100] sm:$0xff]
      %v1025 = vld [vmem:[#allocation4 + $0x108] sm:$0xff]
      %v1026 = vld [vmem:[#allocation4 + $0x110] sm:$0xff]
      %v1027 = vld [vmem:[#allocation4 + $0x118] sm:$0xff]
      %v1028 = vld [vmem:[#allocation4 + $0x120] sm:$0xff]
      %v1029 = vld [vmem:[#allocation4 + $0x128] sm:$0xff]
      %v1030 = vld [vmem:[#allocation4 + $0x130] sm:$0xff]
      %v1031 = vld [vmem:[#allocation4 + $0x138] sm:$0xff]
      %v1032 = vld [vmem:[#allocation4 + $0x140] sm:$0xff]
      %v1033 = vld [vmem:[#allocation4 + $0x148] sm:$0xff]
      %v1034 = vld [vmem:[#allocation4 + $0x150] sm:$0xff]
      %v1035 = vld [vmem:[#allocation4 + $0x158] sm:$0xff]
      %v1036 = vld [vmem:[#allocation4 + $0x160] sm:$0xff]
      %v1037 = vld [vmem:[#allocation4 + $0x168] sm:$0xff]
      %v1038 = vld [vmem:[#allocation4 + $0x170] sm:$0xff]
      %v1039 = vld [vmem:[#allocation4 + $0x178] sm:$0xff]
      %v1040 = vld [vmem:[#allocation4 + $0x180] sm:$0xff]
      %v1041 = vld [vmem:[#allocation4 + $0x188] sm:$0xff]
      %v1042 = vld [vmem:[#allocation4 + $0x190] sm:$0xff]
      %v1043 = vld [vmem:[#allocation4 + $0x198] sm:$0xff]
      %v1044 = vld [vmem:[#allocation4 + $0x1a0] sm:$0xff]
      %v1045 = vld [vmem:[#allocation4 + $0x1a8] sm:$0xff]
      %v1046 = vld [vmem:[#allocation4 + $0x1b0] sm:$0xff]
      %v1047 = vld [vmem:[#allocation4 + $0x1b8] sm:$0xff]
      %v1048 = vld [vmem:[#allocation4 + $0x1c0] sm:$0xff]
      %v1049 = vld [vmem:[#allocation4 + $0x1c8] sm:$0xff]
      %v1050 = vld [vmem:[#allocation4 + $0x1d0] sm:$0xff]
      %v1051 = vld [vmem:[#allocation4 + $0x1d8] sm:$0xff]
      %v1052 = vld [vmem:[#allocation4 + $0x1e0] sm:$0xff]
      %v1053 = vld [vmem:[#allocation4 + $0x1e8] sm:$0xff]
      %v1054 = vld [vmem:[#allocation4 + $0x1f0] sm:$0xff]
      %v1055 = vld [vmem:[#allocation4 + $0x1f8] sm:$0xff]
      %v1056 = vld [vmem:[#allocation4 + $0x200] sm:$0xff]
      %v1057 = vld [vmem:[#allocation4 + $0x208] sm:$0xff]
      %v1058 = vld [vmem:[#allocation4 + $0x210] sm:$0xff]
      %v1059 = vld [vmem:[#allocation4 + $0x218] sm:$0xff]
      %v1060 = vld [vmem:[#allocation4 + $0x220] sm:$0xff]
      %v1061 = vld [vmem:[#allocation4 + $0x228] sm:$0xff]
      %v1062 = vld [vmem:[#allocation4 + $0x230] sm:$0xff]
      %v1063 = vld [vmem:[#allocation4 + $0x238] sm:$0xff]
      %v1064 = vld [vmem:[#allocation4 + $0x240] sm:$0xff]
      %v1065 = vld [vmem:[#allocation4 + $0x248] sm:$0xff]
      %v1066 = vld [vmem:[#allocation4 + $0x250] sm:$0xff]
      %v1067 = vld [vmem:[%s2] sm:$0xff]
      %v1068 = vld [vmem:[%s2 + $0x8] sm:$0xff]
      %v1069 = vld [vmem:[%s2 + $0x10] sm:$0xff]
      %v1070 = vld [vmem:[%s2 + $0x18] sm:$0xff]
      %1072 = vset.pattern.permute.xlu0 0
      %1073 = vperm.xlu0 %1072, %v1067
      %v1074 = vpop.permute.xlu0 %1073
      %1077 = vset.pattern.permute.xlu0 0
      %1078 = vperm.xlu0 %1077, %v1068
      %v1079 = vpop.permute.xlu0 %1078
      %1082 = vset.pattern.permute.xlu0 0
      %1083 = vperm.xlu0 %1082, %v1069
      %v1084 = vpop.permute.xlu0 %1083
      %1087 = vset.pattern.permute.xlu0 0
      %1088 = vperm.xlu0 %1087, %v1070
      %v1089 = vpop.permute.xlu0 %1088
      %vm1091 = vcmask 588800
      %v1093 = vsel %vm1091, %v985, 0
      %v1096 = vsel %vm1091, %v987, 0
      %v1099 = vsel %vm1091, %v989, 0
      %v1102 = vsel %vm1091, %v991, 0
      %1104 = vmatprep.subr.mxu0 %v993
      %1105 = vmatpush1.msra.mxu0 %v992
      %1106 = vmatprep.subr.mxu0 %v996
      %1107 = vmatpush1.msra.mxu0 %v995
      %1108 = vmatprep.subr.mxu0 %v999
      %1109 = vmatpush1.msra.mxu0 %v998
      %1110 = vmatprep.subr.mxu0 %v1002
      %1111 = vmatpush1.msra.mxu0 %v1001
      %1112 = vmatprep.subr.mxu0 %v1005
      %1113 = vmatpush1.msra.mxu0 %v1004
      %1114 = vmatprep.subr.mxu0 %v1008
      %1115 = vmatpush1.msra.mxu0 %v1007
      %1116 = vmatprep.subr.mxu0 %v1011
      %1117 = vmatpush1.msra.mxu0 %v1010
      %1118 = vmatprep.subr.mxu0 %v1014
      %1119 = vmatpush1.msra.mxu0 %v1013
      %1120 = vmatprep.subr.mxu0 %v1017
      %1121 = vmatpush1.msra.mxu0 %v1016
      %1122 = vmatprep.subr.mxu0 %v1020
      %1123 = vmatpush1.msra.mxu0 %v1019
      %1124 = vmatprep.subr.mxu0 %v1023
      %1125 = vmatpush1.msra.mxu0 %v1022
      %1126 = vmatprep.subr.mxu0 %v1026
      %1127 = vmatpush1.msra.mxu0 %v1025
      %1128 = vmatprep.subr.mxu0 %v1029
      %1129 = vmatpush1.msra.mxu0 %v1028
      %1130 = vmatprep.subr.mxu0 %v1032
      %1131 = vmatpush1.msra.mxu0 %v1031
      %1132 = vmatprep.subr.mxu0 %v1035
      %1133 = vmatpush1.msra.mxu0 %v1034
      %1134 = vmatprep.subr.mxu0 %v1038
      %1135 = vmatpush1.msra.mxu0 %v1037
      %1136 = vmatprep.subr.mxu0 %v1041
      %1137 = vmatpush1.msra.mxu0 %v1040
      %1138 = vmatprep.subr.mxu0 %v1044
      %1139 = vmatpush1.msra.mxu0 %v1043
      %1140 = vmatprep.subr.mxu0 %v1047
      %1141 = vmatpush1.msra.mxu0 %v1046
      %1142 = vmatprep.subr.mxu0 %v1050
      %1143 = vmatpush1.msra.mxu0 %v1049
      %1144 = vmatprep.subr.mxu0 %v1053
      %1145 = vmatpush1.msra.mxu0 %v1052
      %1146 = vmatprep.subr.mxu0 %v1056
      %1147 = vmatpush1.msra.mxu0 %v1055
      %1148 = vmatprep.subr.mxu0 %v1059
      %1149 = vmatpush1.msra.mxu0 %v1058
      %1150 = vmatprep.subr.mxu0 %v1062
      %1151 = vmatpush1.msra.mxu0 %v1061
      %1152 = vmatprep.subr.mxu0 %v1065
      %1153 = vmatpush1.msra.mxu0 %v1064
      %1154 = vmatprep.subr.mxu0 0.0
      %1155 = vmatpush1.msra.mxu0 0.0
      %1156 = vmatprep.subr.mxu0 0.0
      %1157 = vmatpush1.msra.mxu0 0.0
      %1158 = vmatprep.subr.mxu0 0.0
      %1159 = vmatpush1.msra.mxu0 0.0
      %1160 = vmatprep.subr.mxu0 0.0
      %1161 = vmatpush1.msra.mxu0 0.0
      %1162 = vmatprep.subr.mxu0 0.0
      %1163 = vmatpush1.msra.mxu0 0.0
      %1164 = vmatprep.subr.mxu0 0.0
      %1165 = vmatpush1.msra.mxu0 0.0
      %1166 = vmatprep.subr.mxu0 0.0
      %1167 = vmatpush1.msra.mxu0 0.0
      %1168 = vmatprep.mubr.f32.mxu0 %v1093
      %1169 = vmatmul.mubr.f32.gmra.mrb[0].mxu0 %v984
      %v1170 = vpop.f32.mrb[0].mxu0
      %v1171 = vadd.f32 %v1074, %v1170
      %v1172 = vpop.f32.mrb[0].mxu0
      %v1173 = vadd.f32 %v1074, %v1172
      %1174 = vmatprep.mubr.f32.mxu0 %v1096
      %1175 = vmatmul.mubr.f32.gmra.mrb[0].mxu0 %v986
      %v1176 = vpop.f32.mrb[0].mxu0
      %v1177 = vadd.f32 %v1079, %v1176
      %v1178 = vpop.f32.mrb[0].mxu0
      %v1179 = vadd.f32 %v1079, %v1178
      %1180 = vmatprep.mubr.f32.mxu0 %v1099
      %1181 = vmatmul.mubr.f32.gmra.mrb[0].mxu0 %v988
      %v1182 = vpop.f32.mrb[0].mxu0
      %v1183 = vadd.f32 %v1084, %v1182
      %v1184 = vpop.f32.mrb[0].mxu0
      %v1185 = vadd.f32 %v1084, %v1184
      %1186 = vmatprep.mubr.f32.mxu0 %v1102
      %1187 = vmatmul.mubr.f32.gmra.mrb[0].mxu0 %v990
      %v1188 = vpop.f32.mrb[0].mxu0
      %v1189 = vadd.f32 %v1089, %v1188
      %v1190 = vpop.f32.mrb[0].mxu0
      %v1191 = vadd.f32 %v1089, %v1190
      %1192 = vdwg.mxu0
      %1193 = vmatprep.subr.mxu0 0.0
      %1194 = vmatpush1.msra.mxu0 %v994
      %1195 = vmatprep.subr.mxu0 0.0
      %1196 = vmatpush1.msra.mxu0 %v997
      %1197 = vmatprep.subr.mxu0 0.0
      %1198 = vmatpush1.msra.mxu0 %v1000
      %1199 = vmatprep.subr.mxu0 0.0
      %1200 = vmatpush1.msra.mxu0 %v1003
      %1201 = vmatprep.subr.mxu0 0.0
      %1202 = vmatpush1.msra.mxu0 %v1006
      %1203 = vmatprep.subr.mxu0 0.0
      %1204 = vmatpush1.msra.mxu0 %v1009
      %1205 = vmatprep.subr.mxu0 0.0
      %1206 = vmatpush1.msra.mxu0 %v1012
      %1207 = vmatprep.subr.mxu0 0.0
      %1208 = vmatpush1.msra.mxu0 %v1015
      %1209 = vmatprep.subr.mxu0 0.0
      %1210 = vmatpush1.msra.mxu0 %v1018
      %1211 = vmatprep.subr.mxu0 0.0
      %1212 = vmatpush1.msra.mxu0 %v1021
      %1213 = vmatprep.subr.mxu0 0.0
      %1214 = vmatpush1.msra.mxu0 %v1024
      %1215 = vmatprep.subr.mxu0 0.0
      %1216 = vmatpush1.msra.mxu0 %v1027
      %1217 = vmatprep.subr.mxu0 0.0
      %1218 = vmatpush1.msra.mxu0 %v1030
      %1219 = vmatprep.subr.mxu0 0.0
      %1220 = vmatpush1.msra.mxu0 %v1033
      %1221 = vmatprep.subr.mxu0 0.0
      %1222 = vmatpush1.msra.mxu0 %v1036
      %1223 = vmatprep.subr.mxu0 0.0
      %1224 = vmatpush1.msra.mxu0 %v1039
      %1225 = vmatprep.subr.mxu0 0.0
      %1226 = vmatpush1.msra.mxu0 %v1042
      %1227 = vmatprep.subr.mxu0 0.0
      %1228 = vmatpush1.msra.mxu0 %v1045
      %1229 = vmatprep.subr.mxu0 0.0
      %1230 = vmatpush1.msra.mxu0 %v1048
      %1231 = vmatprep.subr.mxu0 0.0
      %1232 = vmatpush1.msra.mxu0 %v1051
      %1233 = vmatprep.subr.mxu0 0.0
      %1234 = vmatpush1.msra.mxu0 %v1054
      %1235 = vmatprep.subr.mxu0 0.0
      %1236 = vmatpush1.msra.mxu0 %v1057
      %1237 = vmatprep.subr.mxu0 0.0
      %1238 = vmatpush1.msra.mxu0 %v1060
      %1239 = vmatprep.subr.mxu0 0.0
      %1240 = vmatpush1.msra.mxu0 %v1063
      %1241 = vmatprep.subr.mxu0 0.0
      %1242 = vmatpush1.msra.mxu0 %v1066
      %1243 = vmatprep.subr.mxu0 0.0
      %1244 = vmatpush1.msra.mxu0 0.0
      %1245 = vmatprep.subr.mxu0 0.0
      %1246 = vmatpush1.msra.mxu0 0.0
      %1247 = vmatprep.subr.mxu0 0.0
      %1248 = vmatpush1.msra.mxu0 0.0
      %1249 = vmatprep.subr.mxu0 0.0
      %1250 = vmatpush1.msra.mxu0 0.0
      %1251 = vmatprep.subr.mxu0 0.0
      %1252 = vmatpush1.msra.mxu0 0.0
      %1253 = vmatprep.subr.mxu0 0.0
      %1254 = vmatpush1.msra.mxu0 0.0
      %1255 = vmatprep.subr.mxu0 0.0
      %1256 = vmatpush1.msra.mxu0 0.0
      %1257 = vmatprep.mubr.f32.mxu0 %v1093
      %1258 = vmatmul.mubr.f32.gmra.mrb[0].mxu0 %v984
      %v1259 = vpop.f32.mrb[0].mxu0
      %v1260 = vadd.f32 %v1074, %v1259
      %v1261 = vpop.f32.mrb[0].mxu0
      %1262 = vmatprep.mubr.f32.mxu0 %v1096
      %1263 = vmatmul.mubr.f32.gmra.mrb[0].mxu0 %v986
      %v1264 = vpop.f32.mrb[0].mxu0
      %v1265 = vadd.f32 %v1079, %v1264
      %v1266 = vpop.f32.mrb[0].mxu0
      %1267 = vmatprep.mubr.f32.mxu0 %v1099
      %1268 = vmatmul.mubr.f32.gmra.mrb[0].mxu0 %v988
      %v1269 = vpop.f32.mrb[0].mxu0
      %v1270 = vadd.f32 %v1084, %v1269
      %v1271 = vpop.f32.mrb[0].mxu0
      %1272 = vmatprep.mubr.f32.mxu0 %v1102
      %1273 = vmatmul.mubr.f32.gmra.mrb[0].mxu0 %v990
      %v1274 = vpop.f32.mrb[0].mxu0
      %v1275 = vadd.f32 %v1089, %v1274
      %v1276 = vpop.f32.mrb[0].mxu0
      %1277 = vdwg.mxu0
      %v1278 = vtanh.pop %v1171
      %v1279 = vtanh.pop %v1173
      %v1280 = vtanh.pop %v1260
      %v1281 = vtanh.pop %v1177
      %v1282 = vtanh.pop %v1179
      %v1283 = vtanh.pop %v1265
      %v1284 = vtanh.pop %v1183
      %v1285 = vtanh.pop %v1185
      %v1286 = vtanh.pop %v1270
      %v1287 = vtanh.pop %v1189
      %v1288 = vtanh.pop %v1191
      %v1289 = vtanh.pop %v1275
      %v1290 = vmul.f32 %v1278, %v337
      %v1291 = vmul.f32 %v1279, %v338
      %v1292 = vmul.f32 %v1280, %v339
      %v1293 = vmul.f32 %v1281, %v337
      %v1294 = vmul.f32 %v1282, %v338
      %v1295 = vmul.f32 %v1283, %v339
      %v1296 = vmul.f32 %v1284, %v337
      %v1297 = vmul.f32 %v1285, %v338
      %v1298 = vmul.f32 %v1286, %v339
      %v1299 = vmul.f32 %v1287, %v337
      %v1300 = vmul.f32 %v1288, %v338
      %v1301 = vmul.f32 %v1289, %v339
      %1314 = vrot.lane.b32.xlu0 %v1290, 50
      %v1315 = vpop.permute.xlu0 %1314
      %1316 = vrot.lane.b32.xlu0 %v1291, 50
      %v1317 = vpop.permute.xlu0 %1316
      %1318 = vrot.lane.b32.xlu0 %v1292, 50
      %v1319 = vpop.permute.xlu0 %1318
      %1320 = vrot.lane.b32.xlu0 %v1293, 50
      %v1321 = vpop.permute.xlu0 %1320
      %1322 = vrot.lane.b32.xlu0 %v1294, 50
      %v1323 = vpop.permute.xlu0 %1322
      %1324 = vrot.lane.b32.xlu0 %v1295, 50
      %v1325 = vpop.permute.xlu0 %1324
      %1326 = vrot.lane.b32.xlu0 %v1296, 50
      %v1327 = vpop.permute.xlu0 %1326
      %1328 = vrot.lane.b32.xlu0 %v1297, 50
      %v1329 = vpop.permute.xlu0 %1328
      %1330 = vrot.lane.b32.xlu0 %v1298, 50
      %v1331 = vpop.permute.xlu0 %1330
      %1332 = vrot.lane.b32.xlu0 %v1299, 50
      %v1333 = vpop.permute.xlu0 %1332
      %1334 = vrot.lane.b32.xlu0 %v1300, 50
      %v1335 = vpop.permute.xlu0 %1334
      %1336 = vrot.lane.b32.xlu0 %v1301, 50
      %v1337 = vpop.permute.xlu0 %1336
      %v1338 = vsel %vm340, %v1315, %v1317
      %v1339 = vsel %vm340, %v1317, %v1319
      %v1340 = vsel %vm340, %v1321, %v1323
      %v1341 = vsel %vm340, %v1323, %v1325
      %v1342 = vsel %vm340, %v1327, %v1329
      %v1343 = vsel %vm340, %v1329, %v1331
      %v1344 = vsel %vm340, %v1333, %v1335
      %v1345 = vsel %vm340, %v1335, %v1337
      %vm1362 = vcmask 1047952
      %1363 = vst.msk [vmem:[#allocation2] sm:$0xff] %vm1362, %v1315
      %1364 = vst [vmem:[#allocation2 + $0x8] sm:$0xff] %v1338
      %1365 = vst [vmem:[#allocation2 + $0x10] sm:$0xff] %v1339
      %1366 = vst.msk [vmem:[#allocation2 + $0x18] sm:$0xff] %vm340, %v1319
      %1367 = vst.msk [vmem:[#allocation2 + $0x20] sm:$0xff] %vm1362, %v1321
      %1368 = vst [vmem:[#allocation2 + $0x28] sm:$0xff] %v1340
      %1369 = vst [vmem:[#allocation2 + $0x30] sm:$0xff] %v1341
      %1370 = vst.msk [vmem:[#allocation2 + $0x38] sm:$0xff] %vm340, %v1325
      %1371 = vst.msk [vmem:[#allocation2 + $0x40] sm:$0xff] %vm1362, %v1327
      %1372 = vst [vmem:[#allocation2 + $0x48] sm:$0xff] %v1342
      %1373 = vst [vmem:[#allocation2 + $0x50] sm:$0xff] %v1343
      %1374 = vst.msk [vmem:[#allocation2 + $0x58] sm:$0xff] %vm340, %v1331
      %1375 = vst.msk [vmem:[#allocation2 + $0x60] sm:$0xff] %vm1362, %v1333
      %1376 = vst [vmem:[#allocation2 + $0x68] sm:$0xff] %v1344
      %1377 = vst [vmem:[#allocation2 + $0x70] sm:$0xff] %v1345
      %1378 = vst.msk [vmem:[#allocation2 + $0x78] sm:$0xff] %vm340, %v1337
      %v1379 = vld [vmem:[#allocation2] sm:$0xff]
      %v1380 = vld [vmem:[#allocation2 + $0x8] sm:$0xff]
      %v1381 = vld [vmem:[#allocation2 + $0x10] sm:$0xff]
      %v1382 = vld [vmem:[#allocation2 + $0x18] sm:$0xff]
      %v1383 = vld [vmem:[#allocation2 + $0x20] sm:$0xff]
      %v1384 = vld [vmem:[#allocation2 + $0x28] sm:$0xff]
      %v1385 = vld [vmem:[#allocation2 + $0x30] sm:$0xff]
      %v1386 = vld [vmem:[#allocation2 + $0x38] sm:$0xff]
      %v1387 = vld [vmem:[#allocation2 + $0x40] sm:$0xff]
      %v1388 = vld [vmem:[#allocation2 + $0x48] sm:$0xff]
      %v1389 = vld [vmem:[#allocation2 + $0x50] sm:$0xff]
      %v1390 = vld [vmem:[#allocation2 + $0x58] sm:$0xff]
      %v1391 = vld [vmem:[#allocation2 + $0x60] sm:$0xff]
      %v1392 = vld [vmem:[#allocation2 + $0x68] sm:$0xff]
      %v1393 = vld [vmem:[#allocation2 + $0x70] sm:$0xff]
      %v1394 = vld [vmem:[#allocation2 + $0x78] sm:$0xff]
      %1411 = vrot.lane.b32.xlu0 %v1379, 103
      %v1412 = vpop.permute.xlu0 %1411
      %1413 = vrot.lane.b32.xlu0 %v1380, 103
      %v1414 = vpop.permute.xlu0 %1413
      %1415 = vrot.lane.b32.xlu0 %v1381, 103
      %v1416 = vpop.permute.xlu0 %1415
      %1417 = vrot.lane.b32.xlu0 %v1382, 103
      %v1418 = vpop.permute.xlu0 %1417
      %1419 = vrot.lane.b32.xlu0 %v1383, 103
      %v1420 = vpop.permute.xlu0 %1419
      %1421 = vrot.lane.b32.xlu0 %v1384, 103
      %v1422 = vpop.permute.xlu0 %1421
      %1423 = vrot.lane.b32.xlu0 %v1385, 103
      %v1424 = vpop.permute.xlu0 %1423
      %1425 = vrot.lane.b32.xlu0 %v1386, 103
      %v1426 = vpop.permute.xlu0 %1425
      %1427 = vrot.lane.b32.xlu0 %v1387, 103
      %v1428 = vpop.permute.xlu0 %1427
      %1429 = vrot.lane.b32.xlu0 %v1388, 103
      %v1430 = vpop.permute.xlu0 %1429
      %1431 = vrot.lane.b32.xlu0 %v1389, 103
      %v1432 = vpop.permute.xlu0 %1431
      %1433 = vrot.lane.b32.xlu0 %v1390, 103
      %v1434 = vpop.permute.xlu0 %1433
      %1435 = vrot.lane.b32.xlu0 %v1391, 103
      %v1436 = vpop.permute.xlu0 %1435
      %1437 = vrot.lane.b32.xlu0 %v1392, 103
      %v1438 = vpop.permute.xlu0 %1437
      %1439 = vrot.lane.b32.xlu0 %v1393, 103
      %v1440 = vpop.permute.xlu0 %1439
      %1441 = vrot.lane.b32.xlu0 %v1394, 103
      %v1442 = vpop.permute.xlu0 %1441
      %v1443 = vsel %vm506, %v1412, %v1414
      %v1444 = vsel %vm506, %v1414, %v1416
      %v1445 = vsel %vm506, %v1416, %v1418
      %v1446 = vsel %vm506, %v1420, %v1422
      %v1447 = vsel %vm506, %v1422, %v1424
      %v1448 = vsel %vm506, %v1424, %v1426
      %v1449 = vsel %vm506, %v1428, %v1430
      %v1450 = vsel %vm506, %v1430, %v1432
      %v1451 = vsel %vm506, %v1432, %v1434
      %v1452 = vsel %vm506, %v1436, %v1438
      %v1453 = vsel %vm506, %v1438, %v1440
      %v1454 = vsel %vm506, %v1440, %v1442
      %1467 = vst [vmem:[#allocation5] sm:$0xff] %v1443
      %1468 = vst [vmem:[#allocation5 + $0x8] sm:$0xff] %v1444
      %1469 = vst [vmem:[#allocation5 + $0x10] sm:$0xff] %v1445
      %1470 = vst [vmem:[#allocation5 + $0x18] sm:$0xff] %v1446
      %1471 = vst [vmem:[#allocation5 + $0x20] sm:$0xff] %v1447
      %1472 = vst [vmem:[#allocation5 + $0x28] sm:$0xff] %v1448
      %1473 = vst [vmem:[#allocation5 + $0x30] sm:$0xff] %v1449
      %1474 = vst [vmem:[#allocation5 + $0x38] sm:$0xff] %v1450
      %1475 = vst [vmem:[#allocation5 + $0x40] sm:$0xff] %v1451
      %1476 = vst [vmem:[#allocation5 + $0x48] sm:$0xff] %v1452
      %1477 = vst [vmem:[#allocation5 + $0x50] sm:$0xff] %v1453
      %1478 = vst [vmem:[#allocation5 + $0x58] sm:$0xff] %v1454
      %v1479 = vld [vmem:[#allocation2] sm:$0xff]
      %v1480 = vld [vmem:[#allocation2 + $0x8] sm:$0xff]
      %v1481 = vld [vmem:[#allocation2 + $0x10] sm:$0xff]
      %v1482 = vld [vmem:[#allocation2 + $0x18] sm:$0xff]
      %v1483 = vld [vmem:[#allocation2 + $0x20] sm:$0xff]
      %v1484 = vld [vmem:[#allocation2 + $0x28] sm:$0xff]
      %v1485 = vld [vmem:[#allocation2 + $0x30] sm:$0xff]
      %v1486 = vld [vmem:[#allocation2 + $0x38] sm:$0xff]
      %v1487 = vld [vmem:[#allocation2 + $0x40] sm:$0xff]
      %v1488 = vld [vmem:[#allocation2 + $0x48] sm:$0xff]
      %v1489 = vld [vmem:[#allocation2 + $0x50] sm:$0xff]
      %v1490 = vld [vmem:[#allocation2 + $0x58] sm:$0xff]
      %v1491 = vld [vmem:[#allocation2 + $0x60] sm:$0xff]
      %v1492 = vld [vmem:[#allocation2 + $0x68] sm:$0xff]
      %v1493 = vld [vmem:[#allocation2 + $0x70] sm:$0xff]
      %v1494 = vld [vmem:[#allocation2 + $0x78] sm:$0xff]
      %1511 = vrot.lane.b32.xlu0 %v1479, 102
      %v1512 = vpop.permute.xlu0 %1511
      %1513 = vrot.lane.b32.xlu0 %v1480, 102
      %v1514 = vpop.permute.xlu0 %1513
      %1515 = vrot.lane.b32.xlu0 %v1481, 102
      %v1516 = vpop.permute.xlu0 %1515
      %1517 = vrot.lane.b32.xlu0 %v1482, 102
      %v1518 = vpop.permute.xlu0 %1517
      %1519 = vrot.lane.b32.xlu0 %v1483, 102
      %v1520 = vpop.permute.xlu0 %1519
      %1521 = vrot.lane.b32.xlu0 %v1484, 102
      %v1522 = vpop.permute.xlu0 %1521
      %1523 = vrot.lane.b32.xlu0 %v1485, 102
      %v1524 = vpop.permute.xlu0 %1523
      %1525 = vrot.lane.b32.xlu0 %v1486, 102
      %v1526 = vpop.permute.xlu0 %1525
      %1527 = vrot.lane.b32.xlu0 %v1487, 102
      %v1528 = vpop.permute.xlu0 %1527
      %1529 = vrot.lane.b32.xlu0 %v1488, 102
      %v1530 = vpop.permute.xlu0 %1529
      %1531 = vrot.lane.b32.xlu0 %v1489, 102
      %v1532 = vpop.permute.xlu0 %1531
      %1533 = vrot.lane.b32.xlu0 %v1490, 102
      %v1534 = vpop.permute.xlu0 %1533
      %1535 = vrot.lane.b32.xlu0 %v1491, 102
      %v1536 = vpop.permute.xlu0 %1535
      %1537 = vrot.lane.b32.xlu0 %v1492, 102
      %v1538 = vpop.permute.xlu0 %1537
      %1539 = vrot.lane.b32.xlu0 %v1493, 102
      %v1540 = vpop.permute.xlu0 %1539
      %1541 = vrot.lane.b32.xlu0 %v1494, 102
      %v1542 = vpop.permute.xlu0 %1541
      %v1543 = vsel %vm532, %v1512, %v1514
      %v1544 = vsel %vm532, %v1514, %v1516
      %v1545 = vsel %vm532, %v1516, %v1518
      %v1546 = vsel %vm532, %v1520, %v1522
      %v1547 = vsel %vm532, %v1522, %v1524
      %v1548 = vsel %vm532, %v1524, %v1526
      %v1549 = vsel %vm532, %v1528, %v1530
      %v1550 = vsel %vm532, %v1530, %v1532
      %v1551 = vsel %vm532, %v1532, %v1534
      %v1552 = vsel %vm532, %v1536, %v1538
      %v1553 = vsel %vm532, %v1538, %v1540
      %v1554 = vsel %vm532, %v1540, %v1542
      %1567 = vst [vmem:[#allocation5 + $0x60] sm:$0xff] %v1543
      %1568 = vst [vmem:[#allocation5 + $0x68] sm:$0xff] %v1544
      %1569 = vst [vmem:[#allocation5 + $0x70] sm:$0xff] %v1545
      %1570 = vst [vmem:[#allocation5 + $0x78] sm:$0xff] %v1546
      %1571 = vst [vmem:[#allocation5 + $0x80] sm:$0xff] %v1547
      %1572 = vst [vmem:[#allocation5 + $0x88] sm:$0xff] %v1548
      %1573 = vst [vmem:[#allocation5 + $0x90] sm:$0xff] %v1549
      %1574 = vst [vmem:[#allocation5 + $0x98] sm:$0xff] %v1550
      %1575 = vst [vmem:[#allocation5 + $0xa0] sm:$0xff] %v1551
      %1576 = vst [vmem:[#allocation5 + $0xa8] sm:$0xff] %v1552
      %1577 = vst [vmem:[#allocation5 + $0xb0] sm:$0xff] %v1553
      %1578 = vst [vmem:[#allocation5 + $0xb8] sm:$0xff] %v1554
      %v1579 = vld [vmem:[#allocation2] sm:$0xff]
      %v1580 = vld [vmem:[#allocation2 + $0x8] sm:$0xff]
      %v1581 = vld [vmem:[#allocation2 + $0x10] sm:$0xff]
      %v1582 = vld [vmem:[#allocation2 + $0x18] sm:$0xff]
      %v1583 = vld [vmem:[#allocation2 + $0x20] sm:$0xff]
      %v1584 = vld [vmem:[#allocation2 + $0x28] sm:$0xff]
      %v1585 = vld [vmem:[#allocation2 + $0x30] sm:$0xff]
      %v1586 = vld [vmem:[#allocation2 + $0x38] sm:$0xff]
      %v1587 = vld [vmem:[#allocation2 + $0x40] sm:$0xff]
      %v1588 = vld [vmem:[#allocation2 + $0x48] sm:$0xff]
      %v1589 = vld [vmem:[#allocation2 + $0x50] sm:$0xff]
      %v1590 = vld [vmem:[#allocation2 + $0x58] sm:$0xff]
      %v1591 = vld [vmem:[#allocation2 + $0x60] sm:$0xff]
      %v1592 = vld [vmem:[#allocation2 + $0x68] sm:$0xff]
      %v1593 = vld [vmem:[#allocation2 + $0x70] sm:$0xff]
      %v1594 = vld [vmem:[#allocation2 + $0x78] sm:$0xff]
      %1611 = vrot.lane.b32.xlu0 %v1579, 101
      %v1612 = vpop.permute.xlu0 %1611
      %1613 = vrot.lane.b32.xlu0 %v1580, 101
      %v1614 = vpop.permute.xlu0 %1613
      %1615 = vrot.lane.b32.xlu0 %v1581, 101
      %v1616 = vpop.permute.xlu0 %1615
      %1617 = vrot.lane.b32.xlu0 %v1582, 101
      %v1618 = vpop.permute.xlu0 %1617
      %1619 = vrot.lane.b32.xlu0 %v1583, 101
      %v1620 = vpop.permute.xlu0 %1619
      %1621 = vrot.lane.b32.xlu0 %v1584, 101
      %v1622 = vpop.permute.xlu0 %1621
      %1623 = vrot.lane.b32.xlu0 %v1585, 101
      %v1624 = vpop.permute.xlu0 %1623
      %1625 = vrot.lane.b32.xlu0 %v1586, 101
      %v1626 = vpop.permute.xlu0 %1625
      %1627 = vrot.lane.b32.xlu0 %v1587, 101
      %v1628 = vpop.permute.xlu0 %1627
      %1629 = vrot.lane.b32.xlu0 %v1588, 101
      %v1630 = vpop.permute.xlu0 %1629
      %1631 = vrot.lane.b32.xlu0 %v1589, 101
      %v1632 = vpop.permute.xlu0 %1631
      %1633 = vrot.lane.b32.xlu0 %v1590, 101
      %v1634 = vpop.permute.xlu0 %1633
      %1635 = vrot.lane.b32.xlu0 %v1591, 101
      %v1636 = vpop.permute.xlu0 %1635
      %1637 = vrot.lane.b32.xlu0 %v1592, 101
      %v1638 = vpop.permute.xlu0 %1637
      %1639 = vrot.lane.b32.xlu0 %v1593, 101
      %v1640 = vpop.permute.xlu0 %1639
      %1641 = vrot.lane.b32.xlu0 %v1594, 101
      %v1642 = vpop.permute.xlu0 %1641
      %v1643 = vsel %vm558, %v1612, %v1614
      %v1644 = vsel %vm558, %v1614, %v1616
      %v1645 = vsel %vm558, %v1616, %v1618
      %v1646 = vsel %vm558, %v1620, %v1622
      %v1647 = vsel %vm558, %v1622, %v1624
      %v1648 = vsel %vm558, %v1624, %v1626
      %v1649 = vsel %vm558, %v1628, %v1630
      %v1650 = vsel %vm558, %v1630, %v1632
      %v1651 = vsel %vm558, %v1632, %v1634
      %v1652 = vsel %vm558, %v1636, %v1638
      %v1653 = vsel %vm558, %v1638, %v1640
      %v1654 = vsel %vm558, %v1640, %v1642
      %1667 = vst [vmem:[#allocation5 + $0xc0] sm:$0xff] %v1643
      %1668 = vst [vmem:[#allocation5 + $0xc8] sm:$0xff] %v1644
      %1669 = vst [vmem:[#allocation5 + $0xd0] sm:$0xff] %v1645
      %1670 = vst [vmem:[#allocation5 + $0xd8] sm:$0xff] %v1646
      %1671 = vst [vmem:[#allocation5 + $0xe0] sm:$0xff] %v1647
      %1672 = vst [vmem:[#allocation5 + $0xe8] sm:$0xff] %v1648
      %1673 = vst [vmem:[#allocation5 + $0xf0] sm:$0xff] %v1649
      %1674 = vst [vmem:[#allocation5 + $0xf8] sm:$0xff] %v1650
      %1675 = vst [vmem:[#allocation5 + $0x100] sm:$0xff] %v1651
      %1676 = vst [vmem:[#allocation5 + $0x108] sm:$0xff] %v1652
      %1677 = vst [vmem:[#allocation5 + $0x110] sm:$0xff] %v1653
      %1678 = vst [vmem:[#allocation5 + $0x118] sm:$0xff] %v1654
      %v1679 = vld [vmem:[#allocation2] sm:$0xff]
      %v1680 = vld [vmem:[#allocation2 + $0x8] sm:$0xff]
      %v1681 = vld [vmem:[#allocation2 + $0x10] sm:$0xff]
      %v1682 = vld [vmem:[#allocation2 + $0x18] sm:$0xff]
      %v1683 = vld [vmem:[#allocation2 + $0x20] sm:$0xff]
      %v1684 = vld [vmem:[#allocation2 + $0x28] sm:$0xff]
      %v1685 = vld [vmem:[#allocation2 + $0x30] sm:$0xff]
      %v1686 = vld [vmem:[#allocation2 + $0x38] sm:$0xff]
      %v1687 = vld [vmem:[#allocation2 + $0x40] sm:$0xff]
      %v1688 = vld [vmem:[#allocation2 + $0x48] sm:$0xff]
      %v1689 = vld [vmem:[#allocation2 + $0x50] sm:$0xff]
      %v1690 = vld [vmem:[#allocation2 + $0x58] sm:$0xff]
      %v1691 = vld [vmem:[#allocation2 + $0x60] sm:$0xff]
      %v1692 = vld [vmem:[#allocation2 + $0x68] sm:$0xff]
      %v1693 = vld [vmem:[#allocation2 + $0x70] sm:$0xff]
      %v1694 = vld [vmem:[#allocation2 + $0x78] sm:$0xff]
      %1711 = vrot.lane.b32.xlu0 %v1679, 79
      %v1712 = vpop.permute.xlu0 %1711
      %1713 = vrot.lane.b32.xlu0 %v1680, 79
      %v1714 = vpop.permute.xlu0 %1713
      %1715 = vrot.lane.b32.xlu0 %v1681, 79
      %v1716 = vpop.permute.xlu0 %1715
      %1717 = vrot.lane.b32.xlu0 %v1682, 79
      %v1718 = vpop.permute.xlu0 %1717
      %1719 = vrot.lane.b32.xlu0 %v1683, 79
      %v1720 = vpop.permute.xlu0 %1719
      %1721 = vrot.lane.b32.xlu0 %v1684, 79
      %v1722 = vpop.permute.xlu0 %1721
      %1723 = vrot.lane.b32.xlu0 %v1685, 79
      %v1724 = vpop.permute.xlu0 %1723
      %1725 = vrot.lane.b32.xlu0 %v1686, 79
      %v1726 = vpop.permute.xlu0 %1725
      %1727 = vrot.lane.b32.xlu0 %v1687, 79
      %v1728 = vpop.permute.xlu0 %1727
      %1729 = vrot.lane.b32.xlu0 %v1688, 79
      %v1730 = vpop.permute.xlu0 %1729
      %1731 = vrot.lane.b32.xlu0 %v1689, 79
      %v1732 = vpop.permute.xlu0 %1731
      %1733 = vrot.lane.b32.xlu0 %v1690, 79
      %v1734 = vpop.permute.xlu0 %1733
      %1735 = vrot.lane.b32.xlu0 %v1691, 79
      %v1736 = vpop.permute.xlu0 %1735
      %1737 = vrot.lane.b32.xlu0 %v1692, 79
      %v1738 = vpop.permute.xlu0 %1737
      %1739 = vrot.lane.b32.xlu0 %v1693, 79
      %v1740 = vpop.permute.xlu0 %1739
      %1741 = vrot.lane.b32.xlu0 %v1694, 79
      %v1742 = vpop.permute.xlu0 %1741
      %v1743 = vsel %vm636, %v1712, %v1714
      %v1744 = vsel %vm636, %v1714, %v1716
      %v1745 = vsel %vm636, %v1716, %v1718
      %v1746 = vsel %vm636, %v1720, %v1722
      %v1747 = vsel %vm636, %v1722, %v1724
      %v1748 = vsel %vm636, %v1724, %v1726
      %v1749 = vsel %vm636, %v1728, %v1730
      %v1750 = vsel %vm636, %v1730, %v1732
      %v1751 = vsel %vm636, %v1732, %v1734
      %v1752 = vsel %vm636, %v1736, %v1738
      %v1753 = vsel %vm636, %v1738, %v1740
      %v1754 = vsel %vm636, %v1740, %v1742
      %1767 = vst [vmem:[#allocation5 + $0x120] sm:$0xff] %v1743
      %1768 = vst [vmem:[#allocation5 + $0x128] sm:$0xff] %v1744
      %1769 = vst [vmem:[#allocation5 + $0x130] sm:$0xff] %v1745
      %1770 = vst [vmem:[#allocation5 + $0x138] sm:$0xff] %v1746
      %1771 = vst [vmem:[#allocation5 + $0x140] sm:$0xff] %v1747
      %1772 = vst [vmem:[#allocation5 + $0x148] sm:$0xff] %v1748
      %1773 = vst [vmem:[#allocation5 + $0x150] sm:$0xff] %v1749
      %1774 = vst [vmem:[#allocation5 + $0x158] sm:$0xff] %v1750
      %1775 = vst [vmem:[#allocation5 + $0x160] sm:$0xff] %v1751
      %1776 = vst [vmem:[#allocation5 + $0x168] sm:$0xff] %v1752
      %1777 = vst [vmem:[#allocation5 + $0x170] sm:$0xff] %v1753
      %1778 = vst [vmem:[#allocation5 + $0x178] sm:$0xff] %v1754
      %v1779 = vld [vmem:[#allocation2] sm:$0xff]
      %v1780 = vld [vmem:[#allocation2 + $0x8] sm:$0xff]
      %v1781 = vld [vmem:[#allocation2 + $0x10] sm:$0xff]
      %v1782 = vld [vmem:[#allocation2 + $0x18] sm:$0xff]
      %v1783 = vld [vmem:[#allocation2 + $0x20] sm:$0xff]
      %v1784 = vld [vmem:[#allocation2 + $0x28] sm:$0xff]
      %v1785 = vld [vmem:[#allocation2 + $0x30] sm:$0xff]
      %v1786 = vld [vmem:[#allocation2 + $0x38] sm:$0xff]
      %v1787 = vld [vmem:[#allocation2 + $0x40] sm:$0xff]
      %v1788 = vld [vmem:[#allocation2 + $0x48] sm:$0xff]
      %v1789 = vld [vmem:[#allocation2 + $0x50] sm:$0xff]
      %v1790 = vld [vmem:[#allocation2 + $0x58] sm:$0xff]
      %v1791 = vld [vmem:[#allocation2 + $0x60] sm:$0xff]
      %v1792 = vld [vmem:[#allocation2 + $0x68] sm:$0xff]
      %v1793 = vld [vmem:[#allocation2 + $0x70] sm:$0xff]
      %v1794 = vld [vmem:[#allocation2 + $0x78] sm:$0xff]
      %1811 = vrot.lane.b32.xlu0 %v1779, 78
      %v1812 = vpop.permute.xlu0 %1811
      %1813 = vrot.lane.b32.xlu0 %v1780, 78
      %v1814 = vpop.permute.xlu0 %1813
      %1815 = vrot.lane.b32.xlu0 %v1781, 78
      %v1816 = vpop.permute.xlu0 %1815
      %1817 = vrot.lane.b32.xlu0 %v1782, 78
      %v1818 = vpop.permute.xlu0 %1817
      %1819 = vrot.lane.b32.xlu0 %v1783, 78
      %v1820 = vpop.permute.xlu0 %1819
      %1821 = vrot.lane.b32.xlu0 %v1784, 78
      %v1822 = vpop.permute.xlu0 %1821
      %1823 = vrot.lane.b32.xlu0 %v1785, 78
      %v1824 = vpop.permute.xlu0 %1823
      %1825 = vrot.lane.b32.xlu0 %v1786, 78
      %v1826 = vpop.permute.xlu0 %1825
      %1827 = vrot.lane.b32.xlu0 %v1787, 78
      %v1828 = vpop.permute.xlu0 %1827
      %1829 = vrot.lane.b32.xlu0 %v1788, 78
      %v1830 = vpop.permute.xlu0 %1829
      %1831 = vrot.lane.b32.xlu0 %v1789, 78
      %v1832 = vpop.permute.xlu0 %1831
      %1833 = vrot.lane.b32.xlu0 %v1790, 78
      %v1834 = vpop.permute.xlu0 %1833
      %1835 = vrot.lane.b32.xlu0 %v1791, 78
      %v1836 = vpop.permute.xlu0 %1835
      %1837 = vrot.lane.b32.xlu0 %v1792, 78
      %v1838 = vpop.permute.xlu0 %1837
      %1839 = vrot.lane.b32.xlu0 %v1793, 78
      %v1840 = vpop.permute.xlu0 %1839
      %1841 = vrot.lane.b32.xlu0 %v1794, 78
      %v1842 = vpop.permute.xlu0 %1841
      %v1843 = vsel %vm662, %v1812, %v1814
      %v1844 = vsel %vm662, %v1814, %v1816
      %v1845 = vsel %vm662, %v1816, %v1818
      %v1846 = vsel %vm662, %v1820, %v1822
      %v1847 = vsel %vm662, %v1822, %v1824
      %v1848 = vsel %vm662, %v1824, %v1826
      %v1849 = vsel %vm662, %v1828, %v1830
      %v1850 = vsel %vm662, %v1830, %v1832
      %v1851 = vsel %vm662, %v1832, %v1834
      %v1852 = vsel %vm662, %v1836, %v1838
      %v1853 = vsel %vm662, %v1838, %v1840
      %v1854 = vsel %vm662, %v1840, %v1842
      %1867 = vst [vmem:[#allocation5 + $0x180] sm:$0xff] %v1843
      %1868 = vst [vmem:[#allocation5 + $0x188] sm:$0xff] %v1844
      %1869 = vst [vmem:[#allocation5 + $0x190] sm:$0xff] %v1845
      %1870 = vst [vmem:[#allocation5 + $0x198] sm:$0xff] %v1846
      %1871 = vst [vmem:[#allocation5 + $0x1a0] sm:$0xff] %v1847
      %1872 = vst [vmem:[#allocation5 + $0x1a8] sm:$0xff] %v1848
      %1873 = vst [vmem:[#allocation5 + $0x1b0] sm:$0xff] %v1849
      %1874 = vst [vmem:[#allocation5 + $0x1b8] sm:$0xff] %v1850
      %1875 = vst [vmem:[#allocation5 + $0x1c0] sm:$0xff] %v1851
      %1876 = vst [vmem:[#allocation5 + $0x1c8] sm:$0xff] %v1852
      %1877 = vst [vmem:[#allocation5 + $0x1d0] sm:$0xff] %v1853
      %1878 = vst [vmem:[#allocation5 + $0x1d8] sm:$0xff] %v1854
      %v1879 = vld [vmem:[#allocation2] sm:$0xff]
      %v1880 = vld [vmem:[#allocation2 + $0x8] sm:$0xff]
      %v1881 = vld [vmem:[#allocation2 + $0x10] sm:$0xff]
      %v1882 = vld [vmem:[#allocation2 + $0x18] sm:$0xff]
      %v1883 = vld [vmem:[#allocation2 + $0x20] sm:$0xff]
      %v1884 = vld [vmem:[#allocation2 + $0x28] sm:$0xff]
      %v1885 = vld [vmem:[#allocation2 + $0x30] sm:$0xff]
      %v1886 = vld [vmem:[#allocation2 + $0x38] sm:$0xff]
      %v1887 = vld [vmem:[#allocation2 + $0x40] sm:$0xff]
      %v1888 = vld [vmem:[#allocation2 + $0x48] sm:$0xff]
      %v1889 = vld [vmem:[#allocation2 + $0x50] sm:$0xff]
      %v1890 = vld [vmem:[#allocation2 + $0x58] sm:$0xff]
      %v1891 = vld [vmem:[#allocation2 + $0x60] sm:$0xff]
      %v1892 = vld [vmem:[#allocation2 + $0x68] sm:$0xff]
      %v1893 = vld [vmem:[#allocation2 + $0x70] sm:$0xff]
      %v1894 = vld [vmem:[#allocation2 + $0x78] sm:$0xff]
      %1911 = vrot.lane.b32.xlu0 %v1879, 77
      %v1912 = vpop.permute.xlu0 %1911
      %1913 = vrot.lane.b32.xlu0 %v1880, 77
      %v1914 = vpop.permute.xlu0 %1913
      %1915 = vrot.lane.b32.xlu0 %v1881, 77
      %v1916 = vpop.permute.xlu0 %1915
      %1917 = vrot.lane.b32.xlu0 %v1882, 77
      %v1918 = vpop.permute.xlu0 %1917
      %1919 = vrot.lane.b32.xlu0 %v1883, 77
      %v1920 = vpop.permute.xlu0 %1919
      %1921 = vrot.lane.b32.xlu0 %v1884, 77
      %v1922 = vpop.permute.xlu0 %1921
      %1923 = vrot.lane.b32.xlu0 %v1885, 77
      %v1924 = vpop.permute.xlu0 %1923
      %1925 = vrot.lane.b32.xlu0 %v1886, 77
      %v1926 = vpop.permute.xlu0 %1925
      %1927 = vrot.lane.b32.xlu0 %v1887, 77
      %v1928 = vpop.permute.xlu0 %1927
      %1929 = vrot.lane.b32.xlu0 %v1888, 77
      %v1930 = vpop.permute.xlu0 %1929
      %1931 = vrot.lane.b32.xlu0 %v1889, 77
      %v1932 = vpop.permute.xlu0 %1931
      %1933 = vrot.lane.b32.xlu0 %v1890, 77
      %v1934 = vpop.permute.xlu0 %1933
      %1935 = vrot.lane.b32.xlu0 %v1891, 77
      %v1936 = vpop.permute.xlu0 %1935
      %1937 = vrot.lane.b32.xlu0 %v1892, 77
      %v1938 = vpop.permute.xlu0 %1937
      %1939 = vrot.lane.b32.xlu0 %v1893, 77
      %v1940 = vpop.permute.xlu0 %1939
      %1941 = vrot.lane.b32.xlu0 %v1894, 77
      %v1942 = vpop.permute.xlu0 %1941
      %v1943 = vsel %vm688, %v1912, %v1914
      %v1944 = vsel %vm688, %v1914, %v1916
      %v1945 = vsel %vm688, %v1916, %v1918
      %v1946 = vsel %vm688, %v1920, %v1922
      %v1947 = vsel %vm688, %v1922, %v1924
      %v1948 = vsel %vm688, %v1924, %v1926
      %v1949 = vsel %vm688, %v1928, %v1930
      %v1950 = vsel %vm688, %v1930, %v1932
      %v1951 = vsel %vm688, %v1932, %v1934
      %v1952 = vsel %vm688, %v1936, %v1938
      %v1953 = vsel %vm688, %v1938, %v1940
      %v1954 = vsel %vm688, %v1940, %v1942
      %1967 = vst [vmem:[#allocation5 + $0x1e0] sm:$0xff] %v1943
      %1968 = vst [vmem:[#allocation5 + $0x1e8] sm:$0xff] %v1944
      %1969 = vst [vmem:[#allocation5 + $0x1f0] sm:$0xff] %v1945
      %1970 = vst [vmem:[#allocation5 + $0x1f8] sm:$0xff] %v1946
      %1971 = vst [vmem:[#allocation5 + $0x200] sm:$0xff] %v1947
      %1972 = vst [vmem:[#allocation5 + $0x208] sm:$0xff] %v1948
      %1973 = vst [vmem:[#allocation5 + $0x210] sm:$0xff] %v1949
      %1974 = vst [vmem:[#allocation5 + $0x218] sm:$0xff] %v1950
      %1975 = vst [vmem:[#allocation5 + $0x220] sm:$0xff] %v1951
      %1976 = vst [vmem:[#allocation5 + $0x228] sm:$0xff] %v1952
      %1977 = vst [vmem:[#allocation5 + $0x230] sm:$0xff] %v1953
      %1978 = vst [vmem:[#allocation5 + $0x238] sm:$0xff] %v1954
      %v1979 = vld [vmem:[#allocation2] sm:$0xff]
      %v1980 = vld [vmem:[#allocation2 + $0x8] sm:$0xff]
      %v1981 = vld [vmem:[#allocation2 + $0x10] sm:$0xff]
      %v1982 = vld [vmem:[#allocation2 + $0x18] sm:$0xff]
      %v1983 = vld [vmem:[#allocation2 + $0x20] sm:$0xff]
      %v1984 = vld [vmem:[#allocation2 + $0x28] sm:$0xff]
      %v1985 = vld [vmem:[#allocation2 + $0x30] sm:$0xff]
      %v1986 = vld [vmem:[#allocation2 + $0x38] sm:$0xff]
      %v1987 = vld [vmem:[#allocation2 + $0x40] sm:$0xff]
      %v1988 = vld [vmem:[#allocation2 + $0x48] sm:$0xff]
      %v1989 = vld [vmem:[#allocation2 + $0x50] sm:$0xff]
      %v1990 = vld [vmem:[#allocation2 + $0x58] sm:$0xff]
      %v1991 = vld [vmem:[#allocation2 + $0x60] sm:$0xff]
      %v1992 = vld [vmem:[#allocation2 + $0x68] sm:$0xff]
      %v1993 = vld [vmem:[#allocation2 + $0x70] sm:$0xff]
      %v1994 = vld [vmem:[#allocation2 + $0x78] sm:$0xff]
      %2011 = vrot.lane.b32.xlu0 %v1979, 55
      %v2012 = vpop.permute.xlu0 %2011
      %2013 = vrot.lane.b32.xlu0 %v1980, 55
      %v2014 = vpop.permute.xlu0 %2013
      %2015 = vrot.lane.b32.xlu0 %v1981, 55
      %v2016 = vpop.permute.xlu0 %2015
      %2017 = vrot.lane.b32.xlu0 %v1982, 55
      %v2018 = vpop.permute.xlu0 %2017
      %2019 = vrot.lane.b32.xlu0 %v1983, 55
      %v2020 = vpop.permute.xlu0 %2019
      %2021 = vrot.lane.b32.xlu0 %v1984, 55
      %v2022 = vpop.permute.xlu0 %2021
      %2023 = vrot.lane.b32.xlu0 %v1985, 55
      %v2024 = vpop.permute.xlu0 %2023
      %2025 = vrot.lane.b32.xlu0 %v1986, 55
      %v2026 = vpop.permute.xlu0 %2025
      %2027 = vrot.lane.b32.xlu0 %v1987, 55
      %v2028 = vpop.permute.xlu0 %2027
      %2029 = vrot.lane.b32.xlu0 %v1988, 55
      %v2030 = vpop.permute.xlu0 %2029
      %2031 = vrot.lane.b32.xlu0 %v1989, 55
      %v2032 = vpop.permute.xlu0 %2031
      %2033 = vrot.lane.b32.xlu0 %v1990, 55
      %v2034 = vpop.permute.xlu0 %2033
      %2035 = vrot.lane.b32.xlu0 %v1991, 55
      %v2036 = vpop.permute.xlu0 %2035
      %2037 = vrot.lane.b32.xlu0 %v1992, 55
      %v2038 = vpop.permute.xlu0 %2037
      %2039 = vrot.lane.b32.xlu0 %v1993, 55
      %v2040 = vpop.permute.xlu0 %2039
      %2041 = vrot.lane.b32.xlu0 %v1994, 55
      %v2042 = vpop.permute.xlu0 %2041
      %v2043 = vsel %vm766, %v2012, %v2014
      %v2044 = vsel %vm766, %v2014, %v2016
      %v2045 = vsel %vm766, %v2016, %v2018
      %v2046 = vsel %vm766, %v2020, %v2022
      %v2047 = vsel %vm766, %v2022, %v2024
      %v2048 = vsel %vm766, %v2024, %v2026
      %v2049 = vsel %vm766, %v2028, %v2030
      %v2050 = vsel %vm766, %v2030, %v2032
      %v2051 = vsel %vm766, %v2032, %v2034
      %v2052 = vsel %vm766, %v2036, %v2038
      %v2053 = vsel %vm766, %v2038, %v2040
      %v2054 = vsel %vm766, %v2040, %v2042
      %2067 = vst [vmem:[#allocation5 + $0x240] sm:$0xff] %v2043
      %2068 = vst [vmem:[#allocation5 + $0x248] sm:$0xff] %v2044
      %2069 = vst [vmem:[#allocation5 + $0x250] sm:$0xff] %v2045
      %2070 = vst [vmem:[#allocation5 + $0x258] sm:$0xff] %v2046
      %2071 = vst [vmem:[#allocation5 + $0x260] sm:$0xff] %v2047
      %2072 = vst [vmem:[#allocation5 + $0x268] sm:$0xff] %v2048
      %2073 = vst [vmem:[#allocation5 + $0x270] sm:$0xff] %v2049
      %2074 = vst [vmem:[#allocation5 + $0x278] sm:$0xff] %v2050
      %2075 = vst [vmem:[#allocation5 + $0x280] sm:$0xff] %v2051
      %2076 = vst [vmem:[#allocation5 + $0x288] sm:$0xff] %v2052
      %2077 = vst [vmem:[#allocation5 + $0x290] sm:$0xff] %v2053
      %2078 = vst [vmem:[#allocation5 + $0x298] sm:$0xff] %v2054
      %v2079 = vld [vmem:[#allocation2] sm:$0xff]
      %v2080 = vld [vmem:[#allocation2 + $0x8] sm:$0xff]
      %v2081 = vld [vmem:[#allocation2 + $0x10] sm:$0xff]
      %v2082 = vld [vmem:[#allocation2 + $0x18] sm:$0xff]
      %v2083 = vld [vmem:[#allocation2 + $0x20] sm:$0xff]
      %v2084 = vld [vmem:[#allocation2 + $0x28] sm:$0xff]
      %v2085 = vld [vmem:[#allocation2 + $0x30] sm:$0xff]
      %v2086 = vld [vmem:[#allocation2 + $0x38] sm:$0xff]
      %v2087 = vld [vmem:[#allocation2 + $0x40] sm:$0xff]
      %v2088 = vld [vmem:[#allocation2 + $0x48] sm:$0xff]
      %v2089 = vld [vmem:[#allocation2 + $0x50] sm:$0xff]
      %v2090 = vld [vmem:[#allocation2 + $0x58] sm:$0xff]
      %v2091 = vld [vmem:[#allocation2 + $0x60] sm:$0xff]
      %v2092 = vld [vmem:[#allocation2 + $0x68] sm:$0xff]
      %v2093 = vld [vmem:[#allocation2 + $0x70] sm:$0xff]
      %v2094 = vld [vmem:[#allocation2 + $0x78] sm:$0xff]
      %2111 = vrot.lane.b32.xlu0 %v2079, 54
      %v2112 = vpop.permute.xlu0 %2111
      %2113 = vrot.lane.b32.xlu0 %v2080, 54
      %v2114 = vpop.permute.xlu0 %2113
      %2115 = vrot.lane.b32.xlu0 %v2081, 54
      %v2116 = vpop.permute.xlu0 %2115
      %2117 = vrot.lane.b32.xlu0 %v2082, 54
      %v2118 = vpop.permute.xlu0 %2117
      %2119 = vrot.lane.b32.xlu0 %v2083, 54
      %v2120 = vpop.permute.xlu0 %2119
      %2121 = vrot.lane.b32.xlu0 %v2084, 54
      %v2122 = vpop.permute.xlu0 %2121
      %2123 = vrot.lane.b32.xlu0 %v2085, 54
      %v2124 = vpop.permute.xlu0 %2123
      %2125 = vrot.lane.b32.xlu0 %v2086, 54
      %v2126 = vpop.permute.xlu0 %2125
      %2127 = vrot.lane.b32.xlu0 %v2087, 54
      %v2128 = vpop.permute.xlu0 %2127
      %2129 = vrot.lane.b32.xlu0 %v2088, 54
      %v2130 = vpop.permute.xlu0 %2129
      %2131 = vrot.lane.b32.xlu0 %v2089, 54
      %v2132 = vpop.permute.xlu0 %2131
      %2133 = vrot.lane.b32.xlu0 %v2090, 54
      %v2134 = vpop.permute.xlu0 %2133
      %2135 = vrot.lane.b32.xlu0 %v2091, 54
      %v2136 = vpop.permute.xlu0 %2135
      %2137 = vrot.lane.b32.xlu0 %v2092, 54
      %v2138 = vpop.permute.xlu0 %2137
      %2139 = vrot.lane.b32.xlu0 %v2093, 54
      %v2140 = vpop.permute.xlu0 %2139
      %2141 = vrot.lane.b32.xlu0 %v2094, 54
      %v2142 = vpop.permute.xlu0 %2141
      %v2143 = vsel %vm792, %v2112, %v2114
      %v2144 = vsel %vm792, %v2114, %v2116
      %v2145 = vsel %vm792, %v2116, %v2118
      %v2146 = vsel %vm792, %v2120, %v2122
      %v2147 = vsel %vm792, %v2122, %v2124
      %v2148 = vsel %vm792, %v2124, %v2126
      %v2149 = vsel %vm792, %v2128, %v2130
      %v2150 = vsel %vm792, %v2130, %v2132
      %v2151 = vsel %vm792, %v2132, %v2134
      %v2152 = vsel %vm792, %v2136, %v2138
      %v2153 = vsel %vm792, %v2138, %v2140
      %v2154 = vsel %vm792, %v2140, %v2142
      %2167 = vst [vmem:[#allocation5 + $0x2a0] sm:$0xff] %v2143
      %2168 = vst [vmem:[#allocation5 + $0x2a8] sm:$0xff] %v2144
      %2169 = vst [vmem:[#allocation5 + $0x2b0] sm:$0xff] %v2145
      %2170 = vst [vmem:[#allocation5 + $0x2b8] sm:$0xff] %v2146
      %2171 = vst [vmem:[#allocation5 + $0x2c0] sm:$0xff] %v2147
      %2172 = vst [vmem:[#allocation5 + $0x2c8] sm:$0xff] %v2148
      %2173 = vst [vmem:[#allocation5 + $0x2d0] sm:$0xff] %v2149
      %2174 = vst [vmem:[#allocation5 + $0x2d8] sm:$0xff] %v2150
      %2175 = vst [vmem:[#allocation5 + $0x2e0] sm:$0xff] %v2151
      %2176 = vst [vmem:[#allocation5 + $0x2e8] sm:$0xff] %v2152
      %2177 = vst [vmem:[#allocation5 + $0x2f0] sm:$0xff] %v2153
      %2178 = vst [vmem:[#allocation5 + $0x2f8] sm:$0xff] %v2154
      %v2179 = vld [vmem:[#allocation2] sm:$0xff]
      %v2180 = vld [vmem:[#allocation2 + $0x8] sm:$0xff]
      %v2181 = vld [vmem:[#allocation2 + $0x10] sm:$0xff]
      %v2182 = vld [vmem:[#allocation2 + $0x18] sm:$0xff]
      %v2183 = vld [vmem:[#allocation2 + $0x20] sm:$0xff]
      %v2184 = vld [vmem:[#allocation2 + $0x28] sm:$0xff]
      %v2185 = vld [vmem:[#allocation2 + $0x30] sm:$0xff]
      %v2186 = vld [vmem:[#allocation2 + $0x38] sm:$0xff]
      %v2187 = vld [vmem:[#allocation2 + $0x40] sm:$0xff]
      %v2188 = vld [vmem:[#allocation2 + $0x48] sm:$0xff]
      %v2189 = vld [vmem:[#allocation2 + $0x50] sm:$0xff]
      %v2190 = vld [vmem:[#allocation2 + $0x58] sm:$0xff]
      %v2191 = vld [vmem:[#allocation2 + $0x60] sm:$0xff]
      %v2192 = vld [vmem:[#allocation2 + $0x68] sm:$0xff]
      %v2193 = vld [vmem:[#allocation2 + $0x70] sm:$0xff]
      %v2194 = vld [vmem:[#allocation2 + $0x78] sm:$0xff]
      %2211 = vrot.lane.b32.xlu0 %v2179, 53
      %v2212 = vpop.permute.xlu0 %2211
      %2213 = vrot.lane.b32.xlu0 %v2180, 53
      %v2214 = vpop.permute.xlu0 %2213
      %2215 = vrot.lane.b32.xlu0 %v2181, 53
      %v2216 = vpop.permute.xlu0 %2215
      %2217 = vrot.lane.b32.xlu0 %v2182, 53
      %v2218 = vpop.permute.xlu0 %2217
      %2219 = vrot.lane.b32.xlu0 %v2183, 53
      %v2220 = vpop.permute.xlu0 %2219
      %2221 = vrot.lane.b32.xlu0 %v2184, 53
      %v2222 = vpop.permute.xlu0 %2221
      %2223 = vrot.lane.b32.xlu0 %v2185, 53
      %v2224 = vpop.permute.xlu0 %2223
      %2225 = vrot.lane.b32.xlu0 %v2186, 53
      %v2226 = vpop.permute.xlu0 %2225
      %2227 = vrot.lane.b32.xlu0 %v2187, 53
      %v2228 = vpop.permute.xlu0 %2227
      %2229 = vrot.lane.b32.xlu0 %v2188, 53
      %v2230 = vpop.permute.xlu0 %2229
      %2231 = vrot.lane.b32.xlu0 %v2189, 53
      %v2232 = vpop.permute.xlu0 %2231
      %2233 = vrot.lane.b32.xlu0 %v2190, 53
      %v2234 = vpop.permute.xlu0 %2233
      %2235 = vrot.lane.b32.xlu0 %v2191, 53
      %v2236 = vpop.permute.xlu0 %2235
      %2237 = vrot.lane.b32.xlu0 %v2192, 53
      %v2238 = vpop.permute.xlu0 %2237
      %2239 = vrot.lane.b32.xlu0 %v2193, 53
      %v2240 = vpop.permute.xlu0 %2239
      %2241 = vrot.lane.b32.xlu0 %v2194, 53
      %v2242 = vpop.permute.xlu0 %2241
      %v2243 = vsel %vm818, %v2212, %v2214
      %v2244 = vsel %vm818, %v2214, %v2216
      %v2245 = vsel %vm818, %v2216, %v2218
      %v2246 = vsel %vm818, %v2220, %v2222
      %v2247 = vsel %vm818, %v2222, %v2224
      %v2248 = vsel %vm818, %v2224, %v2226
      %v2249 = vsel %vm818, %v2228, %v2230
      %v2250 = vsel %vm818, %v2230, %v2232
      %v2251 = vsel %vm818, %v2232, %v2234
      %v2252 = vsel %vm818, %v2236, %v2238
      %v2253 = vsel %vm818, %v2238, %v2240
      %v2254 = vsel %vm818, %v2240, %v2242
      %2267 = vst [vmem:[#allocation5 + $0x300] sm:$0xff] %v2243
      %2268 = vst [vmem:[#allocation5 + $0x308] sm:$0xff] %v2244
      %2269 = vst [vmem:[#allocation5 + $0x310] sm:$0xff] %v2245
      %2270 = vst [vmem:[#allocation5 + $0x318] sm:$0xff] %v2246
      %2271 = vst [vmem:[#allocation5 + $0x320] sm:$0xff] %v2247
      %2272 = vst [vmem:[#allocation5 + $0x328] sm:$0xff] %v2248
      %2273 = vst [vmem:[#allocation5 + $0x330] sm:$0xff] %v2249
      %2274 = vst [vmem:[#allocation5 + $0x338] sm:$0xff] %v2250
      %2275 = vst [vmem:[#allocation5 + $0x340] sm:$0xff] %v2251
      %2276 = vst [vmem:[#allocation5 + $0x348] sm:$0xff] %v2252
      %2277 = vst [vmem:[#allocation5 + $0x350] sm:$0xff] %v2253
      %2278 = vst [vmem:[#allocation5 + $0x358] sm:$0xff] %v2254
      %v2279 = vld [vmem:[%s3] sm:$0xff]
      %v2280 = vld [vmem:[%s3 + $0x8] sm:$0xff]
      %v2281 = vld [vmem:[%s3 + $0x10] sm:$0xff]
      %v2282 = vld [vmem:[%s3 + $0x18] sm:$0xff]
      %v2283 = vld [vmem:[%s3 + $0x20] sm:$0xff]
      %v2284 = vld [vmem:[%s3 + $0x28] sm:$0xff]
      %v2285 = vld [vmem:[#allocation5] sm:$0xff]
      %v2286 = vld [vmem:[#allocation5 + $0x8] sm:$0xff]
      %v2287 = vld [vmem:[#allocation5 + $0x10] sm:$0xff]
      %v2288 = vld [vmem:[#allocation5 + $0x18] sm:$0xff]
      %v2289 = vld [vmem:[#allocation5 + $0x20] sm:$0xff]
      %v2290 = vld [vmem:[#allocation5 + $0x28] sm:$0xff]
      %v2291 = vld [vmem:[#allocation5 + $0x30] sm:$0xff]
      %v2292 = vld [vmem:[#allocation5 + $0x38] sm:$0xff]
      %v2293 = vld [vmem:[#allocation5 + $0x40] sm:$0xff]
      %v2294 = vld [vmem:[#allocation5 + $0x48] sm:$0xff]
      %v2295 = vld [vmem:[#allocation5 + $0x50] sm:$0xff]
      %v2296 = vld [vmem:[#allocation5 + $0x58] sm:$0xff]
      %v2297 = vld [vmem:[#allocation5 + $0x60] sm:$0xff]
      %v2298 = vld [vmem:[#allocation5 + $0x68] sm:$0xff]
      %v2299 = vld [vmem:[#allocation5 + $0x70] sm:$0xff]
      %v2300 = vld [vmem:[#allocation5 + $0x78] sm:$0xff]
      %v2301 = vld [vmem:[#allocation5 + $0x80] sm:$0xff]
      %v2302 = vld [vmem:[#allocation5 + $0x88] sm:$0xff]
      %v2303 = vld [vmem:[#allocation5 + $0x90] sm:$0xff]
      %v2304 = vld [vmem:[#allocation5 + $0x98] sm:$0xff]
      %v2305 = vld [vmem:[#allocation5 + $0xa0] sm:$0xff]
      %v2306 = vld [vmem:[#allocation5 + $0xa8] sm:$0xff]
      %v2307 = vld [vmem:[#allocation5 + $0xb0] sm:$0xff]
      %v2308 = vld [vmem:[#allocation5 + $0xb8] sm:$0xff]
      %v2309 = vld [vmem:[#allocation5 + $0xc0] sm:$0xff]
      %v2310 = vld [vmem:[#allocation5 + $0xc8] sm:$0xff]
      %v2311 = vld [vmem:[#allocation5 + $0xd0] sm:$0xff]
      %v2312 = vld [vmem:[#allocation5 + $0xd8] sm:$0xff]
      %v2313 = vld [vmem:[#allocation5 + $0xe0] sm:$0xff]
      %v2314 = vld [vmem:[#allocation5 + $0xe8] sm:$0xff]
      %v2315 = vld [vmem:[#allocation5 + $0xf0] sm:$0xff]
      %v2316 = vld [vmem:[#allocation5 + $0xf8] sm:$0xff]
      %v2317 = vld [vmem:[#allocation5 + $0x100] sm:$0xff]
      %v2318 = vld [vmem:[#allocation5 + $0x108] sm:$0xff]
      %v2319 = vld [vmem:[#allocation5 + $0x110] sm:$0xff]
      %v2320 = vld [vmem:[#allocation5 + $0x118] sm:$0xff]
      %v2321 = vld [vmem:[#allocation5 + $0x120] sm:$0xff]
      %v2322 = vld [vmem:[#allocation5 + $0x128] sm:$0xff]
      %v2323 = vld [vmem:[#allocation5 + $0x130] sm:$0xff]
      %v2324 = vld [vmem:[#allocation5 + $0x138] sm:$0xff]
      %v2325 = vld [vmem:[#allocation5 + $0x140] sm:$0xff]
      %v2326 = vld [vmem:[#allocation5 + $0x148] sm:$0xff]
      %v2327 = vld [vmem:[#allocation5 + $0x150] sm:$0xff]
      %v2328 = vld [vmem:[#allocation5 + $0x158] sm:$0xff]
      %v2329 = vld [vmem:[#allocation5 + $0x160] sm:$0xff]
      %v2330 = vld [vmem:[#allocation5 + $0x168] sm:$0xff]
      %v2331 = vld [vmem:[#allocation5 + $0x170] sm:$0xff]
      %v2332 = vld [vmem:[#allocation5 + $0x178] sm:$0xff]
      %v2333 = vld [vmem:[#allocation5 + $0x180] sm:$0xff]
      %v2334 = vld [vmem:[#allocation5 + $0x188] sm:$0xff]
      %v2335 = vld [vmem:[#allocation5 + $0x190] sm:$0xff]
      %v2336 = vld [vmem:[#allocation5 + $0x198] sm:$0xff]
      %v2337 = vld [vmem:[#allocation5 + $0x1a0] sm:$0xff]
      %v2338 = vld [vmem:[#allocation5 + $0x1a8] sm:$0xff]
      %v2339 = vld [vmem:[#allocation5 + $0x1b0] sm:$0xff]
      %v2340 = vld [vmem:[#allocation5 + $0x1b8] sm:$0xff]
      %v2341 = vld [vmem:[#allocation5 + $0x1c0] sm:$0xff]
      %v2342 = vld [vmem:[#allocation5 + $0x1c8] sm:$0xff]
      %v2343 = vld [vmem:[#allocation5 + $0x1d0] sm:$0xff]
      %v2344 = vld [vmem:[#allocation5 + $0x1d8] sm:$0xff]
      %v2345 = vld [vmem:[#allocation5 + $0x1e0] sm:$0xff]
      %v2346 = vld [vmem:[#allocation5 + $0x1e8] sm:$0xff]
      %v2347 = vld [vmem:[#allocation5 + $0x1f0] sm:$0xff]
      %v2348 = vld [vmem:[#allocation5 + $0x1f8] sm:$0xff]
      %v2349 = vld [vmem:[#allocation5 + $0x200] sm:$0xff]
      %v2350 = vld [vmem:[#allocation5 + $0x208] sm:$0xff]
      %v2351 = vld [vmem:[#allocation5 + $0x210] sm:$0xff]
      %v2352 = vld [vmem:[#allocation5 + $0x218] sm:$0xff]
      %v2353 = vld [vmem:[#allocation5 + $0x220] sm:$0xff]
      %v2354 = vld [vmem:[#allocation5 + $0x228] sm:$0xff]
      %v2355 = vld [vmem:[#allocation5 + $0x230] sm:$0xff]
      %v2356 = vld [vmem:[#allocation5 + $0x238] sm:$0xff]
      %v2357 = vld [vmem:[#allocation5 + $0x240] sm:$0xff]
      %v2358 = vld [vmem:[#allocation5 + $0x248] sm:$0xff]
      %v2359 = vld [vmem:[#allocation5 + $0x250] sm:$0xff]
      %v2360 = vld [vmem:[#allocation5 + $0x258] sm:$0xff]
      %v2361 = vld [vmem:[#allocation5 + $0x260] sm:$0xff]
      %v2362 = vld [vmem:[#allocation5 + $0x268] sm:$0xff]
      %v2363 = vld [vmem:[#allocation5 + $0x270] sm:$0xff]
      %v2364 = vld [vmem:[#allocation5 + $0x278] sm:$0xff]
      %v2365 = vld [vmem:[#allocation5 + $0x280] sm:$0xff]
      %v2366 = vld [vmem:[#allocation5 + $0x288] sm:$0xff]
      %v2367 = vld [vmem:[#allocation5 + $0x290] sm:$0xff]
      %v2368 = vld [vmem:[#allocation5 + $0x298] sm:$0xff]
      %v2369 = vld [vmem:[#allocation5 + $0x2a0] sm:$0xff]
      %v2370 = vld [vmem:[#allocation5 + $0x2a8] sm:$0xff]
      %v2371 = vld [vmem:[#allocation5 + $0x2b0] sm:$0xff]
      %v2372 = vld [vmem:[#allocation5 + $0x2b8] sm:$0xff]
      %v2373 = vld [vmem:[#allocation5 + $0x2c0] sm:$0xff]
      %v2374 = vld [vmem:[#allocation5 + $0x2c8] sm:$0xff]
      %v2375 = vld [vmem:[#allocation5 + $0x2d0] sm:$0xff]
      %v2376 = vld [vmem:[#allocation5 + $0x2d8] sm:$0xff]
      %v2377 = vld [vmem:[#allocation5 + $0x2e0] sm:$0xff]
      %v2378 = vld [vmem:[#allocation5 + $0x2e8] sm:$0xff]
      %v2379 = vld [vmem:[#allocation5 + $0x2f0] sm:$0xff]
      %v2380 = vld [vmem:[#allocation5 + $0x2f8] sm:$0xff]
      %v2381 = vld [vmem:[#allocation5 + $0x300] sm:$0xff]
      %v2382 = vld [vmem:[#allocation5 + $0x308] sm:$0xff]
      %v2383 = vld [vmem:[#allocation5 + $0x310] sm:$0xff]
      %v2384 = vld [vmem:[#allocation5 + $0x318] sm:$0xff]
      %v2385 = vld [vmem:[#allocation5 + $0x320] sm:$0xff]
      %v2386 = vld [vmem:[#allocation5 + $0x328] sm:$0xff]
      %v2387 = vld [vmem:[#allocation5 + $0x330] sm:$0xff]
      %v2388 = vld [vmem:[#allocation5 + $0x338] sm:$0xff]
      %v2389 = vld [vmem:[#allocation5 + $0x340] sm:$0xff]
      %v2390 = vld [vmem:[#allocation5 + $0x348] sm:$0xff]
      %v2391 = vld [vmem:[#allocation5 + $0x350] sm:$0xff]
      %v2392 = vld [vmem:[#allocation5 + $0x358] sm:$0xff]
      %v2393 = vld [vmem:[%s4] sm:$0xff]
      %v2394 = vld [vmem:[%s4 + $0x8] sm:$0xff]
      %2396 = vset.pattern.permute.xlu0 0
      %2397 = vperm.xlu0 %2396, %v2393
      %v2398 = vpop.permute.xlu0 %2397
      %2401 = vset.pattern.permute.xlu0 0
      %2402 = vperm.xlu0 %2401, %v2394
      %v2403 = vpop.permute.xlu0 %2402
      %v2406 = vsel %vm870, %v2281, 0
      %v2409 = vsel %vm870, %v2284, 0
      %2411 = vmatprep.subr.mxu0 %v2286
      %2412 = vmatpush1.msra.mxu0 %v2285
      %2413 = vmatprep.subr.mxu0 %v2289
      %2414 = vmatpush1.msra.mxu0 %v2288
      %2415 = vmatprep.subr.mxu0 %v2292
      %2416 = vmatpush1.msra.mxu0 %v2291
      %2417 = vmatprep.subr.mxu0 %v2295
      %2418 = vmatpush1.msra.mxu0 %v2294
      %2419 = vmatprep.subr.mxu0 %v2298
      %2420 = vmatpush1.msra.mxu0 %v2297
      %2421 = vmatprep.subr.mxu0 %v2301
      %2422 = vmatpush1.msra.mxu0 %v2300
      %2423 = vmatprep.subr.mxu0 %v2304
      %2424 = vmatpush1.msra.mxu0 %v2303
      %2425 = vmatprep.subr.mxu0 %v2307
      %2426 = vmatpush1.msra.mxu0 %v2306
      %2427 = vmatprep.subr.mxu0 %v2310
      %2428 = vmatpush1.msra.mxu0 %v2309
      %2429 = vmatprep.subr.mxu0 %v2313
      %2430 = vmatpush1.msra.mxu0 %v2312
      %2431 = vmatprep.subr.mxu0 %v2316
      %2432 = vmatpush1.msra.mxu0 %v2315
      %2433 = vmatprep.subr.mxu0 %v2319
      %2434 = vmatpush1.msra.mxu0 %v2318
      %2435 = vmatprep.subr.mxu0 %v2322
      %2436 = vmatpush1.msra.mxu0 %v2321
      %2437 = vmatprep.subr.mxu0 %v2325
      %2438 = vmatpush1.msra.mxu0 %v2324
      %2439 = vmatprep.subr.mxu0 %v2328
      %2440 = vmatpush1.msra.mxu0 %v2327
      %2441 = vmatprep.subr.mxu0 %v2331
      %2442 = vmatpush1.msra.mxu0 %v2330
      %2443 = vmatprep.subr.mxu0 %v2334
      %2444 = vmatpush1.msra.mxu0 %v2333
      %2445 = vmatprep.subr.mxu0 %v2337
      %2446 = vmatpush1.msra.mxu0 %v2336
      %2447 = vmatprep.subr.mxu0 %v2340
      %2448 = vmatpush1.msra.mxu0 %v2339
      %2449 = vmatprep.subr.mxu0 %v2343
      %2450 = vmatpush1.msra.mxu0 %v2342
      %2451 = vmatprep.subr.mxu0 %v2346
      %2452 = vmatpush1.msra.mxu0 %v2345
      %2453 = vmatprep.subr.mxu0 %v2349
      %2454 = vmatpush1.msra.mxu0 %v2348
      %2455 = vmatprep.subr.mxu0 %v2352
      %2456 = vmatpush1.msra.mxu0 %v2351
      %2457 = vmatprep.subr.mxu0 %v2355
      %2458 = vmatpush1.msra.mxu0 %v2354
      %2459 = vmatprep.subr.mxu0 %v2358
      %2460 = vmatpush1.msra.mxu0 %v2357
      %2461 = vmatprep.subr.mxu0 %v2361
      %2462 = vmatpush1.msra.mxu0 %v2360
      %2463 = vmatprep.subr.mxu0 %v2364
      %2464 = vmatpush1.msra.mxu0 %v2363
      %2465 = vmatprep.subr.mxu0 %v2367
      %2466 = vmatpush1.msra.mxu0 %v2366
      %2467 = vmatprep.subr.mxu0 %v2370
      %2468 = vmatpush1.msra.mxu0 %v2369
      %2469 = vmatprep.subr.mxu0 %v2373
      %2470 = vmatpush1.msra.mxu0 %v2372
      %2471 = vmatprep.subr.mxu0 %v2376
      %2472 = vmatpush1.msra.mxu0 %v2375
      %2473 = vmatprep.subr.mxu0 %v2379
      %2474 = vmatpush1.msra.mxu0 %v2378
      %2475 = vmatprep.mubr.f32.mxu0 %v2280
      %2476 = vmatmul.mubr.f32.gmra.mrb[0].mxu0 %v2279
      %v2477 = vpop.f32.mrb[0].mxu0
      %v2478 = vadd.f32 %v2398, %v2477
      %v2479 = vpop.f32.mrb[0].mxu0
      %v2480 = vadd.f32 %v2398, %v2479
      %2481 = vmatprep.mubr.f32.mxu0 %v2283
      %2482 = vmatmul.mubr.f32.gmra.mrb[0].mxu0 %v2282
      %v2483 = vpop.f32.mrb[0].mxu0
      %v2484 = vadd.f32 %v2403, %v2483
      %v2485 = vpop.f32.mrb[0].mxu0
      %v2486 = vadd.f32 %v2403, %v2485
      %2487 = vdwg.mxu0
      %2488 = vmatprep.subr.mxu0 %v2382
      %2489 = vmatpush1.msra.mxu0 %v2381
      %2490 = vmatprep.subr.mxu0 %v2385
      %2491 = vmatpush1.msra.mxu0 %v2384
      %2492 = vmatprep.subr.mxu0 %v2388
      %2493 = vmatpush1.msra.mxu0 %v2387
      %2494 = vmatprep.subr.mxu0 %v2391
      %2495 = vmatpush1.msra.mxu0 %v2390
      %2496 = vmatprep.subr.mxu0 0.0
      %2497 = vmatpush1.msra.mxu0 0.0
      %2498 = vmatprep.subr.mxu0 0.0
      %2499 = vmatpush1.msra.mxu0 0.0
      %2500 = vmatprep.subr.mxu0 0.0
      %2501 = vmatpush1.msra.mxu0 0.0
      %2502 = vmatprep.subr.mxu0 0.0
      %2503 = vmatpush1.msra.mxu0 0.0
      %2504 = vmatprep.subr.mxu0 0.0
      %2505 = vmatpush1.msra.mxu0 0.0
      %2506 = vmatprep.subr.mxu0 0.0
      %2507 = vmatpush1.msra.mxu0 0.0
      %2508 = vmatprep.subr.mxu0 0.0
      %2509 = vmatpush1.msra.mxu0 0.0
      %2510 = vmatprep.subr.mxu0 0.0
      %2511 = vmatpush1.msra.mxu0 0.0
      %2512 = vmatprep.subr.mxu0 0.0
      %2513 = vmatpush1.msra.mxu0 0.0
      %2514 = vmatprep.subr.mxu0 0.0
      %2515 = vmatpush1.msra.mxu0 0.0
      %2516 = vmatprep.subr.mxu0 0.0
      %2517 = vmatpush1.msra.mxu0 0.0
      %2518 = vmatprep.subr.mxu0 0.0
      %2519 = vmatpush1.msra.mxu0 0.0
      %2520 = vmatprep.subr.mxu0 0.0
      %2521 = vmatpush1.msra.mxu0 0.0
      %2522 = vmatprep.subr.mxu0 0.0
      %2523 = vmatpush1.msra.mxu0 0.0
      %2524 = vmatprep.subr.mxu0 0.0
      %2525 = vmatpush1.msra.mxu0 0.0
      %2526 = vmatprep.subr.mxu0 0.0
      %2527 = vmatpush1.msra.mxu0 0.0
      %2528 = vmatprep.subr.mxu0 0.0
      %2529 = vmatpush1.msra.mxu0 0.0
      %2530 = vmatprep.subr.mxu0 0.0
      %2531 = vmatpush1.msra.mxu0 0.0
      %2532 = vmatprep.subr.mxu0 0.0
      %2533 = vmatpush1.msra.mxu0 0.0
      %2534 = vmatprep.subr.mxu0 0.0
      %2535 = vmatpush1.msra.mxu0 0.0
      %2536 = vmatprep.subr.mxu0 0.0
      %2537 = vmatpush1.msra.mxu0 0.0
      %2538 = vmatprep.subr.mxu0 0.0
      %2539 = vmatpush1.msra.mxu0 0.0
      %2540 = vmatprep.subr.mxu0 0.0
      %2541 = vmatpush1.msra.mxu0 0.0
      %2542 = vmatprep.subr.mxu0 0.0
      %2543 = vmatpush1.msra.mxu0 0.0
      %2544 = vmatprep.subr.mxu0 0.0
      %2545 = vmatpush1.msra.mxu0 0.0
      %2546 = vmatprep.subr.mxu0 0.0
      %2547 = vmatpush1.msra.mxu0 0.0
      %2548 = vmatprep.subr.mxu0 0.0
      %2549 = vmatpush1.msra.mxu0 0.0
      %2550 = vmatprep.subr.mxu0 0.0
      %2551 = vmatpush1.msra.mxu0 0.0
      %2552 = vmatprep.mubr.f32.mxu0 0.0
      %2553 = vmatmul.mubr.f32.gmra.mrb[0].mxu0 %v2406
      %v2554 = vpop.f32.mrb[0].mxu0
      %v2555 = vadd.f32 %v2478, %v2554
      %v2556 = vpop.f32.mrb[0].mxu0
      %v2557 = vadd.f32 %v2480, %v2556
      %2558 = vmatprep.mubr.f32.mxu0 0.0
      %2559 = vmatmul.mubr.f32.gmra.mrb[0].mxu0 %v2409
      %v2560 = vpop.f32.mrb[0].mxu0
      %v2561 = vadd.f32 %v2484, %v2560
      %v2562 = vpop.f32.mrb[0].mxu0
      %v2563 = vadd.f32 %v2486, %v2562
      %2564 = vdwg.mxu0
      %2565 = vmatprep.subr.mxu0 0.0
      %2566 = vmatpush1.msra.mxu0 %v2287
      %2567 = vmatprep.subr.mxu0 0.0
      %2568 = vmatpush1.msra.mxu0 %v2290
      %2569 = vmatprep.subr.mxu0 0.0
      %2570 = vmatpush1.msra.mxu0 %v2293
      %2571 = vmatprep.subr.mxu0 0.0
      %2572 = vmatpush1.msra.mxu0 %v2296
      %2573 = vmatprep.subr.mxu0 0.0
      %2574 = vmatpush1.msra.mxu0 %v2299
      %2575 = vmatprep.subr.mxu0 0.0
      %2576 = vmatpush1.msra.mxu0 %v2302
      %2577 = vmatprep.subr.mxu0 0.0
      %2578 = vmatpush1.msra.mxu0 %v2305
      %2579 = vmatprep.subr.mxu0 0.0
      %2580 = vmatpush1.msra.mxu0 %v2308
      %2581 = vmatprep.subr.mxu0 0.0
      %2582 = vmatpush1.msra.mxu0 %v2311
      %2583 = vmatprep.subr.mxu0 0.0
      %2584 = vmatpush1.msra.mxu0 %v2314
      %2585 = vmatprep.subr.mxu0 0.0
      %2586 = vmatpush1.msra.mxu0 %v2317
      %2587 = vmatprep.subr.mxu0 0.0
      %2588 = vmatpush1.msra.mxu0 %v2320
      %2589 = vmatprep.subr.mxu0 0.0
      %2590 = vmatpush1.msra.mxu0 %v2323
      %2591 = vmatprep.subr.mxu0 0.0
      %2592 = vmatpush1.msra.mxu0 %v2326
      %2593 = vmatprep.subr.mxu0 0.0
      %2594 = vmatpush1.msra.mxu0 %v2329
      %2595 = vmatprep.subr.mxu0 0.0
      %2596 = vmatpush1.msra.mxu0 %v2332
      %2597 = vmatprep.subr.mxu0 0.0
      %2598 = vmatpush1.msra.mxu0 %v2335
      %2599 = vmatprep.subr.mxu0 0.0
      %2600 = vmatpush1.msra.mxu0 %v2338
      %2601 = vmatprep.subr.mxu0 0.0
      %2602 = vmatpush1.msra.mxu0 %v2341
      %2603 = vmatprep.subr.mxu0 0.0
      %2604 = vmatpush1.msra.mxu0 %v2344
      %2605 = vmatprep.subr.mxu0 0.0
      %2606 = vmatpush1.msra.mxu0 %v2347
      %2607 = vmatprep.subr.mxu0 0.0
      %2608 = vmatpush1.msra.mxu0 %v2350
      %2609 = vmatprep.subr.mxu0 0.0
      %2610 = vmatpush1.msra.mxu0 %v2353
      %2611 = vmatprep.subr.mxu0 0.0
      %2612 = vmatpush1.msra.mxu0 %v2356
      %2613 = vmatprep.subr.mxu0 0.0
      %2614 = vmatpush1.msra.mxu0 %v2359
      %2615 = vmatprep.subr.mxu0 0.0
      %2616 = vmatpush1.msra.mxu0 %v2362
      %2617 = vmatprep.subr.mxu0 0.0
      %2618 = vmatpush1.msra.mxu0 %v2365
      %2619 = vmatprep.subr.mxu0 0.0
      %2620 = vmatpush1.msra.mxu0 %v2368
      %2621 = vmatprep.subr.mxu0 0.0
      %2622 = vmatpush1.msra.mxu0 %v2371
      %2623 = vmatprep.subr.mxu0 0.0
      %2624 = vmatpush1.msra.mxu0 %v2374
      %2625 = vmatprep.subr.mxu0 0.0
      %2626 = vmatpush1.msra.mxu0 %v2377
      %2627 = vmatprep.subr.mxu0 0.0
      %2628 = vmatpush1.msra.mxu0 %v2380
      %2629 = vmatprep.mubr.f32.mxu0 %v2280
      %2630 = vmatmul.mubr.f32.gmra.mrb[0].mxu0 %v2279
      %v2631 = vpop.f32.mrb[0].mxu0
      %v2632 = vadd.f32 %v2398, %v2631
      %v2633 = vpop.f32.mrb[0].mxu0
      %2634 = vmatprep.mubr.f32.mxu0 %v2283
      %2635 = vmatmul.mubr.f32.gmra.mrb[0].mxu0 %v2282
      %v2636 = vpop.f32.mrb[0].mxu0
      %v2637 = vadd.f32 %v2403, %v2636
      %v2638 = vpop.f32.mrb[0].mxu0
      %2639 = vdwg.mxu0
      %2640 = vmatprep.subr.mxu0 0.0
      %2641 = vmatpush1.msra.mxu0 %v2383
      %2642 = vmatprep.subr.mxu0 0.0
      %2643 = vmatpush1.msra.mxu0 %v2386
      %2644 = vmatprep.subr.mxu0 0.0
      %2645 = vmatpush1.msra.mxu0 %v2389
      %2646 = vmatprep.subr.mxu0 0.0
      %2647 = vmatpush1.msra.mxu0 %v2392
      %2648 = vmatprep.subr.mxu0 0.0
      %2649 = vmatpush1.msra.mxu0 0.0
      %2650 = vmatprep.subr.mxu0 0.0
      %2651 = vmatpush1.msra.mxu0 0.0
      %2652 = vmatprep.subr.mxu0 0.0
      %2653 = vmatpush1.msra.mxu0 0.0
      %2654 = vmatprep.subr.mxu0 0.0
      %2655 = vmatpush1.msra.mxu0 0.0
      %2656 = vmatprep.subr.mxu0 0.0
      %2657 = vmatpush1.msra.mxu0 0.0
      %2658 = vmatprep.subr.mxu0 0.0
      %2659 = vmatpush1.msra.mxu0 0.0
      %2660 = vmatprep.subr.mxu0 0.0
      %2661 = vmatpush1.msra.mxu0 0.0
      %2662 = vmatprep.subr.mxu0 0.0
      %2663 = vmatpush1.msra.mxu0 0.0
      %2664 = vmatprep.subr.mxu0 0.0
      %2665 = vmatpush1.msra.mxu0 0.0
      %2666 = vmatprep.subr.mxu0 0.0
      %2667 = vmatpush1.msra.mxu0 0.0
      %2668 = vmatprep.subr.mxu0 0.0
      %2669 = vmatpush1.msra.mxu0 0.0
      %2670 = vmatprep.subr.mxu0 0.0
      %2671 = vmatpush1.msra.mxu0 0.0
      %2672 = vmatprep.subr.mxu0 0.0
      %2673 = vmatpush1.msra.mxu0 0.0
      %2674 = vmatprep.subr.mxu0 0.0
      %2675 = vmatpush1.msra.mxu0 0.0
      %2676 = vmatprep.subr.mxu0 0.0
      %2677 = vmatpush1.msra.mxu0 0.0
      %2678 = vmatprep.subr.mxu0 0.0
      %2679 = vmatpush1.msra.mxu0 0.0
      %2680 = vmatprep.subr.mxu0 0.0
      %2681 = vmatpush1.msra.mxu0 0.0
      %2682 = vmatprep.subr.mxu0 0.0
      %2683 = vmatpush1.msra.mxu0 0.0
      %2684 = vmatprep.subr.mxu0 0.0
      %2685 = vmatpush1.msra.mxu0 0.0
      %2686 = vmatprep.subr.mxu0 0.0
      %2687 = vmatpush1.msra.mxu0 0.0
      %2688 = vmatprep.subr.mxu0 0.0
      %2689 = vmatpush1.msra.mxu0 0.0
      %2690 = vmatprep.subr.mxu0 0.0
      %2691 = vmatpush1.msra.mxu0 0.0
      %2692 = vmatprep.subr.mxu0 0.0
      %2693 = vmatpush1.msra.mxu0 0.0
      %2694 = vmatprep.subr.mxu0 0.0
      %2695 = vmatpush1.msra.mxu0 0.0
      %2696 = vmatprep.subr.mxu0 0.0
      %2697 = vmatpush1.msra.mxu0 0.0
      %2698 = vmatprep.subr.mxu0 0.0
      %2699 = vmatpush1.msra.mxu0 0.0
      %2700 = vmatprep.subr.mxu0 0.0
      %2701 = vmatpush1.msra.mxu0 0.0
      %2702 = vmatprep.subr.mxu0 0.0
      %2703 = vmatpush1.msra.mxu0 0.0
      %2704 = vmatprep.mubr.f32.mxu0 0.0
      %2705 = vmatmul.mubr.f32.gmra.mrb[0].mxu0 %v2406
      %v2706 = vpop.f32.mrb[0].mxu0
      %v2707 = vadd.f32 %v2632, %v2706
      %v2708 = vpop.f32.mrb[0].mxu0
      %2709 = vmatprep.mubr.f32.mxu0 0.0
      %2710 = vmatmul.mubr.f32.gmra.mrb[0].mxu0 %v2409
      %v2711 = vpop.f32.mrb[0].mxu0
      %v2712 = vadd.f32 %v2637, %v2711
      %v2713 = vpop.f32.mrb[0].mxu0
      %2714 = vdwg.mxu0
      %v2715 = vtanh.pop %v2555
      %v2716 = vtanh.pop %v2557
      %v2717 = vtanh.pop %v2707
      %v2718 = vtanh.pop %v2561
      %v2719 = vtanh.pop %v2563
      %v2720 = vtanh.pop %v2712
      %v2721 = vmul.f32 %v2715, %v337
      %v2722 = vmul.f32 %v2716, %v338
      %v2723 = vmul.f32 %v2717, %v339
      %v2724 = vmul.f32 %v2718, %v337
      %v2725 = vmul.f32 %v2719, %v338
      %v2726 = vmul.f32 %v2720, %v339
      %2733 = vrot.lane.b32.xlu0 %v2721, 50
      %v2734 = vpop.permute.xlu0 %2733
      %2735 = vrot.lane.b32.xlu0 %v2722, 50
      %v2736 = vpop.permute.xlu0 %2735
      %2737 = vrot.lane.b32.xlu0 %v2723, 50
      %v2738 = vpop.permute.xlu0 %2737
      %2739 = vrot.lane.b32.xlu0 %v2724, 50
      %v2740 = vpop.permute.xlu0 %2739
      %2741 = vrot.lane.b32.xlu0 %v2725, 50
      %v2742 = vpop.permute.xlu0 %2741
      %2743 = vrot.lane.b32.xlu0 %v2726, 50
      %v2744 = vpop.permute.xlu0 %2743
      %v2745 = vsel %vm340, %v2734, %v2736
      %v2746 = vsel %vm340, %v2736, %v2738
      %v2747 = vsel %vm340, %v2740, %v2742
      %v2748 = vsel %vm340, %v2742, %v2744
      %2757 = vst.msk [vmem:[#allocation3] sm:$0xff] %vm1362, %v2734
      %2758 = vst [vmem:[#allocation3 + $0x8] sm:$0xff] %v2745
      %2759 = vst [vmem:[#allocation3 + $0x10] sm:$0xff] %v2746
      %2760 = vst.msk [vmem:[#allocation3 + $0x18] sm:$0xff] %vm340, %v2738
      %2761 = vst.msk [vmem:[#allocation3 + $0x20] sm:$0xff] %vm1362, %v2740
      %2762 = vst [vmem:[#allocation3 + $0x28] sm:$0xff] %v2747
      %2763 = vst [vmem:[#allocation3 + $0x30] sm:$0xff] %v2748
      %2764 = vst.msk [vmem:[#allocation3 + $0x38] sm:$0xff] %vm340, %v2744
      %v2765 = vld [vmem:[#allocation3] sm:$0xff]
      %v2766 = vld [vmem:[#allocation3 + $0x8] sm:$0xff]
      %v2767 = vld [vmem:[#allocation3 + $0x10] sm:$0xff]
      %v2768 = vld [vmem:[#allocation3 + $0x18] sm:$0xff]
      %v2769 = vld [vmem:[#allocation3 + $0x20] sm:$0xff]
      %v2770 = vld [vmem:[#allocation3 + $0x28] sm:$0xff]
      %v2771 = vld [vmem:[#allocation3 + $0x30] sm:$0xff]
      %v2772 = vld [vmem:[#allocation3 + $0x38] sm:$0xff]
      %2781 = vrot.lane.b32.xlu0 %v2765, 103
      %v2782 = vpop.permute.xlu0 %2781
      %2783 = vrot.lane.b32.xlu0 %v2766, 103
      %v2784 = vpop.permute.xlu0 %2783
      %2785 = vrot.lane.b32.xlu0 %v2767, 103
      %v2786 = vpop.permute.xlu0 %2785
      %2787 = vrot.lane.b32.xlu0 %v2768, 103
      %v2788 = vpop.permute.xlu0 %2787
      %2789 = vrot.lane.b32.xlu0 %v2769, 103
      %v2790 = vpop.permute.xlu0 %2789
      %2791 = vrot.lane.b32.xlu0 %v2770, 103
      %v2792 = vpop.permute.xlu0 %2791
      %2793 = vrot.lane.b32.xlu0 %v2771, 103
      %v2794 = vpop.permute.xlu0 %2793
      %2795 = vrot.lane.b32.xlu0 %v2772, 103
      %v2796 = vpop.permute.xlu0 %2795
      %v2797 = vsel %vm506, %v2782, %v2784
      %v2798 = vsel %vm506, %v2784, %v2786
      %v2799 = vsel %vm506, %v2786, %v2788
      %v2800 = vsel %vm506, %v2790, %v2792
      %v2801 = vsel %vm506, %v2792, %v2794
      %v2802 = vsel %vm506, %v2794, %v2796
      %2809 = vst [vmem:[#allocation6] sm:$0xff] %v2797
      %2810 = vst [vmem:[#allocation6 + $0x8] sm:$0xff] %v2798
      %2811 = vst [vmem:[#allocation6 + $0x10] sm:$0xff] %v2799
      %2812 = vst [vmem:[#allocation6 + $0x18] sm:$0xff] %v2800
      %2813 = vst [vmem:[#allocation6 + $0x20] sm:$0xff] %v2801
      %2814 = vst [vmem:[#allocation6 + $0x28] sm:$0xff] %v2802
      %v2815 = vld [vmem:[#allocation3] sm:$0xff]
      %v2816 = vld [vmem:[#allocation3 + $0x8] sm:$0xff]
      %v2817 = vld [vmem:[#allocation3 + $0x10] sm:$0xff]
      %v2818 = vld [vmem:[#allocation3 + $0x18] sm:$0xff]
      %v2819 = vld [vmem:[#allocation3 + $0x20] sm:$0xff]
      %v2820 = vld [vmem:[#allocation3 + $0x28] sm:$0xff]
      %v2821 = vld [vmem:[#allocation3 + $0x30] sm:$0xff]
      %v2822 = vld [vmem:[#allocation3 + $0x38] sm:$0xff]
      %2831 = vrot.lane.b32.xlu0 %v2815, 102
      %v2832 = vpop.permute.xlu0 %2831
      %2833 = vrot.lane.b32.xlu0 %v2816, 102
      %v2834 = vpop.permute.xlu0 %2833
      %2835 = vrot.lane.b32.xlu0 %v2817, 102
      %v2836 = vpop.permute.xlu0 %2835
      %2837 = vrot.lane.b32.xlu0 %v2818, 102
      %v2838 = vpop.permute.xlu0 %2837
      %2839 = vrot.lane.b32.xlu0 %v2819, 102
      %v2840 = vpop.permute.xlu0 %2839
      %2841 = vrot.lane.b32.xlu0 %v2820, 102
      %v2842 = vpop.permute.xlu0 %2841
      %2843 = vrot.lane.b32.xlu0 %v2821, 102
      %v2844 = vpop.permute.xlu0 %2843
      %2845 = vrot.lane.b32.xlu0 %v2822, 102
      %v2846 = vpop.permute.xlu0 %2845
      %v2847 = vsel %vm532, %v2832, %v2834
      %v2848 = vsel %vm532, %v2834, %v2836
      %v2849 = vsel %vm532, %v2836, %v2838
      %v2850 = vsel %vm532, %v2840, %v2842
      %v2851 = vsel %vm532, %v2842, %v2844
      %v2852 = vsel %vm532, %v2844, %v2846
      %2859 = vst [vmem:[#allocation6 + $0x30] sm:$0xff] %v2847
      %2860 = vst [vmem:[#allocation6 + $0x38] sm:$0xff] %v2848
      %2861 = vst [vmem:[#allocation6 + $0x40] sm:$0xff] %v2849
      %2862 = vst [vmem:[#allocation6 + $0x48] sm:$0xff] %v2850
      %2863 = vst [vmem:[#allocation6 + $0x50] sm:$0xff] %v2851
      %2864 = vst [vmem:[#allocation6 + $0x58] sm:$0xff] %v2852
      %v2865 = vld [vmem:[#allocation3] sm:$0xff]
      %v2866 = vld [vmem:[#allocation3 + $0x8] sm:$0xff]
      %v2867 = vld [vmem:[#allocation3 + $0x10] sm:$0xff]
      %v2868 = vld [vmem:[#allocation3 + $0x18] sm:$0xff]
      %v2869 = vld [vmem:[#allocation3 + $0x20] sm:$0xff]
      %v2870 = vld [vmem:[#allocation3 + $0x28] sm:$0xff]
      %v2871 = vld [vmem:[#allocation3 + $0x30] sm:$0xff]
      %v2872 = vld [vmem:[#allocation3 + $0x38] sm:$0xff]
      %2881 = vrot.lane.b32.xlu0 %v2865, 101
      %v2882 = vpop.permute.xlu0 %2881
      %2883 = vrot.lane.b32.xlu0 %v2866, 101
      %v2884 = vpop.permute.xlu0 %2883
      %2885 = vrot.lane.b32.xlu0 %v2867, 101
      %v2886 = vpop.permute.xlu0 %2885
      %2887 = vrot.lane.b32.xlu0 %v2868, 101
      %v2888 = vpop.permute.xlu0 %2887
      %2889 = vrot.lane.b32.xlu0 %v2869, 101
      %v2890 = vpop.permute.xlu0 %2889
      %2891 = vrot.lane.b32.xlu0 %v2870, 101
      %v2892 = vpop.permute.xlu0 %2891
      %2893 = vrot.lane.b32.xlu0 %v2871, 101
      %v2894 = vpop.permute.xlu0 %2893
      %2895 = vrot.lane.b32.xlu0 %v2872, 101
      %v2896 = vpop.permute.xlu0 %2895
      %v2897 = vsel %vm558, %v2882, %v2884
      %v2898 = vsel %vm558, %v2884, %v2886
      %v2899 = vsel %vm558, %v2886, %v2888
      %v2900 = vsel %vm558, %v2890, %v2892
      %v2901 = vsel %vm558, %v2892, %v2894
      %v2902 = vsel %vm558, %v2894, %v2896
      %2909 = vst [vmem:[#allocation6 + $0x60] sm:$0xff] %v2897
      %2910 = vst [vmem:[#allocation6 + $0x68] sm:$0xff] %v2898
      %2911 = vst [vmem:[#allocation6 + $0x70] sm:$0xff] %v2899
      %2912 = vst [vmem:[#allocation6 + $0x78] sm:$0xff] %v2900
      %2913 = vst [vmem:[#allocation6 + $0x80] sm:$0xff] %v2901
      %2914 = vst [vmem:[#allocation6 + $0x88] sm:$0xff] %v2902
      %v2915 = vld [vmem:[#allocation3] sm:$0xff]
      %v2916 = vld [vmem:[#allocation3 + $0x8] sm:$0xff]
      %v2917 = vld [vmem:[#allocation3 + $0x10] sm:$0xff]
      %v2918 = vld [vmem:[#allocation3 + $0x18] sm:$0xff]
      %v2919 = vld [vmem:[#allocation3 + $0x20] sm:$0xff]
      %v2920 = vld [vmem:[#allocation3 + $0x28] sm:$0xff]
      %v2921 = vld [vmem:[#allocation3 + $0x30] sm:$0xff]
      %v2922 = vld [vmem:[#allocation3 + $0x38] sm:$0xff]
      %2931 = vrot.lane.b32.xlu0 %v2915, 79
      %v2932 = vpop.permute.xlu0 %2931
      %2933 = vrot.lane.b32.xlu0 %v2916, 79
      %v2934 = vpop.permute.xlu0 %2933
      %2935 = vrot.lane.b32.xlu0 %v2917, 79
      %v2936 = vpop.permute.xlu0 %2935
      %2937 = vrot.lane.b32.xlu0 %v2918, 79
      %v2938 = vpop.permute.xlu0 %2937
      %2939 = vrot.lane.b32.xlu0 %v2919, 79
      %v2940 = vpop.permute.xlu0 %2939
      %2941 = vrot.lane.b32.xlu0 %v2920, 79
      %v2942 = vpop.permute.xlu0 %2941
      %2943 = vrot.lane.b32.xlu0 %v2921, 79
      %v2944 = vpop.permute.xlu0 %2943
      %2945 = vrot.lane.b32.xlu0 %v2922, 79
      %v2946 = vpop.permute.xlu0 %2945
      %v2947 = vsel %vm636, %v2932, %v2934
      %v2948 = vsel %vm636, %v2934, %v2936
      %v2949 = vsel %vm636, %v2936, %v2938
      %v2950 = vsel %vm636, %v2940, %v2942
      %v2951 = vsel %vm636, %v2942, %v2944
      %v2952 = vsel %vm636, %v2944, %v2946
      %2959 = vst [vmem:[#allocation6 + $0x90] sm:$0xff] %v2947
      %2960 = vst [vmem:[#allocation6 + $0x98] sm:$0xff] %v2948
      %2961 = vst [vmem:[#allocation6 + $0xa0] sm:$0xff] %v2949
      %2962 = vst [vmem:[#allocation6 + $0xa8] sm:$0xff] %v2950
      %2963 = vst [vmem:[#allocation6 + $0xb0] sm:$0xff] %v2951
      %2964 = vst [vmem:[#allocation6 + $0xb8] sm:$0xff] %v2952
      %v2965 = vld [vmem:[#allocation3] sm:$0xff]
      %v2966 = vld [vmem:[#allocation3 + $0x8] sm:$0xff]
      %v2967 = vld [vmem:[#allocation3 + $0x10] sm:$0xff]
      %v2968 = vld [vmem:[#allocation3 + $0x18] sm:$0xff]
      %v2969 = vld [vmem:[#allocation3 + $0x20] sm:$0xff]
      %v2970 = vld [vmem:[#allocation3 + $0x28] sm:$0xff]
      %v2971 = vld [vmem:[#allocation3 + $0x30] sm:$0xff]
      %v2972 = vld [vmem:[#allocation3 + $0x38] sm:$0xff]
      %2981 = vrot.lane.b32.xlu0 %v2965, 78
      %v2982 = vpop.permute.xlu0 %2981
      %2983 = vrot.lane.b32.xlu0 %v2966, 78
      %v2984 = vpop.permute.xlu0 %2983
      %2985 = vrot.lane.b32.xlu0 %v2967, 78
      %v2986 = vpop.permute.xlu0 %2985
      %2987 = vrot.lane.b32.xlu0 %v2968, 78
      %v2988 = vpop.permute.xlu0 %2987
      %2989 = vrot.lane.b32.xlu0 %v2969, 78
      %v2990 = vpop.permute.xlu0 %2989
      %2991 = vrot.lane.b32.xlu0 %v2970, 78
      %v2992 = vpop.permute.xlu0 %2991
      %2993 = vrot.lane.b32.xlu0 %v2971, 78
      %v2994 = vpop.permute.xlu0 %2993
      %2995 = vrot.lane.b32.xlu0 %v2972, 78
      %v2996 = vpop.permute.xlu0 %2995
      %v2997 = vsel %vm662, %v2982, %v2984
      %v2998 = vsel %vm662, %v2984, %v2986
      %v2999 = vsel %vm662, %v2986, %v2988
      %v3000 = vsel %vm662, %v2990, %v2992
      %v3001 = vsel %vm662, %v2992, %v2994
      %v3002 = vsel %vm662, %v2994, %v2996
      %3009 = vst [vmem:[#allocation6 + $0xc0] sm:$0xff] %v2997
      %3010 = vst [vmem:[#allocation6 + $0xc8] sm:$0xff] %v2998
      %3011 = vst [vmem:[#allocation6 + $0xd0] sm:$0xff] %v2999
      %3012 = vst [vmem:[#allocation6 + $0xd8] sm:$0xff] %v3000
      %3013 = vst [vmem:[#allocation6 + $0xe0] sm:$0xff] %v3001
      %3014 = vst [vmem:[#allocation6 + $0xe8] sm:$0xff] %v3002
      %v3015 = vld [vmem:[#allocation3] sm:$0xff]
      %v3016 = vld [vmem:[#allocation3 + $0x8] sm:$0xff]
      %v3017 = vld [vmem:[#allocation3 + $0x10] sm:$0xff]
      %v3018 = vld [vmem:[#allocation3 + $0x18] sm:$0xff]
      %v3019 = vld [vmem:[#allocation3 + $0x20] sm:$0xff]
      %v3020 = vld [vmem:[#allocation3 + $0x28] sm:$0xff]
      %v3021 = vld [vmem:[#allocation3 + $0x30] sm:$0xff]
      %v3022 = vld [vmem:[#allocation3 + $0x38] sm:$0xff]
      %3031 = vrot.lane.b32.xlu0 %v3015, 77
      %v3032 = vpop.permute.xlu0 %3031
      %3033 = vrot.lane.b32.xlu0 %v3016, 77
      %v3034 = vpop.permute.xlu0 %3033
      %3035 = vrot.lane.b32.xlu0 %v3017, 77
      %v3036 = vpop.permute.xlu0 %3035
      %3037 = vrot.lane.b32.xlu0 %v3018, 77
      %v3038 = vpop.permute.xlu0 %3037
      %3039 = vrot.lane.b32.xlu0 %v3019, 77
      %v3040 = vpop.permute.xlu0 %3039
      %3041 = vrot.lane.b32.xlu0 %v3020, 77
      %v3042 = vpop.permute.xlu0 %3041
      %3043 = vrot.lane.b32.xlu0 %v3021, 77
      %v3044 = vpop.permute.xlu0 %3043
      %3045 = vrot.lane.b32.xlu0 %v3022, 77
      %v3046 = vpop.permute.xlu0 %3045
      %v3047 = vsel %vm688, %v3032, %v3034
      %v3048 = vsel %vm688, %v3034, %v3036
      %v3049 = vsel %vm688, %v3036, %v3038
      %v3050 = vsel %vm688, %v3040, %v3042
      %v3051 = vsel %vm688, %v3042, %v3044
      %v3052 = vsel %vm688, %v3044, %v3046
      %3059 = vst [vmem:[#allocation6 + $0xf0] sm:$0xff] %v3047
      %3060 = vst [vmem:[#allocation6 + $0xf8] sm:$0xff] %v3048
      %3061 = vst [vmem:[#allocation6 + $0x100] sm:$0xff] %v3049
      %3062 = vst [vmem:[#allocation6 + $0x108] sm:$0xff] %v3050
      %3063 = vst [vmem:[#allocation6 + $0x110] sm:$0xff] %v3051
      %3064 = vst [vmem:[#allocation6 + $0x118] sm:$0xff] %v3052
      %v3065 = vld [vmem:[#allocation3] sm:$0xff]
      %v3066 = vld [vmem:[#allocation3 + $0x8] sm:$0xff]
      %v3067 = vld [vmem:[#allocation3 + $0x10] sm:$0xff]
      %v3068 = vld [vmem:[#allocation3 + $0x18] sm:$0xff]
      %v3069 = vld [vmem:[#allocation3 + $0x20] sm:$0xff]
      %v3070 = vld [vmem:[#allocation3 + $0x28] sm:$0xff]
      %v3071 = vld [vmem:[#allocation3 + $0x30] sm:$0xff]
      %v3072 = vld [vmem:[#allocation3 + $0x38] sm:$0xff]
      %3081 = vrot.lane.b32.xlu0 %v3065, 55
      %v3082 = vpop.permute.xlu0 %3081
      %3083 = vrot.lane.b32.xlu0 %v3066, 55
      %v3084 = vpop.permute.xlu0 %3083
      %3085 = vrot.lane.b32.xlu0 %v3067, 55
      %v3086 = vpop.permute.xlu0 %3085
      %3087 = vrot.lane.b32.xlu0 %v3068, 55
      %v3088 = vpop.permute.xlu0 %3087
      %3089 = vrot.lane.b32.xlu0 %v3069, 55
      %v3090 = vpop.permute.xlu0 %3089
      %3091 = vrot.lane.b32.xlu0 %v3070, 55
      %v3092 = vpop.permute.xlu0 %3091
      %3093 = vrot.lane.b32.xlu0 %v3071, 55
      %v3094 = vpop.permute.xlu0 %3093
      %3095 = vrot.lane.b32.xlu0 %v3072, 55
      %v3096 = vpop.permute.xlu0 %3095
      %v3097 = vsel %vm766, %v3082, %v3084
      %v3098 = vsel %vm766, %v3084, %v3086
      %v3099 = vsel %vm766, %v3086, %v3088
      %v3100 = vsel %vm766, %v3090, %v3092
      %v3101 = vsel %vm766, %v3092, %v3094
      %v3102 = vsel %vm766, %v3094, %v3096
      %3109 = vst [vmem:[#allocation6 + $0x120] sm:$0xff] %v3097
      %3110 = vst [vmem:[#allocation6 + $0x128] sm:$0xff] %v3098
      %3111 = vst [vmem:[#allocation6 + $0x130] sm:$0xff] %v3099
      %3112 = vst [vmem:[#allocation6 + $0x138] sm:$0xff] %v3100
      %3113 = vst [vmem:[#allocation6 + $0x140] sm:$0xff] %v3101
      %3114 = vst [vmem:[#allocation6 + $0x148] sm:$0xff] %v3102
      %v3115 = vld [vmem:[#allocation3] sm:$0xff]
      %v3116 = vld [vmem:[#allocation3 + $0x8] sm:$0xff]
      %v3117 = vld [vmem:[#allocation3 + $0x10] sm:$0xff]
      %v3118 = vld [vmem:[#allocation3 + $0x18] sm:$0xff]
      %v3119 = vld [vmem:[#allocation3 + $0x20] sm:$0xff]
      %v3120 = vld [vmem:[#allocation3 + $0x28] sm:$0xff]
      %v3121 = vld [vmem:[#allocation3 + $0x30] sm:$0xff]
      %v3122 = vld [vmem:[#allocation3 + $0x38] sm:$0xff]
      %3131 = vrot.lane.b32.xlu0 %v3115, 54
      %v3132 = vpop.permute.xlu0 %3131
      %3133 = vrot.lane.b32.xlu0 %v3116, 54
      %v3134 = vpop.permute.xlu0 %3133
      %3135 = vrot.lane.b32.xlu0 %v3117, 54
      %v3136 = vpop.permute.xlu0 %3135
      %3137 = vrot.lane.b32.xlu0 %v3118, 54
      %v3138 = vpop.permute.xlu0 %3137
      %3139 = vrot.lane.b32.xlu0 %v3119, 54
      %v3140 = vpop.permute.xlu0 %3139
      %3141 = vrot.lane.b32.xlu0 %v3120, 54
      %v3142 = vpop.permute.xlu0 %3141
      %3143 = vrot.lane.b32.xlu0 %v3121, 54
      %v3144 = vpop.permute.xlu0 %3143
      %3145 = vrot.lane.b32.xlu0 %v3122, 54
      %v3146 = vpop.permute.xlu0 %3145
      %v3147 = vsel %vm792, %v3132, %v3134
      %v3148 = vsel %vm792, %v3134, %v3136
      %v3149 = vsel %vm792, %v3136, %v3138
      %v3150 = vsel %vm792, %v3140, %v3142
      %v3151 = vsel %vm792, %v3142, %v3144
      %v3152 = vsel %vm792, %v3144, %v3146
      %3159 = vst [vmem:[#allocation6 + $0x150] sm:$0xff] %v3147
      %3160 = vst [vmem:[#allocation6 + $0x158] sm:$0xff] %v3148
      %3161 = vst [vmem:[#allocation6 + $0x160] sm:$0xff] %v3149
      %3162 = vst [vmem:[#allocation6 + $0x168] sm:$0xff] %v3150
      %3163 = vst [vmem:[#allocation6 + $0x170] sm:$0xff] %v3151
      %3164 = vst [vmem:[#allocation6 + $0x178] sm:$0xff] %v3152
      %v3165 = vld [vmem:[#allocation3] sm:$0xff]
      %v3166 = vld [vmem:[#allocation3 + $0x8] sm:$0xff]
      %v3167 = vld [vmem:[#allocation3 + $0x10] sm:$0xff]
      %v3168 = vld [vmem:[#allocation3 + $0x18] sm:$0xff]
      %v3169 = vld [vmem:[#allocation3 + $0x20] sm:$0xff]
      %v3170 = vld [vmem:[#allocation3 + $0x28] sm:$0xff]
      %v3171 = vld [vmem:[#allocation3 + $0x30] sm:$0xff]
      %v3172 = vld [vmem:[#allocation3 + $0x38] sm:$0xff]
      %3181 = vrot.lane.b32.xlu0 %v3165, 53
      %v3182 = vpop.permute.xlu0 %3181
      %3183 = vrot.lane.b32.xlu0 %v3166, 53
      %v3184 = vpop.permute.xlu0 %3183
      %3185 = vrot.lane.b32.xlu0 %v3167, 53
      %v3186 = vpop.permute.xlu0 %3185
      %3187 = vrot.lane.b32.xlu0 %v3168, 53
      %v3188 = vpop.permute.xlu0 %3187
      %3189 = vrot.lane.b32.xlu0 %v3169, 53
      %v3190 = vpop.permute.xlu0 %3189
      %3191 = vrot.lane.b32.xlu0 %v3170, 53
      %v3192 = vpop.permute.xlu0 %3191
      %3193 = vrot.lane.b32.xlu0 %v3171, 53
      %v3194 = vpop.permute.xlu0 %3193
      %3195 = vrot.lane.b32.xlu0 %v3172, 53
      %v3196 = vpop.permute.xlu0 %3195
      %v3197 = vsel %vm818, %v3182, %v3184
      %v3198 = vsel %vm818, %v3184, %v3186
      %v3199 = vsel %vm818, %v3186, %v3188
      %v3200 = vsel %vm818, %v3190, %v3192
      %v3201 = vsel %vm818, %v3192, %v3194
      %v3202 = vsel %vm818, %v3194, %v3196
      %3209 = vst [vmem:[#allocation6 + $0x180] sm:$0xff] %v3197
      %3210 = vst [vmem:[#allocation6 + $0x188] sm:$0xff] %v3198
      %3211 = vst [vmem:[#allocation6 + $0x190] sm:$0xff] %v3199
      %3212 = vst [vmem:[#allocation6 + $0x198] sm:$0xff] %v3200
      %3213 = vst [vmem:[#allocation6 + $0x1a0] sm:$0xff] %v3201
      %3214 = vst [vmem:[#allocation6 + $0x1a8] sm:$0xff] %v3202
      %v3215 = vld [vmem:[%s5] sm:$0xff]
      %v3216 = vld [vmem:[#allocation6] sm:$0xff]
      %v3217 = vld [vmem:[#allocation6 + $0x8] sm:$0xff]
      %v3218 = vld [vmem:[#allocation6 + $0x10] sm:$0xff]
      %v3219 = vld [vmem:[#allocation6 + $0x18] sm:$0xff]
      %v3220 = vld [vmem:[#allocation6 + $0x20] sm:$0xff]
      %v3221 = vld [vmem:[#allocation6 + $0x28] sm:$0xff]
      %v3222 = vld [vmem:[#allocation6 + $0x30] sm:$0xff]
      %v3223 = vld [vmem:[#allocation6 + $0x38] sm:$0xff]
      %v3224 = vld [vmem:[#allocation6 + $0x40] sm:$0xff]
      %v3225 = vld [vmem:[#allocation6 + $0x48] sm:$0xff]
      %v3226 = vld [vmem:[#allocation6 + $0x50] sm:$0xff]
      %v3227 = vld [vmem:[#allocation6 + $0x58] sm:$0xff]
      %v3228 = vld [vmem:[#allocation6 + $0x60] sm:$0xff]
      %v3229 = vld [vmem:[#allocation6 + $0x68] sm:$0xff]
      %v3230 = vld [vmem:[#allocation6 + $0x70] sm:$0xff]
      %v3231 = vld [vmem:[#allocation6 + $0x78] sm:$0xff]
      %v3232 = vld [vmem:[#allocation6 + $0x80] sm:$0xff]
      %v3233 = vld [vmem:[#allocation6 + $0x88] sm:$0xff]
      %v3234 = vld [vmem:[#allocation6 + $0x90] sm:$0xff]
      %v3235 = vld [vmem:[#allocation6 + $0x98] sm:$0xff]
      %v3236 = vld [vmem:[#allocation6 + $0xa0] sm:$0xff]
      %v3237 = vld [vmem:[#allocation6 + $0xa8] sm:$0xff]
      %v3238 = vld [vmem:[#allocation6 + $0xb0] sm:$0xff]
      %v3239 = vld [vmem:[#allocation6 + $0xb8] sm:$0xff]
      %v3240 = vld [vmem:[#allocation6 + $0xc0] sm:$0xff]
      %v3241 = vld [vmem:[#allocation6 + $0xc8] sm:$0xff]
      %v3242 = vld [vmem:[#allocation6 + $0xd0] sm:$0xff]
      %v3243 = vld [vmem:[#allocation6 + $0xd8] sm:$0xff]
      %v3244 = vld [vmem:[#allocation6 + $0xe0] sm:$0xff]
      %v3245 = vld [vmem:[#allocation6 + $0xe8] sm:$0xff]
      %v3246 = vld [vmem:[#allocation6 + $0xf0] sm:$0xff]
      %v3247 = vld [vmem:[#allocation6 + $0xf8] sm:$0xff]
      %v3248 = vld [vmem:[#allocation6 + $0x100] sm:$0xff]
      %v3249 = vld [vmem:[#allocation6 + $0x108] sm:$0xff]
      %v3250 = vld [vmem:[#allocation6 + $0x110] sm:$0xff]
      %v3251 = vld [vmem:[#allocation6 + $0x118] sm:$0xff]
      %v3252 = vld [vmem:[#allocation6 + $0x120] sm:$0xff]
      %v3253 = vld [vmem:[#allocation6 + $0x128] sm:$0xff]
      %v3254 = vld [vmem:[#allocation6 + $0x130] sm:$0xff]
      %v3255 = vld [vmem:[#allocation6 + $0x138] sm:$0xff]
      %v3256 = vld [vmem:[#allocation6 + $0x140] sm:$0xff]
      %v3257 = vld [vmem:[#allocation6 + $0x148] sm:$0xff]
      %v3258 = vld [vmem:[#allocation6 + $0x150] sm:$0xff]
      %v3259 = vld [vmem:[#allocation6 + $0x158] sm:$0xff]
      %v3260 = vld [vmem:[#allocation6 + $0x160] sm:$0xff]
      %v3261 = vld [vmem:[#allocation6 + $0x168] sm:$0xff]
      %v3262 = vld [vmem:[#allocation6 + $0x170] sm:$0xff]
      %v3263 = vld [vmem:[#allocation6 + $0x178] sm:$0xff]
      %v3264 = vld [vmem:[#allocation6 + $0x180] sm:$0xff]
      %v3265 = vld [vmem:[#allocation6 + $0x188] sm:$0xff]
      %v3266 = vld [vmem:[#allocation6 + $0x190] sm:$0xff]
      %v3267 = vld [vmem:[#allocation6 + $0x198] sm:$0xff]
      %v3268 = vld [vmem:[#allocation6 + $0x1a0] sm:$0xff]
      %v3269 = vld [vmem:[#allocation6 + $0x1a8] sm:$0xff]
      %v3270 = vld [vmem:[%s6] sm:$0xf]
      %3272 = vset.pattern.permute.xlu0 0
      %3273 = vperm.xlu0 %3272, %v3270
      %v3274 = vpop.permute.xlu0 %3273
      %v3277 = vcombine.high %v3215, %v3215
      %vm3278 = vcmask 130048
      %v3279 = vsel %vm3278, %v3277, 0
      %3281 = vmatprep.subr.mxu0 %v3217
      %3282 = vmatpush1.msra.mxu0 %v3216
      %3283 = vmatprep.subr.mxu0 %v3220
      %3284 = vmatpush1.msra.mxu0 %v3219
      %3285 = vmatprep.subr.mxu0 %v3223
      %3286 = vmatpush1.msra.mxu0 %v3222
      %3287 = vmatprep.subr.mxu0 %v3226
      %3288 = vmatpush1.msra.mxu0 %v3225
      %3289 = vmatprep.subr.mxu0 %v3229
      %3290 = vmatpush1.msra.mxu0 %v3228
      %3291 = vmatprep.subr.mxu0 %v3232
      %3292 = vmatpush1.msra.mxu0 %v3231
      %3293 = vmatprep.subr.mxu0 %v3235
      %3294 = vmatpush1.msra.mxu0 %v3234
      %3295 = vmatprep.subr.mxu0 %v3238
      %3296 = vmatpush1.msra.mxu0 %v3237
      %3297 = vmatprep.subr.mxu0 %v3241
      %3298 = vmatpush1.msra.mxu0 %v3240
      %3299 = vmatprep.subr.mxu0 %v3244
      %3300 = vmatpush1.msra.mxu0 %v3243
      %3301 = vmatprep.subr.mxu0 %v3247
      %3302 = vmatpush1.msra.mxu0 %v3246
      %3303 = vmatprep.subr.mxu0 %v3250
      %3304 = vmatpush1.msra.mxu0 %v3249
      %3305 = vmatprep.subr.mxu0 %v3253
      %3306 = vmatpush1.msra.mxu0 %v3252
      %3307 = vmatprep.subr.mxu0 %v3256
      %3308 = vmatpush1.msra.mxu0 %v3255
      %3309 = vmatprep.subr.mxu0 %v3259
      %3310 = vmatpush1.msra.mxu0 %v3258
      %3311 = vmatprep.subr.mxu0 %v3262
      %3312 = vmatpush1.msra.mxu0 %v3261
      %3313 = vmatprep.subr.mxu0 %v3265
      %3314 = vmatpush1.msra.mxu0 %v3264
      %3315 = vmatprep.subr.mxu0 %v3268
      %3316 = vmatpush1.msra.mxu0 %v3267
      %3317 = vmatprep.subr.mxu0 0.0
      %3318 = vmatpush1.msra.mxu0 0.0
      %3319 = vmatprep.subr.mxu0 0.0
      %3320 = vmatpush1.msra.mxu0 0.0
      %3321 = vmatprep.subr.mxu0 0.0
      %3322 = vmatpush1.msra.mxu0 0.0
      %3323 = vmatprep.subr.mxu0 0.0
      %3324 = vmatpush1.msra.mxu0 0.0
      %3325 = vmatprep.subr.mxu0 0.0
      %3326 = vmatpush1.msra.mxu0 0.0
      %3327 = vmatprep.subr.mxu0 0.0
      %3328 = vmatpush1.msra.mxu0 0.0
      %3329 = vmatprep.subr.mxu0 0.0
      %3330 = vmatpush1.msra.mxu0 0.0
      %3331 = vmatprep.subr.mxu0 0.0
      %3332 = vmatpush1.msra.mxu0 0.0
      %3333 = vmatprep.subr.mxu0 0.0
      %3334 = vmatpush1.msra.mxu0 0.0
      %3335 = vmatprep.subr.mxu0 0.0
      %3336 = vmatpush1.msra.mxu0 0.0
      %3337 = vmatprep.subr.mxu0 0.0
      %3338 = vmatpush1.msra.mxu0 0.0
      %3339 = vmatprep.subr.mxu0 0.0
      %3340 = vmatpush1.msra.mxu0 0.0
      %3341 = vmatprep.subr.mxu0 0.0
      %3342 = vmatpush1.msra.mxu0 0.0
      %3343 = vmatprep.subr.mxu0 0.0
      %3344 = vmatpush1.msra.mxu0 0.0
      %3345 = vmatprep.mubr.f32.mxu0 %v3279
      %3346 = vmatmul.mubr.f32.gmra.mrb[0].mxu0 %v3215
      %v3347 = vpop.f32.mrb[0].mxu0
      %v3348 = vadd.f32 %v3274, %v3347
      %v3349 = vpop.f32.mrb[0].mxu0
      %v3350 = vadd.f32 %v3274, %v3349
      %3351 = vdwg.mxu0
      %3352 = vmatprep.subr.mxu0 0.0
      %3353 = vmatpush1.msra.mxu0 %v3218
      %3354 = vmatprep.subr.mxu0 0.0
      %3355 = vmatpush1.msra.mxu0 %v3221
      %3356 = vmatprep.subr.mxu0 0.0
      %3357 = vmatpush1.msra.mxu0 %v3224
      %3358 = vmatprep.subr.mxu0 0.0
      %3359 = vmatpush1.msra.mxu0 %v3227
      %3360 = vmatprep.subr.mxu0 0.0
      %3361 = vmatpush1.msra.mxu0 %v3230
      %3362 = vmatprep.subr.mxu0 0.0
      %3363 = vmatpush1.msra.mxu0 %v3233
      %3364 = vmatprep.subr.mxu0 0.0
      %3365 = vmatpush1.msra.mxu0 %v3236
      %3366 = vmatprep.subr.mxu0 0.0
      %3367 = vmatpush1.msra.mxu0 %v3239
      %3368 = vmatprep.subr.mxu0 0.0
      %3369 = vmatpush1.msra.mxu0 %v3242
      %3370 = vmatprep.subr.mxu0 0.0
      %3371 = vmatpush1.msra.mxu0 %v3245
      %3372 = vmatprep.subr.mxu0 0.0
      %3373 = vmatpush1.msra.mxu0 %v3248
      %3374 = vmatprep.subr.mxu0 0.0
      %3375 = vmatpush1.msra.mxu0 %v3251
      %3376 = vmatprep.subr.mxu0 0.0
      %3377 = vmatpush1.msra.mxu0 %v3254
      %3378 = vmatprep.subr.mxu0 0.0
      %3379 = vmatpush1.msra.mxu0 %v3257
      %3380 = vmatprep.subr.mxu0 0.0
      %3381 = vmatpush1.msra.mxu0 %v3260
      %3382 = vmatprep.subr.mxu0 0.0
      %3383 = vmatpush1.msra.mxu0 %v3263
      %3384 = vmatprep.subr.mxu0 0.0
      %3385 = vmatpush1.msra.mxu0 %v3266
      %3386 = vmatprep.subr.mxu0 0.0
      %3387 = vmatpush1.msra.mxu0 %v3269
      %3388 = vmatprep.subr.mxu0 0.0
      %3389 = vmatpush1.msra.mxu0 0.0
      %3390 = vmatprep.subr.mxu0 0.0
      %3391 = vmatpush1.msra.mxu0 0.0
      %3392 = vmatprep.subr.mxu0 0.0
      %3393 = vmatpush1.msra.mxu0 0.0
      %3394 = vmatprep.subr.mxu0 0.0
      %3395 = vmatpush1.msra.mxu0 0.0
      %3396 = vmatprep.subr.mxu0 0.0
      %3397 = vmatpush1.msra.mxu0 0.0
      %3398 = vmatprep.subr.mxu0 0.0
      %3399 = vmatpush1.msra.mxu0 0.0
      %3400 = vmatprep.subr.mxu0 0.0
      %3401 = vmatpush1.msra.mxu0 0.0
      %3402 = vmatprep.subr.mxu0 0.0
      %3403 = vmatpush1.msra.mxu0 0.0
      %3404 = vmatprep.subr.mxu0 0.0
      %3405 = vmatpush1.msra.mxu0 0.0
      %3406 = vmatprep.subr.mxu0 0.0
      %3407 = vmatpush1.msra.mxu0 0.0
      %3408 = vmatprep.subr.mxu0 0.0
      %3409 = vmatpush1.msra.mxu0 0.0
      %3410 = vmatprep.subr.mxu0 0.0
      %3411 = vmatpush1.msra.mxu0 0.0
      %3412 = vmatprep.subr.mxu0 0.0
      %3413 = vmatpush1.msra.mxu0 0.0
      %3414 = vmatprep.subr.mxu0 0.0
      %3415 = vmatpush1.msra.mxu0 0.0
      %3416 = vmatprep.mubr.f32.mxu0 %v3279
      %3417 = vmatmul.mubr.f32.gmra.mrb[0].mxu0 %v3215
      %v3418 = vpop.f32.mrb[0].mxu0
      %v3419 = vadd.f32 %v3274, %v3418
      %v3420 = vpop.f32.mrb[0].mxu0
      %3421 = vdwg.mxu0
      %v3424 = vcombine.low %v3348, %v3350
      %3426 = vst [vmem:[%s278] sm:$0xff] %v3424
      %3427 = vst [vmem:[%s278 + $0x8] sm:$0xf] %v3419
      %p3428 = scmp.lt.s32.totalorder %s18, 1
      %s3429 = scalar_select %p3428, %s18, 1
      %s3430 = smul.addr %s3429, 3
      %s3431 = smul.addr %s3430, 4
      %s3432 = scalar_lea.vmem %s7, %s3431
      // Predicated region
      $region49: #{espcn_forward.1} parent=47 // pred_check
        %p3433 = pneg %p188
      $region50: #{espcn_forward.1} parent=47 // pred_check_branch
        %3435 = sbr.rel (%p3433) target = $region52
      $region51: #{espcn_forward.1} parent=47 // pred_region
        _
      $region52: #{espcn_forward.1} parent=47 // pred_fallthru
        _
    $region48: #{espcn_forward.1} parent=5 // pred_fallthru
      _
    %p3436 = scmp.le.s32.totalorder 2, %s13
    // Predicated region
    $region53: #{espcn_forward.1} parent=5 // pred_check
      %p3437 = pneg %p3436
    $region54: #{espcn_forward.1} parent=5 // pred_check_branch
      %3439 = sbr.rel (%p3437) target = $region56
    $region55: #{espcn_forward.1} parent=5 // pred_region
      %s3440 = ssub.s32 %s13, 2
      // Predicated region
      $region57: #{espcn_forward.1} parent=55 // pred_check
        %p3441 = pneg %p194
      $region58: #{espcn_forward.1} parent=55 // pred_check_branch
        %3443 = sbr.rel (%p3441) target = $region60
      $region59: #{espcn_forward.1} parent=55 // pred_region
        %p3444 = scmp.lt.s32.totalorder %s19, 1
        %s3445 = scalar_select %p3444, %s19, 1
        %s3446 = smul.addr %s3445, 3
        %s3447 = smul.addr %s3446, 4
        %s3448 = scalar_lea.vmem %s7, %s3447
      $region60: #{espcn_forward.1} parent=55 // pred_fallthru
        _
    $region56: #{espcn_forward.1} parent=5 // pred_fallthru
      _
  $region6: #{espcn_forward.1} parent=0 // loop_footer
    %s17 = sadd.s32 1, %s13
  $region7: #{espcn_forward.1} parent=0 // loop_footer_branch
    %12 = sbr.rel target = $region3
  $region8: #{espcn_forward.1} parent=0 // loop_exit
    _

</llo_original>
